<compile_context>
chip_gen: v7x
topology: tpu7x:2x2x1
jax: 0.10.0
libtpu: 0.0.40
codegen_flags: <defaults>
</compile_context>

<pallas_src>
import jax
import jax.numpy as jnp
import numpy as np
from jax.experimental import pallas as pl
from jax.experimental.pallas import tpu as pltpu

# ----------------------------------------------------------------------------
# Static network description (specialized to 3x16x16 inputs, as in the module)
# ----------------------------------------------------------------------------
#            kind     Cin Cout H_in W_in
LAYERS = [
    ("conv",    3, 16, 16, 16),   # -> 8x8x16
    ("conv",   16, 32,  8,  8),   # -> 4x4x32
    ("conv",   32, 64,  4,  4),   # -> 2x2x64
    ("deconv", 64, 32,  2,  2),   # -> 4x4x32
    ("deconv", 32, 16,  4,  4),   # -> 8x8x16
    ("deconv", 16,  3,  8,  8),   # -> 16x16x3 (+ sigmoid)
]
NUM_LAYERS = len(LAYERS)
K = 3          # conv kernel size
R = 16         # padded row count per image (max spatial height)
L = 128        # packed lane width (W * C_pad == 128 at every layer)
CIN_PAD = 8    # input channels padded 3 -> 8   (16 * 8  == 128)
COUT_PAD = 8   # output channels padded 3 -> 8  (16 * 8  == 128)


# ----------------------------------------------------------------------------
# Parameters (PyTorch layouts: Conv2d (Cout,Cin,3,3); ConvTranspose2d (Cin,Cout,3,3))
# ----------------------------------------------------------------------------
def init_params(key):
    def uinit(k, shape, fan_in):
        bound = 1.0 / np.sqrt(fan_in)
        return jax.random.uniform(k, shape, jnp.float32, -bound, bound)

    keys = jax.random.split(key, 2 * NUM_LAYERS)
    p = {}
    for l, (kind, cin, cout, _, _) in enumerate(LAYERS):
        if kind == "conv":
            w_shape, fan_in = (cout, cin, 3, 3), cin * 9
        else:  # PyTorch ConvTranspose2d fan_in uses weight.size(1) * k*k
            w_shape, fan_in = (cin, cout, 3, 3), cout * 9
        p[f"w{l}"] = uinit(keys[2 * l], w_shape, fan_in)
        p[f"b{l}"] = uinit(keys[2 * l + 1], (cout,), fan_in)
    return p


# ----------------------------------------------------------------------------
# Host-side constant folding: RowSel / BigW / bias-row per layer per row-tap
# ----------------------------------------------------------------------------
def _pad_cc(wmat, cinp, coutp):
    cin, cout = wmat.shape
    return jnp.pad(wmat, ((0, cinp - cin), (0, coutp - cout)))


def prepare_constants(params):
    """Returns rowsel (18,16,16), bigw (18,128,128), bias (6,1,128)."""
    rowsels, bigws, biases = [], [], []
    for l, (kind, cin, cout, h, w) in enumerate(LAYERS):
        if kind == "conv":
            ho, wo = h // 2, w // 2
        else:
            ho, wo = h * 2, w * 2
        cinp, coutp = L // w, L // wo
        wt, b = params[f"w{l}"], params[f"b{l}"]

        for ky in range(K):
            # ---- BigW_ky: folds the W-direction gather/scatter + channel mix
            big = jnp.zeros((L, L), jnp.float32)
            for kx in range(K):
                s = np.zeros((w, wo), np.float32)   # s[x_in, x_out]
                for j in range(wo):
                    if kind == "conv":
                        x = 2 * j + kx - 1                      # in col read by out col j
                    else:
                        if (j + 1 - kx) % 2 != 0:               # kx = j + 1 - 2x
                            continue
                        x = (j + 1 - kx) // 2
                    if 0 <= x < w:
                        s[x, j] = 1.0
                if kind == "conv":
                    wmat = wt[:, :, ky, kx].T                   # (Cin, Cout)
                else:
                    wmat = wt[:, :, ky, kx]                     # (Cin, Cout)
                big = big + jnp.kron(jnp.asarray(s), _pad_cc(wmat, cinp, coutp))
            bigws.append(big)

            # ---- RowSel_ky: stride-2 row gather (conv) / scatter (deconv)
            rs = np.zeros((R, R), np.float32)       # rs[row_out, row_in]
            for i in range(ho):
                if kind == "conv":
                    y = 2 * i + ky - 1
                else:
                    if (i + 1 - ky) % 2 != 0:                   # ky = oy + 1 - 2*iy
                        continue
                    y = (i + 1 - ky) // 2
                if 0 <= y < h:
                    rs[i, y] = 1.0
            rowsels.append(jnp.asarray(rs))

        biases.append(jnp.tile(jnp.pad(b, (0, coutp - cout)), wo).reshape(1, L))

    return jnp.stack(rowsels), jnp.stack(bigws), jnp.stack(biases)


# ----------------------------------------------------------------------------
# The single fused Pallas kernel (per image): 36 lane-dense MXU matmuls
# ----------------------------------------------------------------------------
def _autoencoder_kernel(x_ref, rowsel_ref, bigw_ref, bias_ref, o_ref):
    h = x_ref[...]                                        # (16, 128) f32, in VMEM
    for l in range(NUM_LAYERS):
        # accumulator initialized with the broadcast bias (no extra VPU pass)
        acc = jnp.broadcast_to(bias_ref[l], (R, L))
        for ky in range(K):
            idx = l * K + ky
            rows = jnp.dot(rowsel_ref[idx], h,            # (16,16)@(16,128)
                           preferred_element_type=jnp.float32)
            acc = acc + jnp.dot(rows, bigw_ref[idx],      # (16,128)@(128,128)
                                preferred_element_type=jnp.float32)
        if l == NUM_LAYERS - 1:
            # exact sigmoid (matches f32 reference); pl.reciprocal(..., approx=True)
            # would move the divide to the EUP at scale but perturbs numerics.
            h = 1.0 / (1.0 + jnp.exp(-acc))
        else:
            h = jnp.maximum(acc, 0.0)
    o_ref[...] = h


@jax.jit
def autoencoder_forward(x_nchw, params):
    n, c, hgt, wid = x_nchw.shape
    assert (c, hgt, wid) == (3, 16, 16), "kernel specialized to 3x16x16 inputs"
    rowsel, bigw, bias = prepare_constants(params)

    # pack: NCHW -> NHWC -> pad channels 3->8 -> (N*16, 128) lane-dense tiles
    x = jnp.transpose(x_nchw, (0, 2, 3, 1))
    x = jnp.pad(x, ((0, 0), (0, 0), (0, 0), (0, CIN_PAD - 3)))
    x2d = x.reshape(n * R, L).astype(jnp.float32)

    out2d = pl.pallas_call(
        _autoencoder_kernel,
        out_shape=jax.ShapeDtypeStruct((n * R, L), jnp.float32),
        grid=(n,),
        in_specs=[
            pl.BlockSpec((R, L), lambda i: (i, 0)),                     # per-image tile
            pl.BlockSpec((NUM_LAYERS * K, R, R), lambda i: (0, 0, 0)),  # resident consts
            pl.BlockSpec((NUM_LAYERS * K, L, L), lambda i: (0, 0, 0)),
            pl.BlockSpec((NUM_LAYERS, 1, L), lambda i: (0, 0, 0)),
        ],
        out_specs=pl.BlockSpec((R, L), lambda i: (i, 0)),
        compiler_params=pltpu.CompilerParams(
            dimension_semantics=("parallel",),   # batch across TCs (v7x megacore)
        ),
    )(x2d, rowsel, bigw, bias)

    # unpack: (N*16, 128) -> (N,16,16,8) -> drop padded channels -> NCHW
    y = out2d.reshape(n, 16, 16, COUT_PAD)[..., :3]
    return jnp.transpose(y, (0, 3, 1, 2))


# ----------------------------------------------------------------------------
# Pure-JAX reference (lax conv) for the correctness check
# ----------------------------------------------------------------------------
def _ref_forward(x_nchw, params):
    def conv(x, w_oihw, b, stride, pad):
        w = jnp.transpose(w_oihw, (2, 3, 1, 0))
        y = jax.lax.conv_general_dilated(
            x, w, (stride, stride), [(pad, pad), (pad, pad)],
            dimension_numbers=("NHWC", "HWIO", "NHWC"))
        return y + b

    def convT(x, w_iohw, b, stride, pad, out_pad):
        k = w_iohw.shape[2]
        w = jnp.transpose(jnp.flip(w_iohw, (2, 3)), (2, 3, 0, 1))
        y = jax.lax.conv_general_dilated(
            x, w, (1, 1), [(k - 1 - pad, k - 1 - pad + out_pad)] * 2,
            lhs_dilation=(stride, stride),
            dimension_numbers=("NHWC", "HWIO", "NHWC"))
        return y + b

    x = jnp.transpose(x_nchw, (0, 2, 3, 1))
    x = jnp.maximum(conv(x, params["w0"], params["b0"], 2, 1), 0.0)
    x = jnp.maximum(conv(x, params["w1"], params["b1"], 2, 1), 0.0)
    x = jnp.maximum(conv(x, params["w2"], params["b2"], 2, 1), 0.0)
    x = jnp.maximum(convT(x, params["w3"], params["b3"], 2, 1, 1), 0.0)
    x = jnp.maximum(convT(x, params["w4"], params["b4"], 2, 1, 1), 0.0)
    x = jax.nn.sigmoid(convT(x, params["w5"], params["b5"], 2, 1, 1))
    return jnp.transpose(x, (0, 3, 1, 2))


if __name__ == "__main__":
    key = jax.random.PRNGKey(0)
    kx, kp = jax.random.split(key)
    x = jax.random.uniform(kx, (2, 3, 16, 16), jnp.float32)   # NCHW, batch=2
    params = init_params(kp)

    out = jax.block_until_ready(autoencoder_forward(x, params))
    assert out.shape == (2, 3, 16, 16), out.shape

    ref = jax.block_until_ready(_ref_forward(x, params))
    np.testing.assert_allclose(np.asarray(out), np.asarray(ref), rtol=1e-4, atol=1e-5)

    print("KERNEL_OK")
</pallas_src>

<mosaic_0001>
module attributes {stable_mosaic.version = 11 : i64} {
  func.func @_autoencoder_kernel(%arg0: i32, %arg1: memref<16x128xf32, #tpu.memory_space<vmem>>, %arg2: memref<18x16x16xf32, #tpu.memory_space<vmem>>, %arg3: memref<18x128x128xf32, #tpu.memory_space<vmem>>, %arg4: memref<6x1x128xf32, #tpu.memory_space<vmem>>, %arg5: memref<16x128xf32, #tpu.memory_space<vmem>>) attributes {dimension_semantics = [#tpu.dimension_semantics<parallel>], iteration_bounds = array<i64: 2>, scalar_prefetch = 0 : i64, scratch_operands = 0 : i64, tpu.core_type = #tpu.core_type<tc>, window_params = [{transform_indices = @transform_0, window_bounds = array<i64: 16, 128>}, {pipeline_mode = #tpu.pipeline_mode<synchronous>, transform_indices = @transform_1, window_bounds = array<i64: 18, 16, 16>}, {pipeline_mode = #tpu.pipeline_mode<synchronous>, transform_indices = @transform_2, window_bounds = array<i64: 18, 128, 128>}, {pipeline_mode = #tpu.pipeline_mode<synchronous>, transform_indices = @transform_3, window_bounds = array<i64: 6, 1, 128>}, {transform_indices = @transform_4, window_bounds = array<i64: 16, 128>}]} {
    %c0 = arith.constant 0 : index
    %c0_0 = arith.constant 0 : index
    %0 = vector.load %arg1[%c0, %c0_0] : memref<16x128xf32, #tpu.memory_space<vmem>>, vector<16x128xf32>
    %c0_1 = arith.constant 0 : index
    %c0_2 = arith.constant 0 : index
    %c0_3 = arith.constant 0 : index
    %1 = vector.load %arg4[%c0_1, %c0_2, %c0_3] : memref<6x1x128xf32, #tpu.memory_space<vmem>>, vector<1x1x128xf32>
    %2 = vector.shape_cast %1 : vector<1x1x128xf32> to vector<1x128xf32>
    %3 = vector.shape_cast %2 : vector<1x128xf32> to vector<1x128xf32>
    %4 = vector.broadcast %3 : vector<1x128xf32> to vector<16x128xf32>
    %c0_4 = arith.constant 0 : index
    %c0_5 = arith.constant 0 : index
    %c0_6 = arith.constant 0 : index
    %5 = vector.load %arg2[%c0_4, %c0_5, %c0_6] : memref<18x16x16xf32, #tpu.memory_space<vmem>>, vector<1x16x16xf32>
    %6 = vector.shape_cast %5 : vector<1x16x16xf32> to vector<16x16xf32>
    %cst = arith.constant dense<0.000000e+00> : vector<16x128xf32>
    %7 = tpu.matmul %6, %0, %cst {dimension_numbers = #tpu.dot_dimension_numbers<[1], [0], [0], [1], [0, 0, 1, 1], [], []>} : vector<16x16xf32>, vector<16x128xf32>, vector<16x128xf32> -> vector<16x128xf32>
    %c0_7 = arith.constant 0 : index
    %c0_8 = arith.constant 0 : index
    %c0_9 = arith.constant 0 : index
    %8 = vector.load %arg3[%c0_7, %c0_8, %c0_9] : memref<18x128x128xf32, #tpu.memory_space<vmem>>, vector<1x128x128xf32>
    %9 = vector.shape_cast %8 : vector<1x128x128xf32> to vector<128x128xf32>
    %cst_10 = arith.constant dense<0.000000e+00> : vector<16x128xf32>
    %10 = tpu.matmul %7, %9, %cst_10 {dimension_numbers = #tpu.dot_dimension_numbers<[1], [0], [0], [1], [0, 0, 1, 1], [], []>} : vector<16x128xf32>, vector<128x128xf32>, vector<16x128xf32> -> vector<16x128xf32>
    %11 = arith.addf %4, %10 : vector<16x128xf32>
    %c1 = arith.constant 1 : index
    %c0_11 = arith.constant 0 : index
    %c0_12 = arith.constant 0 : index
    %12 = vector.load %arg2[%c1, %c0_11, %c0_12] : memref<18x16x16xf32, #tpu.memory_space<vmem>>, vector<1x16x16xf32>
    %13 = vector.shape_cast %12 : vector<1x16x16xf32> to vector<16x16xf32>
    %cst_13 = arith.constant dense<0.000000e+00> : vector<16x128xf32>
    %14 = tpu.matmul %13, %0, %cst_13 {dimension_numbers = #tpu.dot_dimension_numbers<[1], [0], [0], [1], [0, 0, 1, 1], [], []>} : vector<16x16xf32>, vector<16x128xf32>, vector<16x128xf32> -> vector<16x128xf32>
    %c1_14 = arith.constant 1 : index
    %c0_15 = arith.constant 0 : index
    %c0_16 = arith.constant 0 : index
    %15 = vector.load %arg3[%c1_14, %c0_15, %c0_16] : memref<18x128x128xf32, #tpu.memory_space<vmem>>, vector<1x128x128xf32>
    %16 = vector.shape_cast %15 : vector<1x128x128xf32> to vector<128x128xf32>
    %cst_17 = arith.constant dense<0.000000e+00> : vector<16x128xf32>
    %17 = tpu.matmul %14, %16, %cst_17 {dimension_numbers = #tpu.dot_dimension_numbers<[1], [0], [0], [1], [0, 0, 1, 1], [], []>} : vector<16x128xf32>, vector<128x128xf32>, vector<16x128xf32> -> vector<16x128xf32>
    %18 = arith.addf %11, %17 : vector<16x128xf32>
    %c2 = arith.constant 2 : index
    %c0_18 = arith.constant 0 : index
    %c0_19 = arith.constant 0 : index
    %19 = vector.load %arg2[%c2, %c0_18, %c0_19] : memref<18x16x16xf32, #tpu.memory_space<vmem>>, vector<1x16x16xf32>
    %20 = vector.shape_cast %19 : vector<1x16x16xf32> to vector<16x16xf32>
    %cst_20 = arith.constant dense<0.000000e+00> : vector<16x128xf32>
    %21 = tpu.matmul %20, %0, %cst_20 {dimension_numbers = #tpu.dot_dimension_numbers<[1], [0], [0], [1], [0, 0, 1, 1], [], []>} : vector<16x16xf32>, vector<16x128xf32>, vector<16x128xf32> -> vector<16x128xf32>
    %c2_21 = arith.constant 2 : index
    %c0_22 = arith.constant 0 : index
    %c0_23 = arith.constant 0 : index
    %22 = vector.load %arg3[%c2_21, %c0_22, %c0_23] : memref<18x128x128xf32, #tpu.memory_space<vmem>>, vector<1x128x128xf32>
    %23 = vector.shape_cast %22 : vector<1x128x128xf32> to vector<128x128xf32>
    %cst_24 = arith.constant dense<0.000000e+00> : vector<16x128xf32>
    %24 = tpu.matmul %21, %23, %cst_24 {dimension_numbers = #tpu.dot_dimension_numbers<[1], [0], [0], [1], [0, 0, 1, 1], [], []>} : vector<16x128xf32>, vector<128x128xf32>, vector<16x128xf32> -> vector<16x128xf32>
    %25 = arith.addf %18, %24 : vector<16x128xf32>
    %cst_25 = arith.constant 0.000000e+00 : f32
    %26 = vector.broadcast %cst_25 : f32 to vector<16x128xf32>
    %27 = arith.maximumf %25, %26 : vector<16x128xf32>
    %c1_26 = arith.constant 1 : index
    %c0_27 = arith.constant 0 : index
    %c0_28 = arith.constant 0 : index
    %28 = vector.load %arg4[%c1_26, %c0_27, %c0_28] : memref<6x1x128xf32, #tpu.memory_space<vmem>>, vector<1x1x128xf32>
    %29 = vector.shape_cast %28 : vector<1x1x128xf32> to vector<1x128xf32>
    %30 = vector.shape_cast %29 : vector<1x128xf32> to vector<1x128xf32>
    %31 = vector.broadcast %30 : vector<1x128xf32> to vector<16x128xf32>
    %c3 = arith.constant 3 : index
    %c0_29 = arith.constant 0 : index
    %c0_30 = arith.constant 0 : index
    %32 = vector.load %arg2[%c3, %c0_29, %c0_30] : memref<18x16x16xf32, #tpu.memory_space<vmem>>, vector<1x16x16xf32>
    %33 = vector.shape_cast %32 : vector<1x16x16xf32> to vector<16x16xf32>
    %cst_31 = arith.constant dense<0.000000e+00> : vector<16x128xf32>
    %34 = tpu.matmul %33, %27, %cst_31 {dimension_numbers = #tpu.dot_dimension_numbers<[1], [0], [0], [1], [0, 0, 1, 1], [], []>} : vector<16x16xf32>, vector<16x128xf32>, vector<16x128xf32> -> vector<16x128xf32>
    %c3_32 = arith.constant 3 : index
    %c0_33 = arith.constant 0 : index
    %c0_34 = arith.constant 0 : index
    %35 = vector.load %arg3[%c3_32, %c0_33, %c0_34] : memref<18x128x128xf32, #tpu.memory_space<vmem>>, vector<1x128x128xf32>
    %36 = vector.shape_cast %35 : vector<1x128x128xf32> to vector<128x128xf32>
    %cst_35 = arith.constant dense<0.000000e+00> : vector<16x128xf32>
    %37 = tpu.matmul %34, %36, %cst_35 {dimension_numbers = #tpu.dot_dimension_numbers<[1], [0], [0], [1], [0, 0, 1, 1], [], []>} : vector<16x128xf32>, vector<128x128xf32>, vector<16x128xf32> -> vector<16x128xf32>
    %38 = arith.addf %31, %37 : vector<16x128xf32>
    %c4 = arith.constant 4 : index
    %c0_36 = arith.constant 0 : index
    %c0_37 = arith.constant 0 : index
    %39 = vector.load %arg2[%c4, %c0_36, %c0_37] : memref<18x16x16xf32, #tpu.memory_space<vmem>>, vector<1x16x16xf32>
    %40 = vector.shape_cast %39 : vector<1x16x16xf32> to vector<16x16xf32>
    %cst_38 = arith.constant dense<0.000000e+00> : vector<16x128xf32>
    %41 = tpu.matmul %40, %27, %cst_38 {dimension_numbers = #tpu.dot_dimension_numbers<[1], [0], [0], [1], [0, 0, 1, 1], [], []>} : vector<16x16xf32>, vector<16x128xf32>, vector<16x128xf32> -> vector<16x128xf32>
    %c4_39 = arith.constant 4 : index
    %c0_40 = arith.constant 0 : index
    %c0_41 = arith.constant 0 : index
    %42 = vector.load %arg3[%c4_39, %c0_40, %c0_41] : memref<18x128x128xf32, #tpu.memory_space<vmem>>, vector<1x128x128xf32>
    %43 = vector.shape_cast %42 : vector<1x128x128xf32> to vector<128x128xf32>
    %cst_42 = arith.constant dense<0.000000e+00> : vector<16x128xf32>
    %44 = tpu.matmul %41, %43, %cst_42 {dimension_numbers = #tpu.dot_dimension_numbers<[1], [0], [0], [1], [0, 0, 1, 1], [], []>} : vector<16x128xf32>, vector<128x128xf32>, vector<16x128xf32> -> vector<16x128xf32>
    %45 = arith.addf %38, %44 : vector<16x128xf32>
    %c5 = arith.constant 5 : index
    %c0_43 = arith.constant 0 : index
    %c0_44 = arith.constant 0 : index
    %46 = vector.load %arg2[%c5, %c0_43, %c0_44] : memref<18x16x16xf32, #tpu.memory_space<vmem>>, vector<1x16x16xf32>
    %47 = vector.shape_cast %46 : vector<1x16x16xf32> to vector<16x16xf32>
    %cst_45 = arith.constant dense<0.000000e+00> : vector<16x128xf32>
    %48 = tpu.matmul %47, %27, %cst_45 {dimension_numbers = #tpu.dot_dimension_numbers<[1], [0], [0], [1], [0, 0, 1, 1], [], []>} : vector<16x16xf32>, vector<16x128xf32>, vector<16x128xf32> -> vector<16x128xf32>
    %c5_46 = arith.constant 5 : index
    %c0_47 = arith.constant 0 : index
    %c0_48 = arith.constant 0 : index
    %49 = vector.load %arg3[%c5_46, %c0_47, %c0_48] : memref<18x128x128xf32, #tpu.memory_space<vmem>>, vector<1x128x128xf32>
    %50 = vector.shape_cast %49 : vector<1x128x128xf32> to vector<128x128xf32>
    %cst_49 = arith.constant dense<0.000000e+00> : vector<16x128xf32>
    %51 = tpu.matmul %48, %50, %cst_49 {dimension_numbers = #tpu.dot_dimension_numbers<[1], [0], [0], [1], [0, 0, 1, 1], [], []>} : vector<16x128xf32>, vector<128x128xf32>, vector<16x128xf32> -> vector<16x128xf32>
    %52 = arith.addf %45, %51 : vector<16x128xf32>
    %cst_50 = arith.constant 0.000000e+00 : f32
    %53 = vector.broadcast %cst_50 : f32 to vector<16x128xf32>
    %54 = arith.maximumf %52, %53 : vector<16x128xf32>
    %c2_51 = arith.constant 2 : index
    %c0_52 = arith.constant 0 : index
    %c0_53 = arith.constant 0 : index
    %55 = vector.load %arg4[%c2_51, %c0_52, %c0_53] : memref<6x1x128xf32, #tpu.memory_space<vmem>>, vector<1x1x128xf32>
    %56 = vector.shape_cast %55 : vector<1x1x128xf32> to vector<1x128xf32>
    %57 = vector.shape_cast %56 : vector<1x128xf32> to vector<1x128xf32>
    %58 = vector.broadcast %57 : vector<1x128xf32> to vector<16x128xf32>
    %c6 = arith.constant 6 : index
    %c0_54 = arith.constant 0 : index
    %c0_55 = arith.constant 0 : index
    %59 = vector.load %arg2[%c6, %c0_54, %c0_55] : memref<18x16x16xf32, #tpu.memory_space<vmem>>, vector<1x16x16xf32>
    %60 = vector.shape_cast %59 : vector<1x16x16xf32> to vector<16x16xf32>
    %cst_56 = arith.constant dense<0.000000e+00> : vector<16x128xf32>
    %61 = tpu.matmul %60, %54, %cst_56 {dimension_numbers = #tpu.dot_dimension_numbers<[1], [0], [0], [1], [0, 0, 1, 1], [], []>} : vector<16x16xf32>, vector<16x128xf32>, vector<16x128xf32> -> vector<16x128xf32>
    %c6_57 = arith.constant 6 : index
    %c0_58 = arith.constant 0 : index
    %c0_59 = arith.constant 0 : index
    %62 = vector.load %arg3[%c6_57, %c0_58, %c0_59] : memref<18x128x128xf32, #tpu.memory_space<vmem>>, vector<1x128x128xf32>
    %63 = vector.shape_cast %62 : vector<1x128x128xf32> to vector<128x128xf32>
    %cst_60 = arith.constant dense<0.000000e+00> : vector<16x128xf32>
    %64 = tpu.matmul %61, %63, %cst_60 {dimension_numbers = #tpu.dot_dimension_numbers<[1], [0], [0], [1], [0, 0, 1, 1], [], []>} : vector<16x128xf32>, vector<128x128xf32>, vector<16x128xf32> -> vector<16x128xf32>
    %65 = arith.addf %58, %64 : vector<16x128xf32>
    %c7 = arith.constant 7 : index
    %c0_61 = arith.constant 0 : index
    %c0_62 = arith.constant 0 : index
    %66 = vector.load %arg2[%c7, %c0_61, %c0_62] : memref<18x16x16xf32, #tpu.memory_space<vmem>>, vector<1x16x16xf32>
    %67 = vector.shape_cast %66 : vector<1x16x16xf32> to vector<16x16xf32>
    %cst_63 = arith.constant dense<0.000000e+00> : vector<16x128xf32>
    %68 = tpu.matmul %67, %54, %cst_63 {dimension_numbers = #tpu.dot_dimension_numbers<[1], [0], [0], [1], [0, 0, 1, 1], [], []>} : vector<16x16xf32>, vector<16x128xf32>, vector<16x128xf32> -> vector<16x128xf32>
    %c7_64 = arith.constant 7 : index
    %c0_65 = arith.constant 0 : index
    %c0_66 = arith.constant 0 : index
    %69 = vector.load %arg3[%c7_64, %c0_65, %c0_66] : memref<18x128x128xf32, #tpu.memory_space<vmem>>, vector<1x128x128xf32>
    %70 = vector.shape_cast %69 : vector<1x128x128xf32> to vector<128x128xf32>
    %cst_67 = arith.constant dense<0.000000e+00> : vector<16x128xf32>
    %71 = tpu.matmul %68, %70, %cst_67 {dimension_numbers = #tpu.dot_dimension_numbers<[1], [0], [0], [1], [0, 0, 1, 1], [], []>} : vector<16x128xf32>, vector<128x128xf32>, vector<16x128xf32> -> vector<16x128xf32>
    %72 = arith.addf %65, %71 : vector<16x128xf32>
    %c8 = arith.constant 8 : index
    %c0_68 = arith.constant 0 : index
    %c0_69 = arith.constant 0 : index
    %73 = vector.load %arg2[%c8, %c0_68, %c0_69] : memref<18x16x16xf32, #tpu.memory_space<vmem>>, vector<1x16x16xf32>
    %74 = vector.shape_cast %73 : vector<1x16x16xf32> to vector<16x16xf32>
    %cst_70 = arith.constant dense<0.000000e+00> : vector<16x128xf32>
    %75 = tpu.matmul %74, %54, %cst_70 {dimension_numbers = #tpu.dot_dimension_numbers<[1], [0], [0], [1], [0, 0, 1, 1], [], []>} : vector<16x16xf32>, vector<16x128xf32>, vector<16x128xf32> -> vector<16x128xf32>
    %c8_71 = arith.constant 8 : index
    %c0_72 = arith.constant 0 : index
    %c0_73 = arith.constant 0 : index
    %76 = vector.load %arg3[%c8_71, %c0_72, %c0_73] : memref<18x128x128xf32, #tpu.memory_space<vmem>>, vector<1x128x128xf32>
    %77 = vector.shape_cast %76 : vector<1x128x128xf32> to vector<128x128xf32>
    %cst_74 = arith.constant dense<0.000000e+00> : vector<16x128xf32>
    %78 = tpu.matmul %75, %77, %cst_74 {dimension_numbers = #tpu.dot_dimension_numbers<[1], [0], [0], [1], [0, 0, 1, 1], [], []>} : vector<16x128xf32>, vector<128x128xf32>, vector<16x128xf32> -> vector<16x128xf32>
    %79 = arith.addf %72, %78 : vector<16x128xf32>
    %cst_75 = arith.constant 0.000000e+00 : f32
    %80 = vector.broadcast %cst_75 : f32 to vector<16x128xf32>
    %81 = arith.maximumf %79, %80 : vector<16x128xf32>
    %c3_76 = arith.constant 3 : index
    %c0_77 = arith.constant 0 : index
    %c0_78 = arith.constant 0 : index
    %82 = vector.load %arg4[%c3_76, %c0_77, %c0_78] : memref<6x1x128xf32, #tpu.memory_space<vmem>>, vector<1x1x128xf32>
    %83 = vector.shape_cast %82 : vector<1x1x128xf32> to vector<1x128xf32>
    %84 = vector.shape_cast %83 : vector<1x128xf32> to vector<1x128xf32>
    %85 = vector.broadcast %84 : vector<1x128xf32> to vector<16x128xf32>
    %c9 = arith.constant 9 : index
    %c0_79 = arith.constant 0 : index
    %c0_80 = arith.constant 0 : index
    %86 = vector.load %arg2[%c9, %c0_79, %c0_80] : memref<18x16x16xf32, #tpu.memory_space<vmem>>, vector<1x16x16xf32>
    %87 = vector.shape_cast %86 : vector<1x16x16xf32> to vector<16x16xf32>
    %cst_81 = arith.constant dense<0.000000e+00> : vector<16x128xf32>
    %88 = tpu.matmul %87, %81, %cst_81 {dimension_numbers = #tpu.dot_dimension_numbers<[1], [0], [0], [1], [0, 0, 1, 1], [], []>} : vector<16x16xf32>, vector<16x128xf32>, vector<16x128xf32> -> vector<16x128xf32>
    %c9_82 = arith.constant 9 : index
    %c0_83 = arith.constant 0 : index
    %c0_84 = arith.constant 0 : index
    %89 = vector.load %arg3[%c9_82, %c0_83, %c0_84] : memref<18x128x128xf32, #tpu.memory_space<vmem>>, vector<1x128x128xf32>
    %90 = vector.shape_cast %89 : vector<1x128x128xf32> to vector<128x128xf32>
    %cst_85 = arith.constant dense<0.000000e+00> : vector<16x128xf32>
    %91 = tpu.matmul %88, %90, %cst_85 {dimension_numbers = #tpu.dot_dimension_numbers<[1], [0], [0], [1], [0, 0, 1, 1], [], []>} : vector<16x128xf32>, vector<128x128xf32>, vector<16x128xf32> -> vector<16x128xf32>
    %92 = arith.addf %85, %91 : vector<16x128xf32>
    %c10 = arith.constant 10 : index
    %c0_86 = arith.constant 0 : index
    %c0_87 = arith.constant 0 : index
    %93 = vector.load %arg2[%c10, %c0_86, %c0_87] : memref<18x16x16xf32, #tpu.memory_space<vmem>>, vector<1x16x16xf32>
    %94 = vector.shape_cast %93 : vector<1x16x16xf32> to vector<16x16xf32>
    %cst_88 = arith.constant dense<0.000000e+00> : vector<16x128xf32>
    %95 = tpu.matmul %94, %81, %cst_88 {dimension_numbers = #tpu.dot_dimension_numbers<[1], [0], [0], [1], [0, 0, 1, 1], [], []>} : vector<16x16xf32>, vector<16x128xf32>, vector<16x128xf32> -> vector<16x128xf32>
    %c10_89 = arith.constant 10 : index
    %c0_90 = arith.constant 0 : index
    %c0_91 = arith.constant 0 : index
    %96 = vector.load %arg3[%c10_89, %c0_90, %c0_91] : memref<18x128x128xf32, #tpu.memory_space<vmem>>, vector<1x128x128xf32>
    %97 = vector.shape_cast %96 : vector<1x128x128xf32> to vector<128x128xf32>
    %cst_92 = arith.constant dense<0.000000e+00> : vector<16x128xf32>
    %98 = tpu.matmul %95, %97, %cst_92 {dimension_numbers = #tpu.dot_dimension_numbers<[1], [0], [0], [1], [0, 0, 1, 1], [], []>} : vector<16x128xf32>, vector<128x128xf32>, vector<16x128xf32> -> vector<16x128xf32>
    %99 = arith.addf %92, %98 : vector<16x128xf32>
    %c11 = arith.constant 11 : index
    %c0_93 = arith.constant 0 : index
    %c0_94 = arith.constant 0 : index
    %100 = vector.load %arg2[%c11, %c0_93, %c0_94] : memref<18x16x16xf32, #tpu.memory_space<vmem>>, vector<1x16x16xf32>
    %101 = vector.shape_cast %100 : vector<1x16x16xf32> to vector<16x16xf32>
    %cst_95 = arith.constant dense<0.000000e+00> : vector<16x128xf32>
    %102 = tpu.matmul %101, %81, %cst_95 {dimension_numbers = #tpu.dot_dimension_numbers<[1], [0], [0], [1], [0, 0, 1, 1], [], []>} : vector<16x16xf32>, vector<16x128xf32>, vector<16x128xf32> -> vector<16x128xf32>
    %c11_96 = arith.constant 11 : index
    %c0_97 = arith.constant 0 : index
    %c0_98 = arith.constant 0 : index
    %103 = vector.load %arg3[%c11_96, %c0_97, %c0_98] : memref<18x128x128xf32, #tpu.memory_space<vmem>>, vector<1x128x128xf32>
    %104 = vector.shape_cast %103 : vector<1x128x128xf32> to vector<128x128xf32>
    %cst_99 = arith.constant dense<0.000000e+00> : vector<16x128xf32>
    %105 = tpu.matmul %102, %104, %cst_99 {dimension_numbers = #tpu.dot_dimension_numbers<[1], [0], [0], [1], [0, 0, 1, 1], [], []>} : vector<16x128xf32>, vector<128x128xf32>, vector<16x128xf32> -> vector<16x128xf32>
    %106 = arith.addf %99, %105 : vector<16x128xf32>
    %cst_100 = arith.constant 0.000000e+00 : f32
    %107 = vector.broadcast %cst_100 : f32 to vector<16x128xf32>
    %108 = arith.maximumf %106, %107 : vector<16x128xf32>
    %c4_101 = arith.constant 4 : index
    %c0_102 = arith.constant 0 : index
    %c0_103 = arith.constant 0 : index
    %109 = vector.load %arg4[%c4_101, %c0_102, %c0_103] : memref<6x1x128xf32, #tpu.memory_space<vmem>>, vector<1x1x128xf32>
    %110 = vector.shape_cast %109 : vector<1x1x128xf32> to vector<1x128xf32>
    %111 = vector.shape_cast %110 : vector<1x128xf32> to vector<1x128xf32>
    %112 = vector.broadcast %111 : vector<1x128xf32> to vector<16x128xf32>
    %c12 = arith.constant 12 : index
    %c0_104 = arith.constant 0 : index
    %c0_105 = arith.constant 0 : index
    %113 = vector.load %arg2[%c12, %c0_104, %c0_105] : memref<18x16x16xf32, #tpu.memory_space<vmem>>, vector<1x16x16xf32>
    %114 = vector.shape_cast %113 : vector<1x16x16xf32> to vector<16x16xf32>
    %cst_106 = arith.constant dense<0.000000e+00> : vector<16x128xf32>
    %115 = tpu.matmul %114, %108, %cst_106 {dimension_numbers = #tpu.dot_dimension_numbers<[1], [0], [0], [1], [0, 0, 1, 1], [], []>} : vector<16x16xf32>, vector<16x128xf32>, vector<16x128xf32> -> vector<16x128xf32>
    %c12_107 = arith.constant 12 : index
    %c0_108 = arith.constant 0 : index
    %c0_109 = arith.constant 0 : index
    %116 = vector.load %arg3[%c12_107, %c0_108, %c0_109] : memref<18x128x128xf32, #tpu.memory_space<vmem>>, vector<1x128x128xf32>
    %117 = vector.shape_cast %116 : vector<1x128x128xf32> to vector<128x128xf32>
    %cst_110 = arith.constant dense<0.000000e+00> : vector<16x128xf32>
    %118 = tpu.matmul %115, %117, %cst_110 {dimension_numbers = #tpu.dot_dimension_numbers<[1], [0], [0], [1], [0, 0, 1, 1], [], []>} : vector<16x128xf32>, vector<128x128xf32>, vector<16x128xf32> -> vector<16x128xf32>
    %119 = arith.addf %112, %118 : vector<16x128xf32>
    %c13 = arith.constant 13 : index
    %c0_111 = arith.constant 0 : index
    %c0_112 = arith.constant 0 : index
    %120 = vector.load %arg2[%c13, %c0_111, %c0_112] : memref<18x16x16xf32, #tpu.memory_space<vmem>>, vector<1x16x16xf32>
    %121 = vector.shape_cast %120 : vector<1x16x16xf32> to vector<16x16xf32>
    %cst_113 = arith.constant dense<0.000000e+00> : vector<16x128xf32>
    %122 = tpu.matmul %121, %108, %cst_113 {dimension_numbers = #tpu.dot_dimension_numbers<[1], [0], [0], [1], [0, 0, 1, 1], [], []>} : vector<16x16xf32>, vector<16x128xf32>, vector<16x128xf32> -> vector<16x128xf32>
    %c13_114 = arith.constant 13 : index
    %c0_115 = arith.constant 0 : index
    %c0_116 = arith.constant 0 : index
    %123 = vector.load %arg3[%c13_114, %c0_115, %c0_116] : memref<18x128x128xf32, #tpu.memory_space<vmem>>, vector<1x128x128xf32>
    %124 = vector.shape_cast %123 : vector<1x128x128xf32> to vector<128x128xf32>
    %cst_117 = arith.constant dense<0.000000e+00> : vector<16x128xf32>
    %125 = tpu.matmul %122, %124, %cst_117 {dimension_numbers = #tpu.dot_dimension_numbers<[1], [0], [0], [1], [0, 0, 1, 1], [], []>} : vector<16x128xf32>, vector<128x128xf32>, vector<16x128xf32> -> vector<16x128xf32>
    %126 = arith.addf %119, %125 : vector<16x128xf32>
    %c14 = arith.constant 14 : index
    %c0_118 = arith.constant 0 : index
    %c0_119 = arith.constant 0 : index
    %127 = vector.load %arg2[%c14, %c0_118, %c0_119] : memref<18x16x16xf32, #tpu.memory_space<vmem>>, vector<1x16x16xf32>
    %128 = vector.shape_cast %127 : vector<1x16x16xf32> to vector<16x16xf32>
    %cst_120 = arith.constant dense<0.000000e+00> : vector<16x128xf32>
    %129 = tpu.matmul %128, %108, %cst_120 {dimension_numbers = #tpu.dot_dimension_numbers<[1], [0], [0], [1], [0, 0, 1, 1], [], []>} : vector<16x16xf32>, vector<16x128xf32>, vector<16x128xf32> -> vector<16x128xf32>
    %c14_121 = arith.constant 14 : index
    %c0_122 = arith.constant 0 : index
    %c0_123 = arith.constant 0 : index
    %130 = vector.load %arg3[%c14_121, %c0_122, %c0_123] : memref<18x128x128xf32, #tpu.memory_space<vmem>>, vector<1x128x128xf32>
    %131 = vector.shape_cast %130 : vector<1x128x128xf32> to vector<128x128xf32>
    %cst_124 = arith.constant dense<0.000000e+00> : vector<16x128xf32>
    %132 = tpu.matmul %129, %131, %cst_124 {dimension_numbers = #tpu.dot_dimension_numbers<[1], [0], [0], [1], [0, 0, 1, 1], [], []>} : vector<16x128xf32>, vector<128x128xf32>, vector<16x128xf32> -> vector<16x128xf32>
    %133 = arith.addf %126, %132 : vector<16x128xf32>
    %cst_125 = arith.constant 0.000000e+00 : f32
    %134 = vector.broadcast %cst_125 : f32 to vector<16x128xf32>
    %135 = arith.maximumf %133, %134 : vector<16x128xf32>
    %c5_126 = arith.constant 5 : index
    %c0_127 = arith.constant 0 : index
    %c0_128 = arith.constant 0 : index
    %136 = vector.load %arg4[%c5_126, %c0_127, %c0_128] : memref<6x1x128xf32, #tpu.memory_space<vmem>>, vector<1x1x128xf32>
    %137 = vector.shape_cast %136 : vector<1x1x128xf32> to vector<1x128xf32>
    %138 = vector.shape_cast %137 : vector<1x128xf32> to vector<1x128xf32>
    %139 = vector.broadcast %138 : vector<1x128xf32> to vector<16x128xf32>
    %c15 = arith.constant 15 : index
    %c0_129 = arith.constant 0 : index
    %c0_130 = arith.constant 0 : index
    %140 = vector.load %arg2[%c15, %c0_129, %c0_130] : memref<18x16x16xf32, #tpu.memory_space<vmem>>, vector<1x16x16xf32>
    %141 = vector.shape_cast %140 : vector<1x16x16xf32> to vector<16x16xf32>
    %cst_131 = arith.constant dense<0.000000e+00> : vector<16x128xf32>
    %142 = tpu.matmul %141, %135, %cst_131 {dimension_numbers = #tpu.dot_dimension_numbers<[1], [0], [0], [1], [0, 0, 1, 1], [], []>} : vector<16x16xf32>, vector<16x128xf32>, vector<16x128xf32> -> vector<16x128xf32>
    %c15_132 = arith.constant 15 : index
    %c0_133 = arith.constant 0 : index
    %c0_134 = arith.constant 0 : index
    %143 = vector.load %arg3[%c15_132, %c0_133, %c0_134] : memref<18x128x128xf32, #tpu.memory_space<vmem>>, vector<1x128x128xf32>
    %144 = vector.shape_cast %143 : vector<1x128x128xf32> to vector<128x128xf32>
    %cst_135 = arith.constant dense<0.000000e+00> : vector<16x128xf32>
    %145 = tpu.matmul %142, %144, %cst_135 {dimension_numbers = #tpu.dot_dimension_numbers<[1], [0], [0], [1], [0, 0, 1, 1], [], []>} : vector<16x128xf32>, vector<128x128xf32>, vector<16x128xf32> -> vector<16x128xf32>
    %146 = arith.addf %139, %145 : vector<16x128xf32>
    %c16 = arith.constant 16 : index
    %c0_136 = arith.constant 0 : index
    %c0_137 = arith.constant 0 : index
    %147 = vector.load %arg2[%c16, %c0_136, %c0_137] : memref<18x16x16xf32, #tpu.memory_space<vmem>>, vector<1x16x16xf32>
    %148 = vector.shape_cast %147 : vector<1x16x16xf32> to vector<16x16xf32>
    %cst_138 = arith.constant dense<0.000000e+00> : vector<16x128xf32>
    %149 = tpu.matmul %148, %135, %cst_138 {dimension_numbers = #tpu.dot_dimension_numbers<[1], [0], [0], [1], [0, 0, 1, 1], [], []>} : vector<16x16xf32>, vector<16x128xf32>, vector<16x128xf32> -> vector<16x128xf32>
    %c16_139 = arith.constant 16 : index
    %c0_140 = arith.constant 0 : index
    %c0_141 = arith.constant 0 : index
    %150 = vector.load %arg3[%c16_139, %c0_140, %c0_141] : memref<18x128x128xf32, #tpu.memory_space<vmem>>, vector<1x128x128xf32>
    %151 = vector.shape_cast %150 : vector<1x128x128xf32> to vector<128x128xf32>
    %cst_142 = arith.constant dense<0.000000e+00> : vector<16x128xf32>
    %152 = tpu.matmul %149, %151, %cst_142 {dimension_numbers = #tpu.dot_dimension_numbers<[1], [0], [0], [1], [0, 0, 1, 1], [], []>} : vector<16x128xf32>, vector<128x128xf32>, vector<16x128xf32> -> vector<16x128xf32>
    %153 = arith.addf %146, %152 : vector<16x128xf32>
    %c17 = arith.constant 17 : index
    %c0_143 = arith.constant 0 : index
    %c0_144 = arith.constant 0 : index
    %154 = vector.load %arg2[%c17, %c0_143, %c0_144] : memref<18x16x16xf32, #tpu.memory_space<vmem>>, vector<1x16x16xf32>
    %155 = vector.shape_cast %154 : vector<1x16x16xf32> to vector<16x16xf32>
    %cst_145 = arith.constant dense<0.000000e+00> : vector<16x128xf32>
    %156 = tpu.matmul %155, %135, %cst_145 {dimension_numbers = #tpu.dot_dimension_numbers<[1], [0], [0], [1], [0, 0, 1, 1], [], []>} : vector<16x16xf32>, vector<16x128xf32>, vector<16x128xf32> -> vector<16x128xf32>
    %c17_146 = arith.constant 17 : index
    %c0_147 = arith.constant 0 : index
    %c0_148 = arith.constant 0 : index
    %157 = vector.load %arg3[%c17_146, %c0_147, %c0_148] : memref<18x128x128xf32, #tpu.memory_space<vmem>>, vector<1x128x128xf32>
    %158 = vector.shape_cast %157 : vector<1x128x128xf32> to vector<128x128xf32>
    %cst_149 = arith.constant dense<0.000000e+00> : vector<16x128xf32>
    %159 = tpu.matmul %156, %158, %cst_149 {dimension_numbers = #tpu.dot_dimension_numbers<[1], [0], [0], [1], [0, 0, 1, 1], [], []>} : vector<16x128xf32>, vector<128x128xf32>, vector<16x128xf32> -> vector<16x128xf32>
    %160 = arith.addf %153, %159 : vector<16x128xf32>
    %cst_150 = arith.constant 0.000000e+00 : f32
    %161 = vector.broadcast %cst_150 : f32 to vector<16x128xf32>
    %162 = arith.subf %161, %160 : vector<16x128xf32>
    %163 = math.exp %162 : vector<16x128xf32>
    %cst_151 = arith.constant 1.000000e+00 : f32
    %164 = vector.broadcast %cst_151 : f32 to vector<16x128xf32>
    %165 = arith.addf %164, %163 : vector<16x128xf32>
    %cst_152 = arith.constant 1.000000e+00 : f32
    %166 = vector.broadcast %cst_152 : f32 to vector<16x128xf32>
    %167 = arith.divf %166, %165 : vector<16x128xf32>
    %c0_153 = arith.constant 0 : index
    %c0_154 = arith.constant 0 : index
    %168 = vector.load %arg5[%c0_153, %c0_154] : memref<16x128xf32, #tpu.memory_space<vmem>>, vector<16x128xf32>
    tpu.vector_store %arg5[%c0_153, %c0_154], %167 {strides = array<i32>} : memref<16x128xf32, #tpu.memory_space<vmem>>, vector<16x128xf32>,
    return
  }
  func.func @transform_0(%arg0: i32) -> (i32, i32) {
    %c0_i32 = arith.constant 0 : i32
    %c0_i32_0 = arith.constant 0 : i32
    return %arg0, %c0_i32 : i32, i32
  }
  func.func @transform_1(%arg0: i32) -> (i32, i32, i32) {
    %c0_i32 = arith.constant 0 : i32
    %c0_i32_0 = arith.constant 0 : i32
    %c0_i32_1 = arith.constant 0 : i32
    %c0_i32_2 = arith.constant 0 : i32
    return %c0_i32, %c0_i32_0, %c0_i32_1 : i32, i32, i32
  }
  func.func @transform_2(%arg0: i32) -> (i32, i32, i32) {
    %c0_i32 = arith.constant 0 : i32
    %c0_i32_0 = arith.constant 0 : i32
    %c0_i32_1 = arith.constant 0 : i32
    %c0_i32_2 = arith.constant 0 : i32
    return %c0_i32, %c0_i32_0, %c0_i32_1 : i32, i32, i32
  }
  func.func @transform_3(%arg0: i32) -> (i32, i32, i32) {
    %c0_i32 = arith.constant 0 : i32
    %c0_i32_0 = arith.constant 0 : i32
    %c0_i32_1 = arith.constant 0 : i32
    %c0_i32_2 = arith.constant 0 : i32
    return %c0_i32, %c0_i32_0, %c0_i32_1 : i32, i32, i32
  }
  func.func @transform_4(%arg0: i32) -> (i32, i32) {
    %c0_i32 = arith.constant 0 : i32
    %c0_i32_0 = arith.constant 0 : i32
    return %arg0, %c0_i32 : i32, i32
  }
}

</mosaic_0001>

<llo_original>
// kernel: tile.33
$region0: #{tile.33}
  #allocation0 [shape = 's32[1]{0}', space=sflag, size = 0x4, scoped, tag = 'scoped memory for tile.33']
  %s0 = inlined_call_operand.vmem [shape: f32[16], index: 0, kind: input, shape index: {}]
  %s1 = inlined_call_operand.vmem [shape: f32[8,16], index: 1, kind: output, shape index: {}]
  // Predicated region
  $region2: #{tile.33} parent=0 // pred_check
    _
  $region3: #{tile.33} parent=0 // pred_check_branch
    %3 = sbr.rel (0) target = $region5
  $region4: #{tile.33} parent=0 // pred_region
    _
  $region5: #{tile.33} parent=0 // pred_fallthru
    _
  %v4 = vld [vmem:[%s0] ss:$0 sm:$0xff]
  %5 = vst [vmem:[%s1] sm:$0xff] %v4

// kernel: tile.54
$region0: #{tile.54}
  %s0 = inlined_call_operand.vmem [shape: f32[8,16], index: 0, kind: input, shape index: {}]
  %s1 = inlined_call_operand.vmem [shape: f32[1,1,128], index: 1, kind: output, shape index: {}]
  $region1: #{tile.54} parent=0
    #allocation0 [shape = 'u8[4096]{0}', space=vmem, size = 0x1000, scoped, tag = 'scoped mem for output reshape']
    %v2 = vld [vmem:[%s0] sm:$0x1]
    %vm3 = vcmask 130048
    %4 = vst.msk [vmem:[#allocation0] sm:$0x1] %vm3, %v2
    %s5 = scalar_lea.vmem %s0, 7
    %v6 = vld [vmem:[%s5] sm:$0x1]
    %7 = vrot.lane.b32.xlu0 %v6, 112
    %v8 = vpop.permute.xlu0 %7
    %vm9 = vcmask 1048448
    %10 = vst.msk [vmem:[#allocation0] sm:$0x1] %vm9, %v8
    %s11 = scalar_lea.vmem %s0, 6
    %v12 = vld [vmem:[%s11] sm:$0x1]
    %13 = vrot.lane.b32.xlu0 %v12, 96
    %v14 = vpop.permute.xlu0 %13
    %vm15 = vcmask 917248
    %16 = vst.msk [vmem:[#allocation0] sm:$0x1] %vm15, %v14
    %s17 = scalar_lea.vmem %s0, 5
    %v18 = vld [vmem:[%s17] sm:$0x1]
    %19 = vrot.lane.b32.xlu0 %v18, 80
    %v20 = vpop.permute.xlu0 %19
    %vm21 = vcmask 786048
    %22 = vst.msk [vmem:[#allocation0] sm:$0x1] %vm21, %v20
    %s23 = scalar_lea.vmem %s0, 4
    %v24 = vld [vmem:[%s23] sm:$0x1]
    %25 = vrot.lane.b32.xlu0 %v24, 64
    %v26 = vpop.permute.xlu0 %25
    %vm27 = vcmask 654848
    %28 = vst.msk [vmem:[#allocation0] sm:$0x1] %vm27, %v26
    %s29 = scalar_lea.vmem %s0, 3
    %v30 = vld [vmem:[%s29] sm:$0x1]
    %31 = vrot.lane.b32.xlu0 %v30, 48
    %v32 = vpop.permute.xlu0 %31
    %vm33 = vcmask 523648
    %34 = vst.msk [vmem:[#allocation0] sm:$0x1] %vm33, %v32
    %s35 = scalar_lea.vmem %s0, 2
    %v36 = vld [vmem:[%s35] sm:$0x1]
    %37 = vrot.lane.b32.xlu0 %v36, 32
    %v38 = vpop.permute.xlu0 %37
    %vm39 = vcmask 392448
    %40 = vst.msk [vmem:[#allocation0] sm:$0x1] %vm39, %v38
    %s41 = scalar_lea.vmem %s0, 1
    %v42 = vld [vmem:[%s41] sm:$0x1]
    %43 = vrot.lane.b32.xlu0 %v42, 16
    %v44 = vpop.permute.xlu0 %43
    %vm45 = vcmask 261248
    %46 = vst.msk [vmem:[#allocation0] sm:$0x1] %vm45, %v44
    %s48 = sshllo.u32 0, 1
    %v50 = vld [vmem:[#allocation0] sm:%s48]
    %s51 = sshllo.u32 0, 1
    %52 = vst [vmem:[%s1] sm:%s51] %v50

// kernel: tile.37
$region0: #{tile.37}
  #allocation0 [shape = 's32[1]{0}', space=sflag, size = 0x4, scoped, tag = 'scoped memory for tile.37']
  %s0 = inlined_call_operand.vmem [shape: f32[32], index: 0, kind: input, shape index: {}]
  %s1 = inlined_call_operand.vmem [shape: f32[4,32], index: 1, kind: output, shape index: {}]
  // Predicated region
  $region2: #{tile.37} parent=0 // pred_check
    _
  $region3: #{tile.37} parent=0 // pred_check_branch
    %3 = sbr.rel (0) target = $region5
  $region4: #{tile.37} parent=0 // pred_region
    _
  $region5: #{tile.37} parent=0 // pred_fallthru
    _
  %v4 = vld [vmem:[%s0] ss:$0 sm:$0xff]
  %5 = vst [vmem:[%s1] sm:$0xf] %v4

// kernel: tile.55
$region0: #{tile.55}
  %s0 = inlined_call_operand.vmem [shape: f32[4,32], index: 0, kind: input, shape index: {}]
  %s1 = inlined_call_operand.vmem [shape: f32[1,1,128], index: 1, kind: output, shape index: {}]
  $region1: #{tile.55} parent=0
    #allocation0 [shape = 'u8[4096]{0}', space=vmem, size = 0x1000, scoped, tag = 'scoped mem for output reshape']
    #allocation1 [shape = 'u8[4096]{0}', space=vmem, size = 0x1000, scoped, tag = 'scoped mem for input reshape']
    %s3 = sshllo.u32 0, 4
    %v4 = vld [vmem:[%s0] sm:%s3]
    %5 = vst [vmem:[#allocation1] sm:%s3] %v4
    %v6 = vld [vmem:[#allocation1] sm:$0x1]
    %vm7 = vcmask 261120
    %8 = vst.msk [vmem:[#allocation0] sm:$0x1] %vm7, %v6
    %s9 = scalar_lea.vmem [#allocation1], 3
    %v10 = vld [vmem:[%s9] sm:$0x1]
    %11 = vrot.lane.b32.xlu0 %v10, 96
    %v12 = vpop.permute.xlu0 %11
    %vm13 = vcmask 1048320
    %14 = vst.msk [vmem:[#allocation0] sm:$0x1] %vm13, %v12
    %s15 = scalar_lea.vmem [#allocation1], 2
    %v16 = vld [vmem:[%s15] sm:$0x1]
    %17 = vrot.lane.b32.xlu0 %v16, 64
    %v18 = vpop.permute.xlu0 %17
    %vm19 = vcmask 785920
    %20 = vst.msk [vmem:[#allocation0] sm:$0x1] %vm19, %v18
    %s21 = scalar_lea.vmem [#allocation1], 1
    %v22 = vld [vmem:[%s21] sm:$0x1]
    %23 = vrot.lane.b32.xlu0 %v22, 32
    %v24 = vpop.permute.xlu0 %23
    %vm25 = vcmask 523520
    %26 = vst.msk [vmem:[#allocation0] sm:$0x1] %vm25, %v24
    %s28 = sshllo.u32 0, 1
    %v30 = vld [vmem:[#allocation0] sm:%s28]
    %s31 = sshllo.u32 0, 1
    %32 = vst [vmem:[%s1] sm:%s31] %v30

// kernel: tile.41
$region0: #{tile.41}
  #allocation0 [shape = 's32[1]{0}', space=sflag, size = 0x4, scoped, tag = 'scoped memory for tile.41']
  %s0 = inlined_call_operand.vmem [shape: f32[64], index: 0, kind: input, shape index: {}]
  %s1 = inlined_call_operand.vmem [shape: f32[2,64], index: 1, kind: output, shape index: {}]
  // Predicated region
  $region2: #{tile.41} parent=0 // pred_check
    _
  $region3: #{tile.41} parent=0 // pred_check_branch
    %3 = sbr.rel (0) target = $region5
  $region4: #{tile.41} parent=0 // pred_region
    _
  $region5: #{tile.41} parent=0 // pred_fallthru
    _
  %v4 = vld [vmem:[%s0] ss:$0 sm:$0xff]
  %5 = vst [vmem:[%s1] sm:$0x3] %v4

// kernel: tile.56
$region0: #{tile.56}
  %s0 = inlined_call_operand.vmem [shape: f32[2,64], index: 0, kind: input, shape index: {}]
  %s1 = inlined_call_operand.vmem [shape: f32[1,1,128], index: 1, kind: output, shape index: {}]
  $region1: #{tile.56} parent=0
    #allocation0 [shape = 'u8[4096]{0}', space=vmem, size = 0x1000, scoped, tag = 'scoped mem for output reshape']
    #allocation1 [shape = 'u8[4096]{0}', space=vmem, size = 0x1000, scoped, tag = 'scoped mem for input reshape']
    %s3 = sshllo.u32 0, 2
    %v4 = vld [vmem:[%s0] sm:%s3]
    %5 = vst [vmem:[#allocation1] sm:%s3] %v4
    %v6 = vld [vmem:[#allocation1] sm:$0x1]
    %vm7 = vcmask 523264
    %8 = vst.msk [vmem:[#allocation0] sm:$0x1] %vm7, %v6
    %s9 = scalar_lea.vmem [#allocation1], 1
    %v10 = vld [vmem:[%s9] sm:$0x1]
    %11 = vrot.lane.b32.xlu0 %v10, 64
    %v12 = vpop.permute.xlu0 %11
    %vm13 = vcmask 1048064
    %14 = vst.msk [vmem:[#allocation0] sm:$0x1] %vm13, %v12
    %s16 = sshllo.u32 0, 1
    %v18 = vld [vmem:[#allocation0] sm:%s16]
    %s19 = sshllo.u32 0, 1
    %20 = vst [vmem:[%s1] sm:%s19] %v18

// kernel: tile.53
$region0: #{tile.53}
  #allocation0 [shape = 's32[1]{0}', space=sflag, size = 0x4, scoped, tag = 'scoped memory for tile.53']
  %s0 = inlined_call_operand.vmem [shape: f32[8], index: 0, kind: input, shape index: {}]
  %s1 = inlined_call_operand.vmem [shape: f32[16,8], index: 1, kind: output, shape index: {}]
  // Predicated region
  $region2: #{tile.53} parent=0 // pred_check
    _
  $region3: #{tile.53} parent=0 // pred_check_branch
    %3 = sbr.rel (0) target = $region5
  $region4: #{tile.53} parent=0 // pred_region
    _
  $region5: #{tile.53} parent=0 // pred_fallthru
    _
  %v4 = vld [vmem:[%s0] ss:$0 sm:$0xff]
  %5 = vst [vmem:[%s1] sm:$0xff] %v4
  %s6 = scalar_lea.vmem %s1, 8
  %7 = vst [vmem:[%s6] sm:$0xff] %v4

// kernel: tile.59
$region0: #{tile.59}
  %s0 = inlined_call_operand.vmem [shape: f32[16,8], index: 0, kind: input, shape index: {}]
  %s1 = inlined_call_operand.vmem [shape: f32[1,1,128], index: 1, kind: output, shape index: {}]
  $region1: #{tile.59} parent=0
    #allocation0 [shape = 'u8[4096]{0}', space=vmem, size = 0x1000, scoped, tag = 'scoped mem for output reshape']
    %v2 = vld [vmem:[%s0] sm:$0x1]
    %vm3 = vcmask 64512
    %4 = vst.msk [vmem:[#allocation0] sm:$0x1] %vm3, %v2
    %s5 = scalar_lea.vmem %s0, 15
    %v6 = vld [vmem:[%s5] sm:$0x1]
    %7 = vrot.lane.b32.xlu0 %v6, 120
    %v8 = vpop.permute.xlu0 %7
    %vm9 = vcmask 1048512
    %10 = vst.msk [vmem:[#allocation0] sm:$0x1] %vm9, %v8
    %s11 = scalar_lea.vmem %s0, 14
    %v12 = vld [vmem:[%s11] sm:$0x1]
    %13 = vrot.lane.b32.xlu0 %v12, 112
    %v14 = vpop.permute.xlu0 %13
    %vm15 = vcmask 982912
    %16 = vst.msk [vmem:[#allocation0] sm:$0x1] %vm15, %v14
    %s17 = scalar_lea.vmem %s0, 13
    %v18 = vld [vmem:[%s17] sm:$0x1]
    %19 = vrot.lane.b32.xlu0 %v18, 104
    %v20 = vpop.permute.xlu0 %19
    %vm21 = vcmask 917312
    %22 = vst.msk [vmem:[#allocation0] sm:$0x1] %vm21, %v20
    %s23 = scalar_lea.vmem %s0, 12
    %v24 = vld [vmem:[%s23] sm:$0x1]
    %25 = vrot.lane.b32.xlu0 %v24, 96
    %v26 = vpop.permute.xlu0 %25
    %vm27 = vcmask 851712
    %28 = vst.msk [vmem:[#allocation0] sm:$0x1] %vm27, %v26
    %s29 = scalar_lea.vmem %s0, 11
    %v30 = vld [vmem:[%s29] sm:$0x1]
    %31 = vrot.lane.b32.xlu0 %v30, 88
    %v32 = vpop.permute.xlu0 %31
    %vm33 = vcmask 786112
    %34 = vst.msk [vmem:[#allocation0] sm:$0x1] %vm33, %v32
    %s35 = scalar_lea.vmem %s0, 10
    %v36 = vld [vmem:[%s35] sm:$0x1]
    %37 = vrot.lane.b32.xlu0 %v36, 80
    %v38 = vpop.permute.xlu0 %37
    %vm39 = vcmask 720512
    %40 = vst.msk [vmem:[#allocation0] sm:$0x1] %vm39, %v38
    %s41 = scalar_lea.vmem %s0, 9
    %v42 = vld [vmem:[%s41] sm:$0x1]
    %43 = vrot.lane.b32.xlu0 %v42, 72
    %v44 = vpop.permute.xlu0 %43
    %vm45 = vcmask 654912
    %46 = vst.msk [vmem:[#allocation0] sm:$0x1] %vm45, %v44
    %s47 = scalar_lea.vmem %s0, 8
    %v48 = vld [vmem:[%s47] sm:$0x1]
    %49 = vrot.lane.b32.xlu0 %v48, 64
    %v50 = vpop.permute.xlu0 %49
    %vm51 = vcmask 589312
    %52 = vst.msk [vmem:[#allocation0] sm:$0x1] %vm51, %v50
    %s53 = scalar_lea.vmem %s0, 7
    %v54 = vld [vmem:[%s53] sm:$0x1]
    %55 = vrot.lane.b32.xlu0 %v54, 56
    %v56 = vpop.permute.xlu0 %55
    %vm57 = vcmask 523712
    %58 = vst.msk [vmem:[#allocation0] sm:$0x1] %vm57, %v56
    %s59 = scalar_lea.vmem %s0, 6
    %v60 = vld [vmem:[%s59] sm:$0x1]
    %61 = vrot.lane.b32.xlu0 %v60, 48
    %v62 = vpop.permute.xlu0 %61
    %vm63 = vcmask 458112
    %64 = vst.msk [vmem:[#allocation0] sm:$0x1] %vm63, %v62
    %s65 = scalar_lea.vmem %s0, 5
    %v66 = vld [vmem:[%s65] sm:$0x1]
    %67 = vrot.lane.b32.xlu0 %v66, 40
    %v68 = vpop.permute.xlu0 %67
    %vm69 = vcmask 392512
    %70 = vst.msk [vmem:[#allocation0] sm:$0x1] %vm69, %v68
    %s71 = scalar_lea.vmem %s0, 4
    %v72 = vld [vmem:[%s71] sm:$0x1]
    %73 = vrot.lane.b32.xlu0 %v72, 32
    %v74 = vpop.permute.xlu0 %73
    %vm75 = vcmask 326912
    %76 = vst.msk [vmem:[#allocation0] sm:$0x1] %vm75, %v74
    %s77 = scalar_lea.vmem %s0, 3
    %v78 = vld [vmem:[%s77] sm:$0x1]
    %79 = vrot.lane.b32.xlu0 %v78, 24
    %v80 = vpop.permute.xlu0 %79
    %vm81 = vcmask 261312
    %82 = vst.msk [vmem:[#allocation0] sm:$0x1] %vm81, %v80
    %s83 = scalar_lea.vmem %s0, 2
    %v84 = vld [vmem:[%s83] sm:$0x1]
    %85 = vrot.lane.b32.xlu0 %v84, 16
    %v86 = vpop.permute.xlu0 %85
    %vm87 = vcmask 195712
    %88 = vst.msk [vmem:[#allocation0] sm:$0x1] %vm87, %v86
    %s89 = scalar_lea.vmem %s0, 1
    %v90 = vld [vmem:[%s89] sm:$0x1]
    %91 = vrot.lane.b32.xlu0 %v90, 8
    %v92 = vpop.permute.xlu0 %91
    %vm93 = vcmask 130112
    %94 = vst.msk [vmem:[#allocation0] sm:$0x1] %vm93, %v92
    %s96 = sshllo.u32 0, 1
    %v98 = vld [vmem:[#allocation0] sm:%s96]
    %s99 = sshllo.u32 0, 1
    %100 = vst [vmem:[%s1] sm:%s99] %v98

// kernel: autoencoder_forward.1
$region0: #{autoencoder_forward.1}
  #allocation0 [shape = 'u32[]', space=smem, size = 0x4, offset = 0x4, fixed_abs, tag = 'smem constant byte address 0x4 - core index']
  #allocation1 [shape = 'u32[144,128]{1,0:T(1,128)}', space=vmem, size = 0x12000, scoped, tag = 'internal scratch']
  %s0 = inlined_call_operand.vmem [shape: f32[32,128], index: 0, kind: input, shape index: {}]
  %s1 = inlined_call_operand.vmem [shape: f32[18,16,16], index: 1, kind: input, shape index: {}]
  %s2 = inlined_call_operand.vmem [shape: f32[18,128,128], index: 2, kind: input, shape index: {}]
  %s3 = inlined_call_operand.vmem [shape: f32[6,1,128], index: 3, kind: input, shape index: {}]
  %s4 = inlined_call_operand.vmem [shape: f32[32,128], index: 4, kind: output, shape index: {}]
  %s5 = sld [smem:[#allocation0]]
  $region49: #{autoencoder_forward.1} parent=0
    _
  %s7 = ssub.s32 1, %s5
  %s8 = scalar_select 0, %s7, %s5
  loop: start=0, step=1, limit=4
  $region2: #{autoencoder_forward.1} parent=0 // loop_pre_header
    _
  $region3: #{autoencoder_forward.1} parent=0 // loop_header
    %s10 = sphi 0, %s14
    %p11 = scmp.ge.s32.totalorder %s10, 4
    %s20 = sphi 0, %s22
    %s23 = sphi 0, %s20
    %s24 = sphi 0, %s23
    %s40 = sphi 0, %s24
    %s44 = sphi 0, %s44
    %s46 = sphi 0, %s44
    %s47 = sphi 0, %s46
    %s61 = sphi 0, %s47
    %s65 = sphi 0, %s65
    %s67 = sphi 0, %s65
    %s68 = sphi 0, %s67
    %s82 = sphi 0, %s68
    %s86 = sphi 0, %s86
    %s88 = sphi 0, %s86
    %s89 = sphi 0, %s88
    %s103 = sphi 0, %s89
    %s109 = sphi 0, %s111
    %s112 = sphi 0, %s109
    %s113 = sphi 0, %s112
    %s129 = sphi 0, %s113
  $region4: #{autoencoder_forward.1} parent=0 // loop_header_branch
    %13 = sbr.rel (%p11) target = $region8
  $region5: #{autoencoder_forward.1} parent=0 // loop_body
    %s15 = ssub.s32 %s10, 1
    %s16 = ssub.s32 %s10, 2
    %s17 = sadd.s32 %s10, 1
    %s18 = ssub.s32 %s10, %s17
    %p19 = scmp.eq.s32.totalorder %s18, 0
    %s21 = sadd.s32 %s20, 1
    %s22 = scalar_select %p19, %s20, %s21
    %p25 = pneg %p19
    %p26 = scmp.eq.s32.totalorder %s10, 1
    %p27 = por %p25, %p26
    %p28 = scmp.ne.s32.totalorder %s20, %s23
    %p29 = scmp.eq.s32.totalorder %s10, 0
    %p30 = por %p28, %p29
    %p31 = scmp.ne.s32.totalorder %s20, %s23
    %p32 = scmp.eq.s32.totalorder %s15, 1
    %p33 = por %p31, %p32
    %p34 = scmp.ne.s32.totalorder %s23, %s24
    %p35 = scmp.eq.s32.totalorder %s15, 0
    %p36 = por %p34, %p35
    %p37 = scmp.ne.s32.totalorder %s23, %s24
    %p38 = scmp.eq.s32.totalorder %s16, 1
    %p39 = por %p37, %p38
    %p41 = scmp.ne.s32.totalorder %s24, %s40
    %p42 = scmp.eq.s32.totalorder %s16, 0
    %p43 = por %p41, %p42
    %s45 = sadd.s32 %s44, 1
    %p48 = scmp.eq.s32.totalorder %s10, 1
    %p49 = scmp.ne.s32.totalorder %s44, %s46
    %p50 = scmp.eq.s32.totalorder %s10, 0
    %p51 = por %p49, %p50
    %p52 = scmp.ne.s32.totalorder %s44, %s46
    %p53 = scmp.eq.s32.totalorder %s15, 1
    %p54 = por %p52, %p53
    %p55 = scmp.ne.s32.totalorder %s46, %s47
    %p56 = scmp.eq.s32.totalorder %s15, 0
    %p57 = por %p55, %p56
    %p58 = scmp.ne.s32.totalorder %s46, %s47
    %p59 = scmp.eq.s32.totalorder %s16, 1
    %p60 = por %p58, %p59
    %p62 = scmp.ne.s32.totalorder %s47, %s61
    %p63 = scmp.eq.s32.totalorder %s16, 0
    %p64 = por %p62, %p63
    %s66 = sadd.s32 %s65, 1
    %p69 = scmp.eq.s32.totalorder %s10, 1
    %p70 = scmp.ne.s32.totalorder %s65, %s67
    %p71 = scmp.eq.s32.totalorder %s10, 0
    %p72 = por %p70, %p71
    %p73 = scmp.ne.s32.totalorder %s65, %s67
    %p74 = scmp.eq.s32.totalorder %s15, 1
    %p75 = por %p73, %p74
    %p76 = scmp.ne.s32.totalorder %s67, %s68
    %p77 = scmp.eq.s32.totalorder %s15, 0
    %p78 = por %p76, %p77
    %p79 = scmp.ne.s32.totalorder %s67, %s68
    %p80 = scmp.eq.s32.totalorder %s16, 1
    %p81 = por %p79, %p80
    %p83 = scmp.ne.s32.totalorder %s68, %s82
    %p84 = scmp.eq.s32.totalorder %s16, 0
    %p85 = por %p83, %p84
    %s87 = sadd.s32 %s86, 1
    %p90 = scmp.eq.s32.totalorder %s10, 1
    %p91 = scmp.ne.s32.totalorder %s86, %s88
    %p92 = scmp.eq.s32.totalorder %s10, 0
    %p93 = por %p91, %p92
    %p94 = scmp.ne.s32.totalorder %s86, %s88
    %p95 = scmp.eq.s32.totalorder %s15, 1
    %p96 = por %p94, %p95
    %p97 = scmp.ne.s32.totalorder %s88, %s89
    %p98 = scmp.eq.s32.totalorder %s15, 0
    %p99 = por %p97, %p98
    %p100 = scmp.ne.s32.totalorder %s88, %s89
    %p101 = scmp.eq.s32.totalorder %s16, 1
    %p102 = por %p100, %p101
    %p104 = scmp.ne.s32.totalorder %s89, %s103
    %p105 = scmp.eq.s32.totalorder %s16, 0
    %p106 = por %p104, %p105
    %s107 = ssub.s32 %s10, %s17
    %p108 = scmp.eq.s32.totalorder %s107, 0
    %s110 = sadd.s32 %s109, 1
    %s111 = scalar_select %p108, %s109, %s110
    %p114 = pneg %p108
    %p115 = scmp.eq.s32.totalorder %s10, 1
    %p116 = por %p114, %p115
    %p117 = scmp.ne.s32.totalorder %s109, %s112
    %p118 = scmp.eq.s32.totalorder %s10, 0
    %p119 = por %p117, %p118
    %p120 = scmp.ne.s32.totalorder %s109, %s112
    %p121 = scmp.eq.s32.totalorder %s15, 1
    %p122 = por %p120, %p121
    %p123 = scmp.ne.s32.totalorder %s112, %s113
    %p124 = scmp.eq.s32.totalorder %s15, 0
    %p125 = por %p123, %p124
    %p126 = scmp.ne.s32.totalorder %s112, %s113
    %p127 = scmp.eq.s32.totalorder %s16, 1
    %p128 = por %p126, %p127
    %p130 = scmp.ne.s32.totalorder %s113, %s129
    %p131 = scmp.eq.s32.totalorder %s16, 0
    %p132 = por %p130, %p131
    %p133 = scmp.le.s32.totalorder 1, %s10
    %p134 = scmp.lt.s32.totalorder %s10, 3
    %p135 = pnand %p133, %p134
    %p136 = pneg %p135
    // Predicated region
    $region9: #{autoencoder_forward.1} parent=5 // pred_check
      _
    $region10: #{autoencoder_forward.1} parent=5 // pred_check_branch
      %138 = sbr.rel (%p135) target = $region12
    $region11: #{autoencoder_forward.1} parent=5 // pred_region
      %s139 = ssub.s32 %s10, 1
      // Predicated region
      $region13: #{autoencoder_forward.1} parent=11 // pred_check
        %p140 = pneg %p57
      $region14: #{autoencoder_forward.1} parent=11 // pred_check_branch
        %142 = sbr.rel (%p140) target = $region16
      $region15: #{autoencoder_forward.1} parent=11 // pred_region
        _
      $region16: #{autoencoder_forward.1} parent=11 // pred_fallthru
        _
      // Predicated region
      $region17: #{autoencoder_forward.1} parent=11 // pred_check
        %p143 = pneg %p78
      $region18: #{autoencoder_forward.1} parent=11 // pred_check_branch
        %145 = sbr.rel (%p143) target = $region20
      $region19: #{autoencoder_forward.1} parent=11 // pred_region
        _
      $region20: #{autoencoder_forward.1} parent=11 // pred_fallthru
        _
      // Predicated region
      $region21: #{autoencoder_forward.1} parent=11 // pred_check
        %p146 = pneg %p99
      $region22: #{autoencoder_forward.1} parent=11 // pred_check_branch
        %148 = sbr.rel (%p146) target = $region24
      $region23: #{autoencoder_forward.1} parent=11 // pred_region
        _
      $region24: #{autoencoder_forward.1} parent=11 // pred_fallthru
        _
    $region12: #{autoencoder_forward.1} parent=5 // pred_fallthru
      _
    %p149 = scmp.lt.s32.totalorder %s10, 2
    // Predicated region
    $region25: #{autoencoder_forward.1} parent=5 // pred_check
      %p150 = pneg %p149
    $region26: #{autoencoder_forward.1} parent=5 // pred_check_branch
      %152 = sbr.rel (%p150) target = $region28
    $region27: #{autoencoder_forward.1} parent=5 // pred_region
      // Predicated region
      $region29: #{autoencoder_forward.1} parent=27 // pred_check
        %p153 = pneg %p30
      $region30: #{autoencoder_forward.1} parent=27 // pred_check_branch
        %155 = sbr.rel (%p153) target = $region32
      $region31: #{autoencoder_forward.1} parent=27 // pred_region
        %s156 = smul.u32 2, %s10
        %p157 = scmp.lt.s32.totalorder %s156, 3
        %s158 = scalar_select %p157, %s156, 3
        %s159 = smul.addr %s158, 8
        %s160 = scalar_lea.vmem %s0, %s159
        %s161 = smul.u32 2, %s10
      $region32: #{autoencoder_forward.1} parent=27 // pred_fallthru
        _
    $region28: #{autoencoder_forward.1} parent=5 // pred_fallthru
      _
    %p162 = scmp.le.s32.totalorder 1, %s10
    %p163 = scmp.lt.s32.totalorder %s10, 3
    %p164 = pnand %p162, %p163
    %p165 = pneg %p164
    // Predicated region
    $region33: #{autoencoder_forward.1} parent=5 // pred_check
      _
    $region34: #{autoencoder_forward.1} parent=5 // pred_check_branch
      %167 = sbr.rel (%p164) target = $region36
    $region35: #{autoencoder_forward.1} parent=5 // pred_region
      %s168 = ssub.s32 %s10, 1
      %s169 = smul.u32 2, %s15
      %p170 = scmp.lt.s32.totalorder %s169, 3
      %s171 = scalar_select %p170, %s169, 3
      %s172 = smul.addr %s171, 8
      %s173 = scalar_lea.vmem %s0, %s172
      %p174 = pneg %p36
      %p175 = pneg %p33
      %p176 = pneg %p57
      %p177 = pneg %p54
      %p178 = pneg %p78
      %p179 = pneg %p75
      %p180 = pneg %p99
      %p181 = pneg %p96
      %p182 = pneg %p125
      %p183 = pneg %p122
      %s184 = smul.u32 2, %s15
      %p185 = scmp.lt.s32.totalorder %s184, 3
      %s186 = scalar_select %p185, %s184, 3
      %s187 = smul.addr %s186, 8
      %s188 = scalar_lea.vmem %s4, %s187
      %s189 = smul.u32 2, %s15
      %p190 = scmp.lt.s32.totalorder %s189, 3
      %s191 = scalar_select %p190, %s189, 3
      %s192 = smul.addr %s191, 8
      %s193 = scalar_lea.vmem %s0, %s192
      %s194 = smul.u32 2, %s15
      %s195 = smul.u32 2, %s15
      %p196 = scmp.lt.s32.totalorder %s195, 3
      %s197 = scalar_select %p196, %s195, 3
      %s198 = smul.addr %s197, 8
      %s199 = scalar_lea.vmem %s4, %s198
      %s200 = smul.u32 2, %s15
      %v201 = vld [vmem:[%s193] sm:$0xff]
      %v202 = vld [vmem:[%s193 + $0x8] sm:$0xff]
      %v203 = vld [vmem:[%s3] sm:$0x1]
      %v205 = vlaneseq
      %v206 = vshrl.u32 %v205, 7
      %v207 = vsub.s32 0, %v206
      %v208 = vrot.slane %v203, %v207
      %v210 = vld [vmem:[%s1] sm:$0xff]
      %v211 = vld [vmem:[%s1 + $0x8] sm:$0xff]
      %vm212 = vcmask 130048
      %v214 = vsel %vm212, %v210, 0
      %v217 = vsel %vm212, %v211, 0
      %219 = vmatprep.subr.mxu0 0.0
      %220 = vmatpush1.msra.mxu0 %v201
      %221 = vmatprep.subr.mxu0 0.0
      %222 = vmatpush1.msra.mxu0 %v202
      %223 = vmatprep.subr.mxu0 0.0
      %224 = vmatpush1.msra.mxu0 0.0
      %225 = vmatprep.subr.mxu0 0.0
      %226 = vmatpush1.msra.mxu0 0.0
      %227 = vmatprep.subr.mxu0 0.0
      %228 = vmatpush1.msra.mxu0 0.0
      %229 = vmatprep.subr.mxu0 0.0
      %230 = vmatpush1.msra.mxu0 0.0
      %231 = vmatprep.subr.mxu0 0.0
      %232 = vmatpush1.msra.mxu0 0.0
      %233 = vmatprep.subr.mxu0 0.0
      %234 = vmatpush1.msra.mxu0 0.0
      %235 = vmatprep.subr.mxu0 0.0
      %236 = vmatpush1.msra.mxu0 0.0
      %237 = vmatprep.subr.mxu0 0.0
      %238 = vmatpush1.msra.mxu0 0.0
      %239 = vmatprep.subr.mxu0 0.0
      %240 = vmatpush1.msra.mxu0 0.0
      %241 = vmatprep.subr.mxu0 0.0
      %242 = vmatpush1.msra.mxu0 0.0
      %243 = vmatprep.subr.mxu0 0.0
      %244 = vmatpush1.msra.mxu0 0.0
      %245 = vmatprep.subr.mxu0 0.0
      %246 = vmatpush1.msra.mxu0 0.0
      %247 = vmatprep.subr.mxu0 0.0
      %248 = vmatpush1.msra.mxu0 0.0
      %249 = vmatprep.subr.mxu0 0.0
      %250 = vmatpush1.msra.mxu0 0.0
      %251 = vmatprep.subr.mxu0 0.0
      %252 = vmatpush1.msra.mxu0 0.0
      %253 = vmatprep.subr.mxu0 0.0
      %254 = vmatpush1.msra.mxu0 0.0
      %255 = vmatprep.subr.mxu0 0.0
      %256 = vmatpush1.msra.mxu0 0.0
      %257 = vmatprep.subr.mxu0 0.0
      %258 = vmatpush1.msra.mxu0 0.0
      %259 = vmatprep.subr.mxu0 0.0
      %260 = vmatpush1.msra.mxu0 0.0
      %261 = vmatprep.subr.mxu0 0.0
      %262 = vmatpush1.msra.mxu0 0.0
      %263 = vmatprep.subr.mxu0 0.0
      %264 = vmatpush1.msra.mxu0 0.0
      %265 = vmatprep.subr.mxu0 0.0
      %266 = vmatpush1.msra.mxu0 0.0
      %267 = vmatprep.subr.mxu0 0.0
      %268 = vmatpush1.msra.mxu0 0.0
      %269 = vmatprep.subr.mxu0 0.0
      %270 = vmatpush1.msra.mxu0 0.0
      %271 = vmatprep.subr.mxu0 0.0
      %272 = vmatpush1.msra.mxu0 0.0
      %273 = vmatprep.subr.mxu0 0.0
      %274 = vmatpush1.msra.mxu0 0.0
      %275 = vmatprep.subr.mxu0 0.0
      %276 = vmatpush1.msra.mxu0 0.0
      %277 = vmatprep.subr.mxu0 0.0
      %278 = vmatpush1.msra.mxu0 0.0
      %279 = vmatprep.subr.mxu0 0.0
      %280 = vmatpush1.msra.mxu0 0.0
      %281 = vmatprep.subr.mxu0 0.0
      %282 = vmatpush1.msra.mxu0 0.0
      %283 = vmatprep.mubr.f32.mxu0 0.0
      %284 = vmatmul.mubr.f32.gmra.mrb[0].mxu0 %v214
      %v285 = vpop.f32.mrb[0].mxu0
      %v286 = vadd.f32 0.0, %v285
      %v287 = vpop.f32.mrb[0].mxu0
      %288 = vmatprep.mubr.f32.mxu0 0.0
      %289 = vmatmul.mubr.f32.gmra.mrb[0].mxu0 %v217
      %v290 = vpop.f32.mrb[0].mxu0
      %v291 = vadd.f32 0.0, %v290
      %v292 = vpop.f32.mrb[0].mxu0
      %293 = vdwg.mxu0
      %v294 = vld [vmem:[%s2] sm:$0xff]
      %v295 = vld [vmem:[%s2 + $0x8] sm:$0xff]
      %v296 = vld [vmem:[%s2 + $0x10] sm:$0xff]
      %v297 = vld [vmem:[%s2 + $0x18] sm:$0xff]
      %v298 = vld [vmem:[%s2 + $0x20] sm:$0xff]
      %v299 = vld [vmem:[%s2 + $0x28] sm:$0xff]
      %v300 = vld [vmem:[%s2 + $0x30] sm:$0xff]
      %v301 = vld [vmem:[%s2 + $0x38] sm:$0xff]
      %v302 = vld [vmem:[%s2 + $0x40] sm:$0xff]
      %v303 = vld [vmem:[%s2 + $0x48] sm:$0xff]
      %v304 = vld [vmem:[%s2 + $0x50] sm:$0xff]
      %v305 = vld [vmem:[%s2 + $0x58] sm:$0xff]
      %v306 = vld [vmem:[%s2 + $0x60] sm:$0xff]
      %v307 = vld [vmem:[%s2 + $0x68] sm:$0xff]
      %v308 = vld [vmem:[%s2 + $0x70] sm:$0xff]
      %v309 = vld [vmem:[%s2 + $0x78] sm:$0xff]
      %310 = vmatprep.subr.mxu0 0.0
      %311 = vmatpush1.msra.mxu0 %v294
      %312 = vmatprep.subr.mxu0 0.0
      %313 = vmatpush1.msra.mxu0 %v295
      %314 = vmatprep.subr.mxu0 0.0
      %315 = vmatpush1.msra.mxu0 %v296
      %316 = vmatprep.subr.mxu0 0.0
      %317 = vmatpush1.msra.mxu0 %v297
      %318 = vmatprep.subr.mxu0 0.0
      %319 = vmatpush1.msra.mxu0 %v298
      %320 = vmatprep.subr.mxu0 0.0
      %321 = vmatpush1.msra.mxu0 %v299
      %322 = vmatprep.subr.mxu0 0.0
      %323 = vmatpush1.msra.mxu0 %v300
      %324 = vmatprep.subr.mxu0 0.0
      %325 = vmatpush1.msra.mxu0 %v301
      %326 = vmatprep.subr.mxu0 0.0
      %327 = vmatpush1.msra.mxu0 %v302
      %328 = vmatprep.subr.mxu0 0.0
      %329 = vmatpush1.msra.mxu0 %v303
      %330 = vmatprep.subr.mxu0 0.0
      %331 = vmatpush1.msra.mxu0 %v304
      %332 = vmatprep.subr.mxu0 0.0
      %333 = vmatpush1.msra.mxu0 %v305
      %334 = vmatprep.subr.mxu0 0.0
      %335 = vmatpush1.msra.mxu0 %v306
      %336 = vmatprep.subr.mxu0 0.0
      %337 = vmatpush1.msra.mxu0 %v307
      %338 = vmatprep.subr.mxu0 0.0
      %339 = vmatpush1.msra.mxu0 %v308
      %340 = vmatprep.subr.mxu0 0.0
      %341 = vmatpush1.msra.mxu0 %v309
      %342 = vmatprep.subr.mxu0 0.0
      %343 = vmatpush1.msra.mxu0 0.0
      %344 = vmatprep.subr.mxu0 0.0
      %345 = vmatpush1.msra.mxu0 0.0
      %346 = vmatprep.subr.mxu0 0.0
      %347 = vmatpush1.msra.mxu0 0.0
      %348 = vmatprep.subr.mxu0 0.0
      %349 = vmatpush1.msra.mxu0 0.0
      %350 = vmatprep.subr.mxu0 0.0
      %351 = vmatpush1.msra.mxu0 0.0
      %352 = vmatprep.subr.mxu0 0.0
      %353 = vmatpush1.msra.mxu0 0.0
      %354 = vmatprep.subr.mxu0 0.0
      %355 = vmatpush1.msra.mxu0 0.0
      %356 = vmatprep.subr.mxu0 0.0
      %357 = vmatpush1.msra.mxu0 0.0
      %358 = vmatprep.subr.mxu0 0.0
      %359 = vmatpush1.msra.mxu0 0.0
      %360 = vmatprep.subr.mxu0 0.0
      %361 = vmatpush1.msra.mxu0 0.0
      %362 = vmatprep.subr.mxu0 0.0
      %363 = vmatpush1.msra.mxu0 0.0
      %364 = vmatprep.subr.mxu0 0.0
      %365 = vmatpush1.msra.mxu0 0.0
      %366 = vmatprep.subr.mxu0 0.0
      %367 = vmatpush1.msra.mxu0 0.0
      %368 = vmatprep.subr.mxu0 0.0
      %369 = vmatpush1.msra.mxu0 0.0
      %370 = vmatprep.subr.mxu0 0.0
      %371 = vmatpush1.msra.mxu0 0.0
      %372 = vmatprep.subr.mxu0 0.0
      %373 = vmatpush1.msra.mxu0 0.0
      %374 = vmatprep.mubr.f32.mxu0 0.0
      %375 = vmatmul.mubr.f32.gmra.mrb[0].mxu0 %v286
      %v376 = vpop.f32.mrb[0].mxu0
      %v377 = vadd.f32 0.0, %v376
      %v378 = vpop.f32.mrb[0].mxu0
      %379 = vmatprep.mubr.f32.mxu0 0.0
      %380 = vmatmul.mubr.f32.gmra.mrb[0].mxu0 %v291
      %v381 = vpop.f32.mrb[0].mxu0
      %v382 = vadd.f32 0.0, %v381
      %v383 = vpop.f32.mrb[0].mxu0
      %384 = vdwg.mxu0
      %v385 = vadd.f32 %v208, %v377
      %v386 = vadd.f32 %v208, %v382
      %s387 = scalar_lea.vmem %s1, 16
      %v388 = vld [vmem:[%s387] sm:$0xff]
      %v389 = vld [vmem:[%s387 + $0x8] sm:$0xff]
      %v391 = vsel %vm212, %v388, 0
      %v394 = vsel %vm212, %v389, 0
      %396 = vmatprep.subr.mxu0 0.0
      %397 = vmatpush1.msra.mxu0 %v201
      %398 = vmatprep.subr.mxu0 0.0
      %399 = vmatpush1.msra.mxu0 %v202
      %400 = vmatprep.subr.mxu0 0.0
      %401 = vmatpush1.msra.mxu0 0.0
      %402 = vmatprep.subr.mxu0 0.0
      %403 = vmatpush1.msra.mxu0 0.0
      %404 = vmatprep.subr.mxu0 0.0
      %405 = vmatpush1.msra.mxu0 0.0
      %406 = vmatprep.subr.mxu0 0.0
      %407 = vmatpush1.msra.mxu0 0.0
      %408 = vmatprep.subr.mxu0 0.0
      %409 = vmatpush1.msra.mxu0 0.0
      %410 = vmatprep.subr.mxu0 0.0
      %411 = vmatpush1.msra.mxu0 0.0
      %412 = vmatprep.subr.mxu0 0.0
      %413 = vmatpush1.msra.mxu0 0.0
      %414 = vmatprep.subr.mxu0 0.0
      %415 = vmatpush1.msra.mxu0 0.0
      %416 = vmatprep.subr.mxu0 0.0
      %417 = vmatpush1.msra.mxu0 0.0
      %418 = vmatprep.subr.mxu0 0.0
      %419 = vmatpush1.msra.mxu0 0.0
      %420 = vmatprep.subr.mxu0 0.0
      %421 = vmatpush1.msra.mxu0 0.0
      %422 = vmatprep.subr.mxu0 0.0
      %423 = vmatpush1.msra.mxu0 0.0
      %424 = vmatprep.subr.mxu0 0.0
      %425 = vmatpush1.msra.mxu0 0.0
      %426 = vmatprep.subr.mxu0 0.0
      %427 = vmatpush1.msra.mxu0 0.0
      %428 = vmatprep.subr.mxu0 0.0
      %429 = vmatpush1.msra.mxu0 0.0
      %430 = vmatprep.subr.mxu0 0.0
      %431 = vmatpush1.msra.mxu0 0.0
      %432 = vmatprep.subr.mxu0 0.0
      %433 = vmatpush1.msra.mxu0 0.0
      %434 = vmatprep.subr.mxu0 0.0
      %435 = vmatpush1.msra.mxu0 0.0
      %436 = vmatprep.subr.mxu0 0.0
      %437 = vmatpush1.msra.mxu0 0.0
      %438 = vmatprep.subr.mxu0 0.0
      %439 = vmatpush1.msra.mxu0 0.0
      %440 = vmatprep.subr.mxu0 0.0
      %441 = vmatpush1.msra.mxu0 0.0
      %442 = vmatprep.subr.mxu0 0.0
      %443 = vmatpush1.msra.mxu0 0.0
      %444 = vmatprep.subr.mxu0 0.0
      %445 = vmatpush1.msra.mxu0 0.0
      %446 = vmatprep.subr.mxu0 0.0
      %447 = vmatpush1.msra.mxu0 0.0
      %448 = vmatprep.subr.mxu0 0.0
      %449 = vmatpush1.msra.mxu0 0.0
      %450 = vmatprep.subr.mxu0 0.0
      %451 = vmatpush1.msra.mxu0 0.0
      %452 = vmatprep.subr.mxu0 0.0
      %453 = vmatpush1.msra.mxu0 0.0
      %454 = vmatprep.subr.mxu0 0.0
      %455 = vmatpush1.msra.mxu0 0.0
      %456 = vmatprep.subr.mxu0 0.0
      %457 = vmatpush1.msra.mxu0 0.0
      %458 = vmatprep.subr.mxu0 0.0
      %459 = vmatpush1.msra.mxu0 0.0
      %460 = vmatprep.mubr.f32.mxu0 0.0
      %461 = vmatmul.mubr.f32.gmra.mrb[0].mxu0 %v391
      %v462 = vpop.f32.mrb[0].mxu0
      %v463 = vadd.f32 0.0, %v462
      %v464 = vpop.f32.mrb[0].mxu0
      %465 = vmatprep.mubr.f32.mxu0 0.0
      %466 = vmatmul.mubr.f32.gmra.mrb[0].mxu0 %v394
      %v467 = vpop.f32.mrb[0].mxu0
      %v468 = vadd.f32 0.0, %v467
      %v469 = vpop.f32.mrb[0].mxu0
      %470 = vdwg.mxu0
      %s471 = scalar_lea.vmem %s2, 128
      %v472 = vld [vmem:[%s471] sm:$0xff]
      %v473 = vld [vmem:[%s471 + $0x8] sm:$0xff]
      %v474 = vld [vmem:[%s471 + $0x10] sm:$0xff]
      %v475 = vld [vmem:[%s471 + $0x18] sm:$0xff]
      %v476 = vld [vmem:[%s471 + $0x20] sm:$0xff]
      %v477 = vld [vmem:[%s471 + $0x28] sm:$0xff]
      %v478 = vld [vmem:[%s471 + $0x30] sm:$0xff]
      %v479 = vld [vmem:[%s471 + $0x38] sm:$0xff]
      %v480 = vld [vmem:[%s471 + $0x40] sm:$0xff]
      %v481 = vld [vmem:[%s471 + $0x48] sm:$0xff]
      %v482 = vld [vmem:[%s471 + $0x50] sm:$0xff]
      %v483 = vld [vmem:[%s471 + $0x58] sm:$0xff]
      %v484 = vld [vmem:[%s471 + $0x60] sm:$0xff]
      %v485 = vld [vmem:[%s471 + $0x68] sm:$0xff]
      %v486 = vld [vmem:[%s471 + $0x70] sm:$0xff]
      %v487 = vld [vmem:[%s471 + $0x78] sm:$0xff]
      %488 = vmatprep.subr.mxu0 0.0
      %489 = vmatpush1.msra.mxu0 %v472
      %490 = vmatprep.subr.mxu0 0.0
      %491 = vmatpush1.msra.mxu0 %v473
      %492 = vmatprep.subr.mxu0 0.0
      %493 = vmatpush1.msra.mxu0 %v474
      %494 = vmatprep.subr.mxu0 0.0
      %495 = vmatpush1.msra.mxu0 %v475
      %496 = vmatprep.subr.mxu0 0.0
      %497 = vmatpush1.msra.mxu0 %v476
      %498 = vmatprep.subr.mxu0 0.0
      %499 = vmatpush1.msra.mxu0 %v477
      %500 = vmatprep.subr.mxu0 0.0
      %501 = vmatpush1.msra.mxu0 %v478
      %502 = vmatprep.subr.mxu0 0.0
      %503 = vmatpush1.msra.mxu0 %v479
      %504 = vmatprep.subr.mxu0 0.0
      %505 = vmatpush1.msra.mxu0 %v480
      %506 = vmatprep.subr.mxu0 0.0
      %507 = vmatpush1.msra.mxu0 %v481
      %508 = vmatprep.subr.mxu0 0.0
      %509 = vmatpush1.msra.mxu0 %v482
      %510 = vmatprep.subr.mxu0 0.0
      %511 = vmatpush1.msra.mxu0 %v483
      %512 = vmatprep.subr.mxu0 0.0
      %513 = vmatpush1.msra.mxu0 %v484
      %514 = vmatprep.subr.mxu0 0.0
      %515 = vmatpush1.msra.mxu0 %v485
      %516 = vmatprep.subr.mxu0 0.0
      %517 = vmatpush1.msra.mxu0 %v486
      %518 = vmatprep.subr.mxu0 0.0
      %519 = vmatpush1.msra.mxu0 %v487
      %520 = vmatprep.subr.mxu0 0.0
      %521 = vmatpush1.msra.mxu0 0.0
      %522 = vmatprep.subr.mxu0 0.0
      %523 = vmatpush1.msra.mxu0 0.0
      %524 = vmatprep.subr.mxu0 0.0
      %525 = vmatpush1.msra.mxu0 0.0
      %526 = vmatprep.subr.mxu0 0.0
      %527 = vmatpush1.msra.mxu0 0.0
      %528 = vmatprep.subr.mxu0 0.0
      %529 = vmatpush1.msra.mxu0 0.0
      %530 = vmatprep.subr.mxu0 0.0
      %531 = vmatpush1.msra.mxu0 0.0
      %532 = vmatprep.subr.mxu0 0.0
      %533 = vmatpush1.msra.mxu0 0.0
      %534 = vmatprep.subr.mxu0 0.0
      %535 = vmatpush1.msra.mxu0 0.0
      %536 = vmatprep.subr.mxu0 0.0
      %537 = vmatpush1.msra.mxu0 0.0
      %538 = vmatprep.subr.mxu0 0.0
      %539 = vmatpush1.msra.mxu0 0.0
      %540 = vmatprep.subr.mxu0 0.0
      %541 = vmatpush1.msra.mxu0 0.0
      %542 = vmatprep.subr.mxu0 0.0
      %543 = vmatpush1.msra.mxu0 0.0
      %544 = vmatprep.subr.mxu0 0.0
      %545 = vmatpush1.msra.mxu0 0.0
      %546 = vmatprep.subr.mxu0 0.0
      %547 = vmatpush1.msra.mxu0 0.0
      %548 = vmatprep.subr.mxu0 0.0
      %549 = vmatpush1.msra.mxu0 0.0
      %550 = vmatprep.subr.mxu0 0.0
      %551 = vmatpush1.msra.mxu0 0.0
      %552 = vmatprep.mubr.f32.mxu0 0.0
      %553 = vmatmul.mubr.f32.gmra.mrb[0].mxu0 %v463
      %v554 = vpop.f32.mrb[0].mxu0
      %v555 = vadd.f32 0.0, %v554
      %v556 = vpop.f32.mrb[0].mxu0
      %557 = vmatprep.mubr.f32.mxu0 0.0
      %558 = vmatmul.mubr.f32.gmra.mrb[0].mxu0 %v468
      %v559 = vpop.f32.mrb[0].mxu0
      %v560 = vadd.f32 0.0, %v559
      %v561 = vpop.f32.mrb[0].mxu0
      %562 = vdwg.mxu0
      %v563 = vadd.f32 %v385, %v555
      %v564 = vadd.f32 %v386, %v560
      %s565 = scalar_lea.vmem %s1, 32
      %v566 = vld [vmem:[%s565] sm:$0xff]
      %v567 = vld [vmem:[%s565 + $0x8] sm:$0xff]
      %v569 = vsel %vm212, %v566, 0
      %v572 = vsel %vm212, %v567, 0
      %574 = vmatprep.subr.mxu0 0.0
      %575 = vmatpush1.msra.mxu0 %v201
      %576 = vmatprep.subr.mxu0 0.0
      %577 = vmatpush1.msra.mxu0 %v202
      %578 = vmatprep.subr.mxu0 0.0
      %579 = vmatpush1.msra.mxu0 0.0
      %580 = vmatprep.subr.mxu0 0.0
      %581 = vmatpush1.msra.mxu0 0.0
      %582 = vmatprep.subr.mxu0 0.0
      %583 = vmatpush1.msra.mxu0 0.0
      %584 = vmatprep.subr.mxu0 0.0
      %585 = vmatpush1.msra.mxu0 0.0
      %586 = vmatprep.subr.mxu0 0.0
      %587 = vmatpush1.msra.mxu0 0.0
      %588 = vmatprep.subr.mxu0 0.0
      %589 = vmatpush1.msra.mxu0 0.0
      %590 = vmatprep.subr.mxu0 0.0
      %591 = vmatpush1.msra.mxu0 0.0
      %592 = vmatprep.subr.mxu0 0.0
      %593 = vmatpush1.msra.mxu0 0.0
      %594 = vmatprep.subr.mxu0 0.0
      %595 = vmatpush1.msra.mxu0 0.0
      %596 = vmatprep.subr.mxu0 0.0
      %597 = vmatpush1.msra.mxu0 0.0
      %598 = vmatprep.subr.mxu0 0.0
      %599 = vmatpush1.msra.mxu0 0.0
      %600 = vmatprep.subr.mxu0 0.0
      %601 = vmatpush1.msra.mxu0 0.0
      %602 = vmatprep.subr.mxu0 0.0
      %603 = vmatpush1.msra.mxu0 0.0
      %604 = vmatprep.subr.mxu0 0.0
      %605 = vmatpush1.msra.mxu0 0.0
      %606 = vmatprep.subr.mxu0 0.0
      %607 = vmatpush1.msra.mxu0 0.0
      %608 = vmatprep.subr.mxu0 0.0
      %609 = vmatpush1.msra.mxu0 0.0
      %610 = vmatprep.subr.mxu0 0.0
      %611 = vmatpush1.msra.mxu0 0.0
      %612 = vmatprep.subr.mxu0 0.0
      %613 = vmatpush1.msra.mxu0 0.0
      %614 = vmatprep.subr.mxu0 0.0
      %615 = vmatpush1.msra.mxu0 0.0
      %616 = vmatprep.subr.mxu0 0.0
      %617 = vmatpush1.msra.mxu0 0.0
      %618 = vmatprep.subr.mxu0 0.0
      %619 = vmatpush1.msra.mxu0 0.0
      %620 = vmatprep.subr.mxu0 0.0
      %621 = vmatpush1.msra.mxu0 0.0
      %622 = vmatprep.subr.mxu0 0.0
      %623 = vmatpush1.msra.mxu0 0.0
      %624 = vmatprep.subr.mxu0 0.0
      %625 = vmatpush1.msra.mxu0 0.0
      %626 = vmatprep.subr.mxu0 0.0
      %627 = vmatpush1.msra.mxu0 0.0
      %628 = vmatprep.subr.mxu0 0.0
      %629 = vmatpush1.msra.mxu0 0.0
      %630 = vmatprep.subr.mxu0 0.0
      %631 = vmatpush1.msra.mxu0 0.0
      %632 = vmatprep.subr.mxu0 0.0
      %633 = vmatpush1.msra.mxu0 0.0
      %634 = vmatprep.subr.mxu0 0.0
      %635 = vmatpush1.msra.mxu0 0.0
      %636 = vmatprep.subr.mxu0 0.0
      %637 = vmatpush1.msra.mxu0 0.0
      %638 = vmatprep.mubr.f32.mxu0 0.0
      %639 = vmatmul.mubr.f32.gmra.mrb[0].mxu0 %v569
      %v640 = vpop.f32.mrb[0].mxu0
      %v641 = vadd.f32 0.0, %v640
      %v642 = vpop.f32.mrb[0].mxu0
      %643 = vmatprep.mubr.f32.mxu0 0.0
      %644 = vmatmul.mubr.f32.gmra.mrb[0].mxu0 %v572
      %v645 = vpop.f32.mrb[0].mxu0
      %v646 = vadd.f32 0.0, %v645
      %v647 = vpop.f32.mrb[0].mxu0
      %648 = vdwg.mxu0
      %s649 = scalar_lea.vmem %s2, 256
      %v650 = vld [vmem:[%s649] sm:$0xff]
      %v651 = vld [vmem:[%s649 + $0x8] sm:$0xff]
      %v652 = vld [vmem:[%s649 + $0x10] sm:$0xff]
      %v653 = vld [vmem:[%s649 + $0x18] sm:$0xff]
      %v654 = vld [vmem:[%s649 + $0x20] sm:$0xff]
      %v655 = vld [vmem:[%s649 + $0x28] sm:$0xff]
      %v656 = vld [vmem:[%s649 + $0x30] sm:$0xff]
      %v657 = vld [vmem:[%s649 + $0x38] sm:$0xff]
      %v658 = vld [vmem:[%s649 + $0x40] sm:$0xff]
      %v659 = vld [vmem:[%s649 + $0x48] sm:$0xff]
      %v660 = vld [vmem:[%s649 + $0x50] sm:$0xff]
      %v661 = vld [vmem:[%s649 + $0x58] sm:$0xff]
      %v662 = vld [vmem:[%s649 + $0x60] sm:$0xff]
      %v663 = vld [vmem:[%s649 + $0x68] sm:$0xff]
      %v664 = vld [vmem:[%s649 + $0x70] sm:$0xff]
      %v665 = vld [vmem:[%s649 + $0x78] sm:$0xff]
      %666 = vmatprep.subr.mxu0 0.0
      %667 = vmatpush1.msra.mxu0 %v650
      %668 = vmatprep.subr.mxu0 0.0
      %669 = vmatpush1.msra.mxu0 %v651
      %670 = vmatprep.subr.mxu0 0.0
      %671 = vmatpush1.msra.mxu0 %v652
      %672 = vmatprep.subr.mxu0 0.0
      %673 = vmatpush1.msra.mxu0 %v653
      %674 = vmatprep.subr.mxu0 0.0
      %675 = vmatpush1.msra.mxu0 %v654
      %676 = vmatprep.subr.mxu0 0.0
      %677 = vmatpush1.msra.mxu0 %v655
      %678 = vmatprep.subr.mxu0 0.0
      %679 = vmatpush1.msra.mxu0 %v656
      %680 = vmatprep.subr.mxu0 0.0
      %681 = vmatpush1.msra.mxu0 %v657
      %682 = vmatprep.subr.mxu0 0.0
      %683 = vmatpush1.msra.mxu0 %v658
      %684 = vmatprep.subr.mxu0 0.0
      %685 = vmatpush1.msra.mxu0 %v659
      %686 = vmatprep.subr.mxu0 0.0
      %687 = vmatpush1.msra.mxu0 %v660
      %688 = vmatprep.subr.mxu0 0.0
      %689 = vmatpush1.msra.mxu0 %v661
      %690 = vmatprep.subr.mxu0 0.0
      %691 = vmatpush1.msra.mxu0 %v662
      %692 = vmatprep.subr.mxu0 0.0
      %693 = vmatpush1.msra.mxu0 %v663
      %694 = vmatprep.subr.mxu0 0.0
      %695 = vmatpush1.msra.mxu0 %v664
      %696 = vmatprep.subr.mxu0 0.0
      %697 = vmatpush1.msra.mxu0 %v665
      %698 = vmatprep.subr.mxu0 0.0
      %699 = vmatpush1.msra.mxu0 0.0
      %700 = vmatprep.subr.mxu0 0.0
      %701 = vmatpush1.msra.mxu0 0.0
      %702 = vmatprep.subr.mxu0 0.0
      %703 = vmatpush1.msra.mxu0 0.0
      %704 = vmatprep.subr.mxu0 0.0
      %705 = vmatpush1.msra.mxu0 0.0
      %706 = vmatprep.subr.mxu0 0.0
      %707 = vmatpush1.msra.mxu0 0.0
      %708 = vmatprep.subr.mxu0 0.0
      %709 = vmatpush1.msra.mxu0 0.0
      %710 = vmatprep.subr.mxu0 0.0
      %711 = vmatpush1.msra.mxu0 0.0
      %712 = vmatprep.subr.mxu0 0.0
      %713 = vmatpush1.msra.mxu0 0.0
      %714 = vmatprep.subr.mxu0 0.0
      %715 = vmatpush1.msra.mxu0 0.0
      %716 = vmatprep.subr.mxu0 0.0
      %717 = vmatpush1.msra.mxu0 0.0
      %718 = vmatprep.subr.mxu0 0.0
      %719 = vmatpush1.msra.mxu0 0.0
      %720 = vmatprep.subr.mxu0 0.0
      %721 = vmatpush1.msra.mxu0 0.0
      %722 = vmatprep.subr.mxu0 0.0
      %723 = vmatpush1.msra.mxu0 0.0
      %724 = vmatprep.subr.mxu0 0.0
      %725 = vmatpush1.msra.mxu0 0.0
      %726 = vmatprep.subr.mxu0 0.0
      %727 = vmatpush1.msra.mxu0 0.0
      %728 = vmatprep.subr.mxu0 0.0
      %729 = vmatpush1.msra.mxu0 0.0
      %730 = vmatprep.mubr.f32.mxu0 0.0
      %731 = vmatmul.mubr.f32.gmra.mrb[0].mxu0 %v641
      %v732 = vpop.f32.mrb[0].mxu0
      %v733 = vadd.f32 0.0, %v732
      %v734 = vpop.f32.mrb[0].mxu0
      %735 = vmatprep.mubr.f32.mxu0 0.0
      %736 = vmatmul.mubr.f32.gmra.mrb[0].mxu0 %v646
      %v737 = vpop.f32.mrb[0].mxu0
      %v738 = vadd.f32 0.0, %v737
      %v739 = vpop.f32.mrb[0].mxu0
      %740 = vdwg.mxu0
      %v741 = vadd.f32 %v563, %v733
      %v742 = vadd.f32 %v564, %v738
      %v743 = vmax.f32 %v741, 0.0
      %v744 = vmax.f32 %v742, 0.0
      %s745 = scalar_lea.vmem %s3, 1
      %v746 = vld [vmem:[%s745] sm:$0x1]
      %v748 = vlaneseq
      %v749 = vshrl.u32 %v748, 7
      %v750 = vsub.s32 0, %v749
      %v751 = vrot.slane %v746, %v750
      %s753 = scalar_lea.vmem %s1, 48
      %v754 = vld [vmem:[%s753] sm:$0xff]
      %v755 = vld [vmem:[%s753 + $0x8] sm:$0xff]
      %v757 = vsel %vm212, %v754, 0
      %v760 = vsel %vm212, %v755, 0
      %762 = vmatprep.subr.mxu0 0.0
      %763 = vmatpush1.msra.mxu0 %v743
      %764 = vmatprep.subr.mxu0 0.0
      %765 = vmatpush1.msra.mxu0 %v744
      %766 = vmatprep.subr.mxu0 0.0
      %767 = vmatpush1.msra.mxu0 0.0
      %768 = vmatprep.subr.mxu0 0.0
      %769 = vmatpush1.msra.mxu0 0.0
      %770 = vmatprep.subr.mxu0 0.0
      %771 = vmatpush1.msra.mxu0 0.0
      %772 = vmatprep.subr.mxu0 0.0
      %773 = vmatpush1.msra.mxu0 0.0
      %774 = vmatprep.subr.mxu0 0.0
      %775 = vmatpush1.msra.mxu0 0.0
      %776 = vmatprep.subr.mxu0 0.0
      %777 = vmatpush1.msra.mxu0 0.0
      %778 = vmatprep.subr.mxu0 0.0
      %779 = vmatpush1.msra.mxu0 0.0
      %780 = vmatprep.subr.mxu0 0.0
      %781 = vmatpush1.msra.mxu0 0.0
      %782 = vmatprep.subr.mxu0 0.0
      %783 = vmatpush1.msra.mxu0 0.0
      %784 = vmatprep.subr.mxu0 0.0
      %785 = vmatpush1.msra.mxu0 0.0
      %786 = vmatprep.subr.mxu0 0.0
      %787 = vmatpush1.msra.mxu0 0.0
      %788 = vmatprep.subr.mxu0 0.0
      %789 = vmatpush1.msra.mxu0 0.0
      %790 = vmatprep.subr.mxu0 0.0
      %791 = vmatpush1.msra.mxu0 0.0
      %792 = vmatprep.subr.mxu0 0.0
      %793 = vmatpush1.msra.mxu0 0.0
      %794 = vmatprep.subr.mxu0 0.0
      %795 = vmatpush1.msra.mxu0 0.0
      %796 = vmatprep.subr.mxu0 0.0
      %797 = vmatpush1.msra.mxu0 0.0
      %798 = vmatprep.subr.mxu0 0.0
      %799 = vmatpush1.msra.mxu0 0.0
      %800 = vmatprep.subr.mxu0 0.0
      %801 = vmatpush1.msra.mxu0 0.0
      %802 = vmatprep.subr.mxu0 0.0
      %803 = vmatpush1.msra.mxu0 0.0
      %804 = vmatprep.subr.mxu0 0.0
      %805 = vmatpush1.msra.mxu0 0.0
      %806 = vmatprep.subr.mxu0 0.0
      %807 = vmatpush1.msra.mxu0 0.0
      %808 = vmatprep.subr.mxu0 0.0
      %809 = vmatpush1.msra.mxu0 0.0
      %810 = vmatprep.subr.mxu0 0.0
      %811 = vmatpush1.msra.mxu0 0.0
      %812 = vmatprep.subr.mxu0 0.0
      %813 = vmatpush1.msra.mxu0 0.0
      %814 = vmatprep.subr.mxu0 0.0
      %815 = vmatpush1.msra.mxu0 0.0
      %816 = vmatprep.subr.mxu0 0.0
      %817 = vmatpush1.msra.mxu0 0.0
      %818 = vmatprep.subr.mxu0 0.0
      %819 = vmatpush1.msra.mxu0 0.0
      %820 = vmatprep.subr.mxu0 0.0
      %821 = vmatpush1.msra.mxu0 0.0
      %822 = vmatprep.subr.mxu0 0.0
      %823 = vmatpush1.msra.mxu0 0.0
      %824 = vmatprep.subr.mxu0 0.0
      %825 = vmatpush1.msra.mxu0 0.0
      %826 = vmatprep.mubr.f32.mxu0 0.0
      %827 = vmatmul.mubr.f32.gmra.mrb[0].mxu0 %v757
      %v828 = vpop.f32.mrb[0].mxu0
      %v829 = vadd.f32 0.0, %v828
      %v830 = vpop.f32.mrb[0].mxu0
      %831 = vmatprep.mubr.f32.mxu0 0.0
      %832 = vmatmul.mubr.f32.gmra.mrb[0].mxu0 %v760
      %v833 = vpop.f32.mrb[0].mxu0
      %v834 = vadd.f32 0.0, %v833
      %v835 = vpop.f32.mrb[0].mxu0
      %836 = vdwg.mxu0
      %s837 = scalar_lea.vmem %s2, 384
      %v838 = vld [vmem:[%s837] sm:$0xff]
      %v839 = vld [vmem:[%s837 + $0x8] sm:$0xff]
      %v840 = vld [vmem:[%s837 + $0x10] sm:$0xff]
      %v841 = vld [vmem:[%s837 + $0x18] sm:$0xff]
      %v842 = vld [vmem:[%s837 + $0x20] sm:$0xff]
      %v843 = vld [vmem:[%s837 + $0x28] sm:$0xff]
      %v844 = vld [vmem:[%s837 + $0x30] sm:$0xff]
      %v845 = vld [vmem:[%s837 + $0x38] sm:$0xff]
      %v846 = vld [vmem:[%s837 + $0x40] sm:$0xff]
      %v847 = vld [vmem:[%s837 + $0x48] sm:$0xff]
      %v848 = vld [vmem:[%s837 + $0x50] sm:$0xff]
      %v849 = vld [vmem:[%s837 + $0x58] sm:$0xff]
      %v850 = vld [vmem:[%s837 + $0x60] sm:$0xff]
      %v851 = vld [vmem:[%s837 + $0x68] sm:$0xff]
      %v852 = vld [vmem:[%s837 + $0x70] sm:$0xff]
      %v853 = vld [vmem:[%s837 + $0x78] sm:$0xff]
      %854 = vmatprep.subr.mxu0 0.0
      %855 = vmatpush1.msra.mxu0 %v838
      %856 = vmatprep.subr.mxu0 0.0
      %857 = vmatpush1.msra.mxu0 %v839
      %858 = vmatprep.subr.mxu0 0.0
      %859 = vmatpush1.msra.mxu0 %v840
      %860 = vmatprep.subr.mxu0 0.0
      %861 = vmatpush1.msra.mxu0 %v841
      %862 = vmatprep.subr.mxu0 0.0
      %863 = vmatpush1.msra.mxu0 %v842
      %864 = vmatprep.subr.mxu0 0.0
      %865 = vmatpush1.msra.mxu0 %v843
      %866 = vmatprep.subr.mxu0 0.0
      %867 = vmatpush1.msra.mxu0 %v844
      %868 = vmatprep.subr.mxu0 0.0
      %869 = vmatpush1.msra.mxu0 %v845
      %870 = vmatprep.subr.mxu0 0.0
      %871 = vmatpush1.msra.mxu0 %v846
      %872 = vmatprep.subr.mxu0 0.0
      %873 = vmatpush1.msra.mxu0 %v847
      %874 = vmatprep.subr.mxu0 0.0
      %875 = vmatpush1.msra.mxu0 %v848
      %876 = vmatprep.subr.mxu0 0.0
      %877 = vmatpush1.msra.mxu0 %v849
      %878 = vmatprep.subr.mxu0 0.0
      %879 = vmatpush1.msra.mxu0 %v850
      %880 = vmatprep.subr.mxu0 0.0
      %881 = vmatpush1.msra.mxu0 %v851
      %882 = vmatprep.subr.mxu0 0.0
      %883 = vmatpush1.msra.mxu0 %v852
      %884 = vmatprep.subr.mxu0 0.0
      %885 = vmatpush1.msra.mxu0 %v853
      %886 = vmatprep.subr.mxu0 0.0
      %887 = vmatpush1.msra.mxu0 0.0
      %888 = vmatprep.subr.mxu0 0.0
      %889 = vmatpush1.msra.mxu0 0.0
      %890 = vmatprep.subr.mxu0 0.0
      %891 = vmatpush1.msra.mxu0 0.0
      %892 = vmatprep.subr.mxu0 0.0
      %893 = vmatpush1.msra.mxu0 0.0
      %894 = vmatprep.subr.mxu0 0.0
      %895 = vmatpush1.msra.mxu0 0.0
      %896 = vmatprep.subr.mxu0 0.0
      %897 = vmatpush1.msra.mxu0 0.0
      %898 = vmatprep.subr.mxu0 0.0
      %899 = vmatpush1.msra.mxu0 0.0
      %900 = vmatprep.subr.mxu0 0.0
      %901 = vmatpush1.msra.mxu0 0.0
      %902 = vmatprep.subr.mxu0 0.0
      %903 = vmatpush1.msra.mxu0 0.0
      %904 = vmatprep.subr.mxu0 0.0
      %905 = vmatpush1.msra.mxu0 0.0
      %906 = vmatprep.subr.mxu0 0.0
      %907 = vmatpush1.msra.mxu0 0.0
      %908 = vmatprep.subr.mxu0 0.0
      %909 = vmatpush1.msra.mxu0 0.0
      %910 = vmatprep.subr.mxu0 0.0
      %911 = vmatpush1.msra.mxu0 0.0
      %912 = vmatprep.subr.mxu0 0.0
      %913 = vmatpush1.msra.mxu0 0.0
      %914 = vmatprep.subr.mxu0 0.0
      %915 = vmatpush1.msra.mxu0 0.0
      %916 = vmatprep.subr.mxu0 0.0
      %917 = vmatpush1.msra.mxu0 0.0
      %918 = vmatprep.mubr.f32.mxu0 0.0
      %919 = vmatmul.mubr.f32.gmra.mrb[0].mxu0 %v829
      %v920 = vpop.f32.mrb[0].mxu0
      %v921 = vadd.f32 0.0, %v920
      %v922 = vpop.f32.mrb[0].mxu0
      %923 = vmatprep.mubr.f32.mxu0 0.0
      %924 = vmatmul.mubr.f32.gmra.mrb[0].mxu0 %v834
      %v925 = vpop.f32.mrb[0].mxu0
      %v926 = vadd.f32 0.0, %v925
      %v927 = vpop.f32.mrb[0].mxu0
      %928 = vdwg.mxu0
      %v929 = vadd.f32 %v751, %v921
      %v930 = vadd.f32 %v751, %v926
      %s931 = scalar_lea.vmem %s1, 64
      %v932 = vld [vmem:[%s931] sm:$0xff]
      %v933 = vld [vmem:[%s931 + $0x8] sm:$0xff]
      %v935 = vsel %vm212, %v932, 0
      %v938 = vsel %vm212, %v933, 0
      %940 = vmatprep.subr.mxu0 0.0
      %941 = vmatpush1.msra.mxu0 %v743
      %942 = vmatprep.subr.mxu0 0.0
      %943 = vmatpush1.msra.mxu0 %v744
      %944 = vmatprep.subr.mxu0 0.0
      %945 = vmatpush1.msra.mxu0 0.0
      %946 = vmatprep.subr.mxu0 0.0
      %947 = vmatpush1.msra.mxu0 0.0
      %948 = vmatprep.subr.mxu0 0.0
      %949 = vmatpush1.msra.mxu0 0.0
      %950 = vmatprep.subr.mxu0 0.0
      %951 = vmatpush1.msra.mxu0 0.0
      %952 = vmatprep.subr.mxu0 0.0
      %953 = vmatpush1.msra.mxu0 0.0
      %954 = vmatprep.subr.mxu0 0.0
      %955 = vmatpush1.msra.mxu0 0.0
      %956 = vmatprep.subr.mxu0 0.0
      %957 = vmatpush1.msra.mxu0 0.0
      %958 = vmatprep.subr.mxu0 0.0
      %959 = vmatpush1.msra.mxu0 0.0
      %960 = vmatprep.subr.mxu0 0.0
      %961 = vmatpush1.msra.mxu0 0.0
      %962 = vmatprep.subr.mxu0 0.0
      %963 = vmatpush1.msra.mxu0 0.0
      %964 = vmatprep.subr.mxu0 0.0
      %965 = vmatpush1.msra.mxu0 0.0
      %966 = vmatprep.subr.mxu0 0.0
      %967 = vmatpush1.msra.mxu0 0.0
      %968 = vmatprep.subr.mxu0 0.0
      %969 = vmatpush1.msra.mxu0 0.0
      %970 = vmatprep.subr.mxu0 0.0
      %971 = vmatpush1.msra.mxu0 0.0
      %972 = vmatprep.subr.mxu0 0.0
      %973 = vmatpush1.msra.mxu0 0.0
      %974 = vmatprep.subr.mxu0 0.0
      %975 = vmatpush1.msra.mxu0 0.0
      %976 = vmatprep.subr.mxu0 0.0
      %977 = vmatpush1.msra.mxu0 0.0
      %978 = vmatprep.subr.mxu0 0.0
      %979 = vmatpush1.msra.mxu0 0.0
      %980 = vmatprep.subr.mxu0 0.0
      %981 = vmatpush1.msra.mxu0 0.0
      %982 = vmatprep.subr.mxu0 0.0
      %983 = vmatpush1.msra.mxu0 0.0
      %984 = vmatprep.subr.mxu0 0.0
      %985 = vmatpush1.msra.mxu0 0.0
      %986 = vmatprep.subr.mxu0 0.0
      %987 = vmatpush1.msra.mxu0 0.0
      %988 = vmatprep.subr.mxu0 0.0
      %989 = vmatpush1.msra.mxu0 0.0
      %990 = vmatprep.subr.mxu0 0.0
      %991 = vmatpush1.msra.mxu0 0.0
      %992 = vmatprep.subr.mxu0 0.0
      %993 = vmatpush1.msra.mxu0 0.0
      %994 = vmatprep.subr.mxu0 0.0
      %995 = vmatpush1.msra.mxu0 0.0
      %996 = vmatprep.subr.mxu0 0.0
      %997 = vmatpush1.msra.mxu0 0.0
      %998 = vmatprep.subr.mxu0 0.0
      %999 = vmatpush1.msra.mxu0 0.0
      %1000 = vmatprep.subr.mxu0 0.0
      %1001 = vmatpush1.msra.mxu0 0.0
      %1002 = vmatprep.subr.mxu0 0.0
      %1003 = vmatpush1.msra.mxu0 0.0
      %1004 = vmatprep.mubr.f32.mxu0 0.0
      %1005 = vmatmul.mubr.f32.gmra.mrb[0].mxu0 %v935
      %v1006 = vpop.f32.mrb[0].mxu0
      %v1007 = vadd.f32 0.0, %v1006
      %v1008 = vpop.f32.mrb[0].mxu0
      %1009 = vmatprep.mubr.f32.mxu0 0.0
      %1010 = vmatmul.mubr.f32.gmra.mrb[0].mxu0 %v938
      %v1011 = vpop.f32.mrb[0].mxu0
      %v1012 = vadd.f32 0.0, %v1011
      %v1013 = vpop.f32.mrb[0].mxu0
      %1014 = vdwg.mxu0
      %s1015 = scalar_lea.vmem %s2, 512
      %v1016 = vld [vmem:[%s1015] sm:$0xff]
      %v1017 = vld [vmem:[%s1015 + $0x8] sm:$0xff]
      %v1018 = vld [vmem:[%s1015 + $0x10] sm:$0xff]
      %v1019 = vld [vmem:[%s1015 + $0x18] sm:$0xff]
      %v1020 = vld [vmem:[%s1015 + $0x20] sm:$0xff]
      %v1021 = vld [vmem:[%s1015 + $0x28] sm:$0xff]
      %v1022 = vld [vmem:[%s1015 + $0x30] sm:$0xff]
      %v1023 = vld [vmem:[%s1015 + $0x38] sm:$0xff]
      %v1024 = vld [vmem:[%s1015 + $0x40] sm:$0xff]
      %v1025 = vld [vmem:[%s1015 + $0x48] sm:$0xff]
      %v1026 = vld [vmem:[%s1015 + $0x50] sm:$0xff]
      %v1027 = vld [vmem:[%s1015 + $0x58] sm:$0xff]
      %v1028 = vld [vmem:[%s1015 + $0x60] sm:$0xff]
      %v1029 = vld [vmem:[%s1015 + $0x68] sm:$0xff]
      %v1030 = vld [vmem:[%s1015 + $0x70] sm:$0xff]
      %v1031 = vld [vmem:[%s1015 + $0x78] sm:$0xff]
      %1032 = vmatprep.subr.mxu0 0.0
      %1033 = vmatpush1.msra.mxu0 %v1016
      %1034 = vmatprep.subr.mxu0 0.0
      %1035 = vmatpush1.msra.mxu0 %v1017
      %1036 = vmatprep.subr.mxu0 0.0
      %1037 = vmatpush1.msra.mxu0 %v1018
      %1038 = vmatprep.subr.mxu0 0.0
      %1039 = vmatpush1.msra.mxu0 %v1019
      %1040 = vmatprep.subr.mxu0 0.0
      %1041 = vmatpush1.msra.mxu0 %v1020
      %1042 = vmatprep.subr.mxu0 0.0
      %1043 = vmatpush1.msra.mxu0 %v1021
      %1044 = vmatprep.subr.mxu0 0.0
      %1045 = vmatpush1.msra.mxu0 %v1022
      %1046 = vmatprep.subr.mxu0 0.0
      %1047 = vmatpush1.msra.mxu0 %v1023
      %1048 = vmatprep.subr.mxu0 0.0
      %1049 = vmatpush1.msra.mxu0 %v1024
      %1050 = vmatprep.subr.mxu0 0.0
      %1051 = vmatpush1.msra.mxu0 %v1025
      %1052 = vmatprep.subr.mxu0 0.0
      %1053 = vmatpush1.msra.mxu0 %v1026
      %1054 = vmatprep.subr.mxu0 0.0
      %1055 = vmatpush1.msra.mxu0 %v1027
      %1056 = vmatprep.subr.mxu0 0.0
      %1057 = vmatpush1.msra.mxu0 %v1028
      %1058 = vmatprep.subr.mxu0 0.0
      %1059 = vmatpush1.msra.mxu0 %v1029
      %1060 = vmatprep.subr.mxu0 0.0
      %1061 = vmatpush1.msra.mxu0 %v1030
      %1062 = vmatprep.subr.mxu0 0.0
      %1063 = vmatpush1.msra.mxu0 %v1031
      %1064 = vmatprep.subr.mxu0 0.0
      %1065 = vmatpush1.msra.mxu0 0.0
      %1066 = vmatprep.subr.mxu0 0.0
      %1067 = vmatpush1.msra.mxu0 0.0
      %1068 = vmatprep.subr.mxu0 0.0
      %1069 = vmatpush1.msra.mxu0 0.0
      %1070 = vmatprep.subr.mxu0 0.0
      %1071 = vmatpush1.msra.mxu0 0.0
      %1072 = vmatprep.subr.mxu0 0.0
      %1073 = vmatpush1.msra.mxu0 0.0
      %1074 = vmatprep.subr.mxu0 0.0
      %1075 = vmatpush1.msra.mxu0 0.0
      %1076 = vmatprep.subr.mxu0 0.0
      %1077 = vmatpush1.msra.mxu0 0.0
      %1078 = vmatprep.subr.mxu0 0.0
      %1079 = vmatpush1.msra.mxu0 0.0
      %1080 = vmatprep.subr.mxu0 0.0
      %1081 = vmatpush1.msra.mxu0 0.0
      %1082 = vmatprep.subr.mxu0 0.0
      %1083 = vmatpush1.msra.mxu0 0.0
      %1084 = vmatprep.subr.mxu0 0.0
      %1085 = vmatpush1.msra.mxu0 0.0
      %1086 = vmatprep.subr.mxu0 0.0
      %1087 = vmatpush1.msra.mxu0 0.0
      %1088 = vmatprep.subr.mxu0 0.0
      %1089 = vmatpush1.msra.mxu0 0.0
      %1090 = vmatprep.subr.mxu0 0.0
      %1091 = vmatpush1.msra.mxu0 0.0
      %1092 = vmatprep.subr.mxu0 0.0
      %1093 = vmatpush1.msra.mxu0 0.0
      %1094 = vmatprep.subr.mxu0 0.0
      %1095 = vmatpush1.msra.mxu0 0.0
      %1096 = vmatprep.mubr.f32.mxu0 0.0
      %1097 = vmatmul.mubr.f32.gmra.mrb[0].mxu0 %v1007
      %v1098 = vpop.f32.mrb[0].mxu0
      %v1099 = vadd.f32 0.0, %v1098
      %v1100 = vpop.f32.mrb[0].mxu0
      %1101 = vmatprep.mubr.f32.mxu0 0.0
      %1102 = vmatmul.mubr.f32.gmra.mrb[0].mxu0 %v1012
      %v1103 = vpop.f32.mrb[0].mxu0
      %v1104 = vadd.f32 0.0, %v1103
      %v1105 = vpop.f32.mrb[0].mxu0
      %1106 = vdwg.mxu0
      %v1107 = vadd.f32 %v929, %v1099
      %v1108 = vadd.f32 %v930, %v1104
      %s1109 = scalar_lea.vmem %s1, 80
      %v1110 = vld [vmem:[%s1109] sm:$0xff]
      %v1111 = vld [vmem:[%s1109 + $0x8] sm:$0xff]
      %v1113 = vsel %vm212, %v1110, 0
      %v1116 = vsel %vm212, %v1111, 0
      %1118 = vmatprep.subr.mxu0 0.0
      %1119 = vmatpush1.msra.mxu0 %v743
      %1120 = vmatprep.subr.mxu0 0.0
      %1121 = vmatpush1.msra.mxu0 %v744
      %1122 = vmatprep.subr.mxu0 0.0
      %1123 = vmatpush1.msra.mxu0 0.0
      %1124 = vmatprep.subr.mxu0 0.0
      %1125 = vmatpush1.msra.mxu0 0.0
      %1126 = vmatprep.subr.mxu0 0.0
      %1127 = vmatpush1.msra.mxu0 0.0
      %1128 = vmatprep.subr.mxu0 0.0
      %1129 = vmatpush1.msra.mxu0 0.0
      %1130 = vmatprep.subr.mxu0 0.0
      %1131 = vmatpush1.msra.mxu0 0.0
      %1132 = vmatprep.subr.mxu0 0.0
      %1133 = vmatpush1.msra.mxu0 0.0
      %1134 = vmatprep.subr.mxu0 0.0
      %1135 = vmatpush1.msra.mxu0 0.0
      %1136 = vmatprep.subr.mxu0 0.0
      %1137 = vmatpush1.msra.mxu0 0.0
      %1138 = vmatprep.subr.mxu0 0.0
      %1139 = vmatpush1.msra.mxu0 0.0
      %1140 = vmatprep.subr.mxu0 0.0
      %1141 = vmatpush1.msra.mxu0 0.0
      %1142 = vmatprep.subr.mxu0 0.0
      %1143 = vmatpush1.msra.mxu0 0.0
      %1144 = vmatprep.subr.mxu0 0.0
      %1145 = vmatpush1.msra.mxu0 0.0
      %1146 = vmatprep.subr.mxu0 0.0
      %1147 = vmatpush1.msra.mxu0 0.0
      %1148 = vmatprep.subr.mxu0 0.0
      %1149 = vmatpush1.msra.mxu0 0.0
      %1150 = vmatprep.subr.mxu0 0.0
      %1151 = vmatpush1.msra.mxu0 0.0
      %1152 = vmatprep.subr.mxu0 0.0
      %1153 = vmatpush1.msra.mxu0 0.0
      %1154 = vmatprep.subr.mxu0 0.0
      %1155 = vmatpush1.msra.mxu0 0.0
      %1156 = vmatprep.subr.mxu0 0.0
      %1157 = vmatpush1.msra.mxu0 0.0
      %1158 = vmatprep.subr.mxu0 0.0
      %1159 = vmatpush1.msra.mxu0 0.0
      %1160 = vmatprep.subr.mxu0 0.0
      %1161 = vmatpush1.msra.mxu0 0.0
      %1162 = vmatprep.subr.mxu0 0.0
      %1163 = vmatpush1.msra.mxu0 0.0
      %1164 = vmatprep.subr.mxu0 0.0
      %1165 = vmatpush1.msra.mxu0 0.0
      %1166 = vmatprep.subr.mxu0 0.0
      %1167 = vmatpush1.msra.mxu0 0.0
      %1168 = vmatprep.subr.mxu0 0.0
      %1169 = vmatpush1.msra.mxu0 0.0
      %1170 = vmatprep.subr.mxu0 0.0
      %1171 = vmatpush1.msra.mxu0 0.0
      %1172 = vmatprep.subr.mxu0 0.0
      %1173 = vmatpush1.msra.mxu0 0.0
      %1174 = vmatprep.subr.mxu0 0.0
      %1175 = vmatpush1.msra.mxu0 0.0
      %1176 = vmatprep.subr.mxu0 0.0
      %1177 = vmatpush1.msra.mxu0 0.0
      %1178 = vmatprep.subr.mxu0 0.0
      %1179 = vmatpush1.msra.mxu0 0.0
      %1180 = vmatprep.subr.mxu0 0.0
      %1181 = vmatpush1.msra.mxu0 0.0
      %1182 = vmatprep.mubr.f32.mxu0 0.0
      %1183 = vmatmul.mubr.f32.gmra.mrb[0].mxu0 %v1113
      %v1184 = vpop.f32.mrb[0].mxu0
      %v1185 = vadd.f32 0.0, %v1184
      %v1186 = vpop.f32.mrb[0].mxu0
      %1187 = vmatprep.mubr.f32.mxu0 0.0
      %1188 = vmatmul.mubr.f32.gmra.mrb[0].mxu0 %v1116
      %v1189 = vpop.f32.mrb[0].mxu0
      %v1190 = vadd.f32 0.0, %v1189
      %v1191 = vpop.f32.mrb[0].mxu0
      %1192 = vdwg.mxu0
      %s1193 = scalar_lea.vmem %s2, 640
      %v1194 = vld [vmem:[%s1193] sm:$0xff]
      %v1195 = vld [vmem:[%s1193 + $0x8] sm:$0xff]
      %v1196 = vld [vmem:[%s1193 + $0x10] sm:$0xff]
      %v1197 = vld [vmem:[%s1193 + $0x18] sm:$0xff]
      %v1198 = vld [vmem:[%s1193 + $0x20] sm:$0xff]
      %v1199 = vld [vmem:[%s1193 + $0x28] sm:$0xff]
      %v1200 = vld [vmem:[%s1193 + $0x30] sm:$0xff]
      %v1201 = vld [vmem:[%s1193 + $0x38] sm:$0xff]
      %v1202 = vld [vmem:[%s1193 + $0x40] sm:$0xff]
      %v1203 = vld [vmem:[%s1193 + $0x48] sm:$0xff]
      %v1204 = vld [vmem:[%s1193 + $0x50] sm:$0xff]
      %v1205 = vld [vmem:[%s1193 + $0x58] sm:$0xff]
      %v1206 = vld [vmem:[%s1193 + $0x60] sm:$0xff]
      %v1207 = vld [vmem:[%s1193 + $0x68] sm:$0xff]
      %v1208 = vld [vmem:[%s1193 + $0x70] sm:$0xff]
      %v1209 = vld [vmem:[%s1193 + $0x78] sm:$0xff]
      %1210 = vmatprep.subr.mxu0 0.0
      %1211 = vmatpush1.msra.mxu0 %v1194
      %1212 = vmatprep.subr.mxu0 0.0
      %1213 = vmatpush1.msra.mxu0 %v1195
      %1214 = vmatprep.subr.mxu0 0.0
      %1215 = vmatpush1.msra.mxu0 %v1196
      %1216 = vmatprep.subr.mxu0 0.0
      %1217 = vmatpush1.msra.mxu0 %v1197
      %1218 = vmatprep.subr.mxu0 0.0
      %1219 = vmatpush1.msra.mxu0 %v1198
      %1220 = vmatprep.subr.mxu0 0.0
      %1221 = vmatpush1.msra.mxu0 %v1199
      %1222 = vmatprep.subr.mxu0 0.0
      %1223 = vmatpush1.msra.mxu0 %v1200
      %1224 = vmatprep.subr.mxu0 0.0
      %1225 = vmatpush1.msra.mxu0 %v1201
      %1226 = vmatprep.subr.mxu0 0.0
      %1227 = vmatpush1.msra.mxu0 %v1202
      %1228 = vmatprep.subr.mxu0 0.0
      %1229 = vmatpush1.msra.mxu0 %v1203
      %1230 = vmatprep.subr.mxu0 0.0
      %1231 = vmatpush1.msra.mxu0 %v1204
      %1232 = vmatprep.subr.mxu0 0.0
      %1233 = vmatpush1.msra.mxu0 %v1205
      %1234 = vmatprep.subr.mxu0 0.0
      %1235 = vmatpush1.msra.mxu0 %v1206
      %1236 = vmatprep.subr.mxu0 0.0
      %1237 = vmatpush1.msra.mxu0 %v1207
      %1238 = vmatprep.subr.mxu0 0.0
      %1239 = vmatpush1.msra.mxu0 %v1208
      %1240 = vmatprep.subr.mxu0 0.0
      %1241 = vmatpush1.msra.mxu0 %v1209
      %1242 = vmatprep.subr.mxu0 0.0
      %1243 = vmatpush1.msra.mxu0 0.0
      %1244 = vmatprep.subr.mxu0 0.0
      %1245 = vmatpush1.msra.mxu0 0.0
      %1246 = vmatprep.subr.mxu0 0.0
      %1247 = vmatpush1.msra.mxu0 0.0
      %1248 = vmatprep.subr.mxu0 0.0
      %1249 = vmatpush1.msra.mxu0 0.0
      %1250 = vmatprep.subr.mxu0 0.0
      %1251 = vmatpush1.msra.mxu0 0.0
      %1252 = vmatprep.subr.mxu0 0.0
      %1253 = vmatpush1.msra.mxu0 0.0
      %1254 = vmatprep.subr.mxu0 0.0
      %1255 = vmatpush1.msra.mxu0 0.0
      %1256 = vmatprep.subr.mxu0 0.0
      %1257 = vmatpush1.msra.mxu0 0.0
      %1258 = vmatprep.subr.mxu0 0.0
      %1259 = vmatpush1.msra.mxu0 0.0
      %1260 = vmatprep.subr.mxu0 0.0
      %1261 = vmatpush1.msra.mxu0 0.0
      %1262 = vmatprep.subr.mxu0 0.0
      %1263 = vmatpush1.msra.mxu0 0.0
      %1264 = vmatprep.subr.mxu0 0.0
      %1265 = vmatpush1.msra.mxu0 0.0
      %1266 = vmatprep.subr.mxu0 0.0
      %1267 = vmatpush1.msra.mxu0 0.0
      %1268 = vmatprep.subr.mxu0 0.0
      %1269 = vmatpush1.msra.mxu0 0.0
      %1270 = vmatprep.subr.mxu0 0.0
      %1271 = vmatpush1.msra.mxu0 0.0
      %1272 = vmatprep.subr.mxu0 0.0
      %1273 = vmatpush1.msra.mxu0 0.0
      %1274 = vmatprep.mubr.f32.mxu0 0.0
      %1275 = vmatmul.mubr.f32.gmra.mrb[0].mxu0 %v1185
      %v1276 = vpop.f32.mrb[0].mxu0
      %v1277 = vadd.f32 0.0, %v1276
      %v1278 = vpop.f32.mrb[0].mxu0
      %1279 = vmatprep.mubr.f32.mxu0 0.0
      %1280 = vmatmul.mubr.f32.gmra.mrb[0].mxu0 %v1190
      %v1281 = vpop.f32.mrb[0].mxu0
      %v1282 = vadd.f32 0.0, %v1281
      %v1283 = vpop.f32.mrb[0].mxu0
      %1284 = vdwg.mxu0
      %v1285 = vadd.f32 %v1107, %v1277
      %v1286 = vadd.f32 %v1108, %v1282
      %v1287 = vmax.f32 %v1285, 0.0
      %v1288 = vmax.f32 %v1286, 0.0
      %s1289 = scalar_lea.vmem %s3, 2
      %v1290 = vld [vmem:[%s1289] sm:$0x1]
      %v1292 = vlaneseq
      %v1293 = vshrl.u32 %v1292, 7
      %v1294 = vsub.s32 0, %v1293
      %v1295 = vrot.slane %v1290, %v1294
      %s1297 = scalar_lea.vmem %s1, 96
      %v1298 = vld [vmem:[%s1297] sm:$0xff]
      %v1299 = vld [vmem:[%s1297 + $0x8] sm:$0xff]
      %v1301 = vsel %vm212, %v1298, 0
      %v1304 = vsel %vm212, %v1299, 0
      %1306 = vmatprep.subr.mxu0 0.0
      %1307 = vmatpush1.msra.mxu0 %v1287
      %1308 = vmatprep.subr.mxu0 0.0
      %1309 = vmatpush1.msra.mxu0 %v1288
      %1310 = vmatprep.subr.mxu0 0.0
      %1311 = vmatpush1.msra.mxu0 0.0
      %1312 = vmatprep.subr.mxu0 0.0
      %1313 = vmatpush1.msra.mxu0 0.0
      %1314 = vmatprep.subr.mxu0 0.0
      %1315 = vmatpush1.msra.mxu0 0.0
      %1316 = vmatprep.subr.mxu0 0.0
      %1317 = vmatpush1.msra.mxu0 0.0
      %1318 = vmatprep.subr.mxu0 0.0
      %1319 = vmatpush1.msra.mxu0 0.0
      %1320 = vmatprep.subr.mxu0 0.0
      %1321 = vmatpush1.msra.mxu0 0.0
      %1322 = vmatprep.subr.mxu0 0.0
      %1323 = vmatpush1.msra.mxu0 0.0
      %1324 = vmatprep.subr.mxu0 0.0
      %1325 = vmatpush1.msra.mxu0 0.0
      %1326 = vmatprep.subr.mxu0 0.0
      %1327 = vmatpush1.msra.mxu0 0.0
      %1328 = vmatprep.subr.mxu0 0.0
      %1329 = vmatpush1.msra.mxu0 0.0
      %1330 = vmatprep.subr.mxu0 0.0
      %1331 = vmatpush1.msra.mxu0 0.0
      %1332 = vmatprep.subr.mxu0 0.0
      %1333 = vmatpush1.msra.mxu0 0.0
      %1334 = vmatprep.subr.mxu0 0.0
      %1335 = vmatpush1.msra.mxu0 0.0
      %1336 = vmatprep.subr.mxu0 0.0
      %1337 = vmatpush1.msra.mxu0 0.0
      %1338 = vmatprep.subr.mxu0 0.0
      %1339 = vmatpush1.msra.mxu0 0.0
      %1340 = vmatprep.subr.mxu0 0.0
      %1341 = vmatpush1.msra.mxu0 0.0
      %1342 = vmatprep.subr.mxu0 0.0
      %1343 = vmatpush1.msra.mxu0 0.0
      %1344 = vmatprep.subr.mxu0 0.0
      %1345 = vmatpush1.msra.mxu0 0.0
      %1346 = vmatprep.subr.mxu0 0.0
      %1347 = vmatpush1.msra.mxu0 0.0
      %1348 = vmatprep.subr.mxu0 0.0
      %1349 = vmatpush1.msra.mxu0 0.0
      %1350 = vmatprep.subr.mxu0 0.0
      %1351 = vmatpush1.msra.mxu0 0.0
      %1352 = vmatprep.subr.mxu0 0.0
      %1353 = vmatpush1.msra.mxu0 0.0
      %1354 = vmatprep.subr.mxu0 0.0
      %1355 = vmatpush1.msra.mxu0 0.0
      %1356 = vmatprep.subr.mxu0 0.0
      %1357 = vmatpush1.msra.mxu0 0.0
      %1358 = vmatprep.subr.mxu0 0.0
      %1359 = vmatpush1.msra.mxu0 0.0
      %1360 = vmatprep.subr.mxu0 0.0
      %1361 = vmatpush1.msra.mxu0 0.0
      %1362 = vmatprep.subr.mxu0 0.0
      %1363 = vmatpush1.msra.mxu0 0.0
      %1364 = vmatprep.subr.mxu0 0.0
      %1365 = vmatpush1.msra.mxu0 0.0
      %1366 = vmatprep.subr.mxu0 0.0
      %1367 = vmatpush1.msra.mxu0 0.0
      %1368 = vmatprep.subr.mxu0 0.0
      %1369 = vmatpush1.msra.mxu0 0.0
      %1370 = vmatprep.mubr.f32.mxu0 0.0
      %1371 = vmatmul.mubr.f32.gmra.mrb[0].mxu0 %v1301
      %v1372 = vpop.f32.mrb[0].mxu0
      %v1373 = vadd.f32 0.0, %v1372
      %v1374 = vpop.f32.mrb[0].mxu0
      %1375 = vmatprep.mubr.f32.mxu0 0.0
      %1376 = vmatmul.mubr.f32.gmra.mrb[0].mxu0 %v1304
      %v1377 = vpop.f32.mrb[0].mxu0
      %v1378 = vadd.f32 0.0, %v1377
      %v1379 = vpop.f32.mrb[0].mxu0
      %1380 = vdwg.mxu0
      %s1381 = scalar_lea.vmem %s2, 768
      %v1382 = vld [vmem:[%s1381] sm:$0xff]
      %v1383 = vld [vmem:[%s1381 + $0x8] sm:$0xff]
      %v1384 = vld [vmem:[%s1381 + $0x10] sm:$0xff]
      %v1385 = vld [vmem:[%s1381 + $0x18] sm:$0xff]
      %v1386 = vld [vmem:[%s1381 + $0x20] sm:$0xff]
      %v1387 = vld [vmem:[%s1381 + $0x28] sm:$0xff]
      %v1388 = vld [vmem:[%s1381 + $0x30] sm:$0xff]
      %v1389 = vld [vmem:[%s1381 + $0x38] sm:$0xff]
      %v1390 = vld [vmem:[%s1381 + $0x40] sm:$0xff]
      %v1391 = vld [vmem:[%s1381 + $0x48] sm:$0xff]
      %v1392 = vld [vmem:[%s1381 + $0x50] sm:$0xff]
      %v1393 = vld [vmem:[%s1381 + $0x58] sm:$0xff]
      %v1394 = vld [vmem:[%s1381 + $0x60] sm:$0xff]
      %v1395 = vld [vmem:[%s1381 + $0x68] sm:$0xff]
      %v1396 = vld [vmem:[%s1381 + $0x70] sm:$0xff]
      %v1397 = vld [vmem:[%s1381 + $0x78] sm:$0xff]
      %1398 = vmatprep.subr.mxu0 0.0
      %1399 = vmatpush1.msra.mxu0 %v1382
      %1400 = vmatprep.subr.mxu0 0.0
      %1401 = vmatpush1.msra.mxu0 %v1383
      %1402 = vmatprep.subr.mxu0 0.0
      %1403 = vmatpush1.msra.mxu0 %v1384
      %1404 = vmatprep.subr.mxu0 0.0
      %1405 = vmatpush1.msra.mxu0 %v1385
      %1406 = vmatprep.subr.mxu0 0.0
      %1407 = vmatpush1.msra.mxu0 %v1386
      %1408 = vmatprep.subr.mxu0 0.0
      %1409 = vmatpush1.msra.mxu0 %v1387
      %1410 = vmatprep.subr.mxu0 0.0
      %1411 = vmatpush1.msra.mxu0 %v1388
      %1412 = vmatprep.subr.mxu0 0.0
      %1413 = vmatpush1.msra.mxu0 %v1389
      %1414 = vmatprep.subr.mxu0 0.0
      %1415 = vmatpush1.msra.mxu0 %v1390
      %1416 = vmatprep.subr.mxu0 0.0
      %1417 = vmatpush1.msra.mxu0 %v1391
      %1418 = vmatprep.subr.mxu0 0.0
      %1419 = vmatpush1.msra.mxu0 %v1392
      %1420 = vmatprep.subr.mxu0 0.0
      %1421 = vmatpush1.msra.mxu0 %v1393
      %1422 = vmatprep.subr.mxu0 0.0
      %1423 = vmatpush1.msra.mxu0 %v1394
      %1424 = vmatprep.subr.mxu0 0.0
      %1425 = vmatpush1.msra.mxu0 %v1395
      %1426 = vmatprep.subr.mxu0 0.0
      %1427 = vmatpush1.msra.mxu0 %v1396
      %1428 = vmatprep.subr.mxu0 0.0
      %1429 = vmatpush1.msra.mxu0 %v1397
      %1430 = vmatprep.subr.mxu0 0.0
      %1431 = vmatpush1.msra.mxu0 0.0
      %1432 = vmatprep.subr.mxu0 0.0
      %1433 = vmatpush1.msra.mxu0 0.0
      %1434 = vmatprep.subr.mxu0 0.0
      %1435 = vmatpush1.msra.mxu0 0.0
      %1436 = vmatprep.subr.mxu0 0.0
      %1437 = vmatpush1.msra.mxu0 0.0
      %1438 = vmatprep.subr.mxu0 0.0
      %1439 = vmatpush1.msra.mxu0 0.0
      %1440 = vmatprep.subr.mxu0 0.0
      %1441 = vmatpush1.msra.mxu0 0.0
      %1442 = vmatprep.subr.mxu0 0.0
      %1443 = vmatpush1.msra.mxu0 0.0
      %1444 = vmatprep.subr.mxu0 0.0
      %1445 = vmatpush1.msra.mxu0 0.0
      %1446 = vmatprep.subr.mxu0 0.0
      %1447 = vmatpush1.msra.mxu0 0.0
      %1448 = vmatprep.subr.mxu0 0.0
      %1449 = vmatpush1.msra.mxu0 0.0
      %1450 = vmatprep.subr.mxu0 0.0
      %1451 = vmatpush1.msra.mxu0 0.0
      %1452 = vmatprep.subr.mxu0 0.0
      %1453 = vmatpush1.msra.mxu0 0.0
      %1454 = vmatprep.subr.mxu0 0.0
      %1455 = vmatpush1.msra.mxu0 0.0
      %1456 = vmatprep.subr.mxu0 0.0
      %1457 = vmatpush1.msra.mxu0 0.0
      %1458 = vmatprep.subr.mxu0 0.0
      %1459 = vmatpush1.msra.mxu0 0.0
      %1460 = vmatprep.subr.mxu0 0.0
      %1461 = vmatpush1.msra.mxu0 0.0
      %1462 = vmatprep.mubr.f32.mxu0 0.0
      %1463 = vmatmul.mubr.f32.gmra.mrb[0].mxu0 %v1373
      %v1464 = vpop.f32.mrb[0].mxu0
      %v1465 = vadd.f32 0.0, %v1464
      %v1466 = vpop.f32.mrb[0].mxu0
      %1467 = vmatprep.mubr.f32.mxu0 0.0
      %1468 = vmatmul.mubr.f32.gmra.mrb[0].mxu0 %v1378
      %v1469 = vpop.f32.mrb[0].mxu0
      %v1470 = vadd.f32 0.0, %v1469
      %v1471 = vpop.f32.mrb[0].mxu0
      %1472 = vdwg.mxu0
      %v1473 = vadd.f32 %v1295, %v1465
      %v1474 = vadd.f32 %v1295, %v1470
      %s1475 = scalar_lea.vmem %s1, 112
      %v1476 = vld [vmem:[%s1475] sm:$0xff]
      %v1477 = vld [vmem:[%s1475 + $0x8] sm:$0xff]
      %v1479 = vsel %vm212, %v1476, 0
      %v1482 = vsel %vm212, %v1477, 0
      %1484 = vmatprep.subr.mxu0 0.0
      %1485 = vmatpush1.msra.mxu0 %v1287
      %1486 = vmatprep.subr.mxu0 0.0
      %1487 = vmatpush1.msra.mxu0 %v1288
      %1488 = vmatprep.subr.mxu0 0.0
      %1489 = vmatpush1.msra.mxu0 0.0
      %1490 = vmatprep.subr.mxu0 0.0
      %1491 = vmatpush1.msra.mxu0 0.0
      %1492 = vmatprep.subr.mxu0 0.0
      %1493 = vmatpush1.msra.mxu0 0.0
      %1494 = vmatprep.subr.mxu0 0.0
      %1495 = vmatpush1.msra.mxu0 0.0
      %1496 = vmatprep.subr.mxu0 0.0
      %1497 = vmatpush1.msra.mxu0 0.0
      %1498 = vmatprep.subr.mxu0 0.0
      %1499 = vmatpush1.msra.mxu0 0.0
      %1500 = vmatprep.subr.mxu0 0.0
      %1501 = vmatpush1.msra.mxu0 0.0
      %1502 = vmatprep.subr.mxu0 0.0
      %1503 = vmatpush1.msra.mxu0 0.0
      %1504 = vmatprep.subr.mxu0 0.0
      %1505 = vmatpush1.msra.mxu0 0.0
      %1506 = vmatprep.subr.mxu0 0.0
      %1507 = vmatpush1.msra.mxu0 0.0
      %1508 = vmatprep.subr.mxu0 0.0
      %1509 = vmatpush1.msra.mxu0 0.0
      %1510 = vmatprep.subr.mxu0 0.0
      %1511 = vmatpush1.msra.mxu0 0.0
      %1512 = vmatprep.subr.mxu0 0.0
      %1513 = vmatpush1.msra.mxu0 0.0
      %1514 = vmatprep.subr.mxu0 0.0
      %1515 = vmatpush1.msra.mxu0 0.0
      %1516 = vmatprep.subr.mxu0 0.0
      %1517 = vmatpush1.msra.mxu0 0.0
      %1518 = vmatprep.subr.mxu0 0.0
      %1519 = vmatpush1.msra.mxu0 0.0
      %1520 = vmatprep.subr.mxu0 0.0
      %1521 = vmatpush1.msra.mxu0 0.0
      %1522 = vmatprep.subr.mxu0 0.0
      %1523 = vmatpush1.msra.mxu0 0.0
      %1524 = vmatprep.subr.mxu0 0.0
      %1525 = vmatpush1.msra.mxu0 0.0
      %1526 = vmatprep.subr.mxu0 0.0
      %1527 = vmatpush1.msra.mxu0 0.0
      %1528 = vmatprep.subr.mxu0 0.0
      %1529 = vmatpush1.msra.mxu0 0.0
      %1530 = vmatprep.subr.mxu0 0.0
      %1531 = vmatpush1.msra.mxu0 0.0
      %1532 = vmatprep.subr.mxu0 0.0
      %1533 = vmatpush1.msra.mxu0 0.0
      %1534 = vmatprep.subr.mxu0 0.0
      %1535 = vmatpush1.msra.mxu0 0.0
      %1536 = vmatprep.subr.mxu0 0.0
      %1537 = vmatpush1.msra.mxu0 0.0
      %1538 = vmatprep.subr.mxu0 0.0
      %1539 = vmatpush1.msra.mxu0 0.0
      %1540 = vmatprep.subr.mxu0 0.0
      %1541 = vmatpush1.msra.mxu0 0.0
      %1542 = vmatprep.subr.mxu0 0.0
      %1543 = vmatpush1.msra.mxu0 0.0
      %1544 = vmatprep.subr.mxu0 0.0
      %1545 = vmatpush1.msra.mxu0 0.0
      %1546 = vmatprep.subr.mxu0 0.0
      %1547 = vmatpush1.msra.mxu0 0.0
      %1548 = vmatprep.mubr.f32.mxu0 0.0
      %1549 = vmatmul.mubr.f32.gmra.mrb[0].mxu0 %v1479
      %v1550 = vpop.f32.mrb[0].mxu0
      %v1551 = vadd.f32 0.0, %v1550
      %v1552 = vpop.f32.mrb[0].mxu0
      %1553 = vmatprep.mubr.f32.mxu0 0.0
      %1554 = vmatmul.mubr.f32.gmra.mrb[0].mxu0 %v1482
      %v1555 = vpop.f32.mrb[0].mxu0
      %v1556 = vadd.f32 0.0, %v1555
      %v1557 = vpop.f32.mrb[0].mxu0
      %1558 = vdwg.mxu0
      %s1559 = scalar_lea.vmem %s2, 896
      %v1560 = vld [vmem:[%s1559] sm:$0xff]
      %v1561 = vld [vmem:[%s1559 + $0x8] sm:$0xff]
      %v1562 = vld [vmem:[%s1559 + $0x10] sm:$0xff]
      %v1563 = vld [vmem:[%s1559 + $0x18] sm:$0xff]
      %v1564 = vld [vmem:[%s1559 + $0x20] sm:$0xff]
      %v1565 = vld [vmem:[%s1559 + $0x28] sm:$0xff]
      %v1566 = vld [vmem:[%s1559 + $0x30] sm:$0xff]
      %v1567 = vld [vmem:[%s1559 + $0x38] sm:$0xff]
      %v1568 = vld [vmem:[%s1559 + $0x40] sm:$0xff]
      %v1569 = vld [vmem:[%s1559 + $0x48] sm:$0xff]
      %v1570 = vld [vmem:[%s1559 + $0x50] sm:$0xff]
      %v1571 = vld [vmem:[%s1559 + $0x58] sm:$0xff]
      %v1572 = vld [vmem:[%s1559 + $0x60] sm:$0xff]
      %v1573 = vld [vmem:[%s1559 + $0x68] sm:$0xff]
      %v1574 = vld [vmem:[%s1559 + $0x70] sm:$0xff]
      %v1575 = vld [vmem:[%s1559 + $0x78] sm:$0xff]
      %1576 = vmatprep.subr.mxu0 0.0
      %1577 = vmatpush1.msra.mxu0 %v1560
      %1578 = vmatprep.subr.mxu0 0.0
      %1579 = vmatpush1.msra.mxu0 %v1561
      %1580 = vmatprep.subr.mxu0 0.0
      %1581 = vmatpush1.msra.mxu0 %v1562
      %1582 = vmatprep.subr.mxu0 0.0
      %1583 = vmatpush1.msra.mxu0 %v1563
      %1584 = vmatprep.subr.mxu0 0.0
      %1585 = vmatpush1.msra.mxu0 %v1564
      %1586 = vmatprep.subr.mxu0 0.0
      %1587 = vmatpush1.msra.mxu0 %v1565
      %1588 = vmatprep.subr.mxu0 0.0
      %1589 = vmatpush1.msra.mxu0 %v1566
      %1590 = vmatprep.subr.mxu0 0.0
      %1591 = vmatpush1.msra.mxu0 %v1567
      %1592 = vmatprep.subr.mxu0 0.0
      %1593 = vmatpush1.msra.mxu0 %v1568
      %1594 = vmatprep.subr.mxu0 0.0
      %1595 = vmatpush1.msra.mxu0 %v1569
      %1596 = vmatprep.subr.mxu0 0.0
      %1597 = vmatpush1.msra.mxu0 %v1570
      %1598 = vmatprep.subr.mxu0 0.0
      %1599 = vmatpush1.msra.mxu0 %v1571
      %1600 = vmatprep.subr.mxu0 0.0
      %1601 = vmatpush1.msra.mxu0 %v1572
      %1602 = vmatprep.subr.mxu0 0.0
      %1603 = vmatpush1.msra.mxu0 %v1573
      %1604 = vmatprep.subr.mxu0 0.0
      %1605 = vmatpush1.msra.mxu0 %v1574
      %1606 = vmatprep.subr.mxu0 0.0
      %1607 = vmatpush1.msra.mxu0 %v1575
      %1608 = vmatprep.subr.mxu0 0.0
      %1609 = vmatpush1.msra.mxu0 0.0
      %1610 = vmatprep.subr.mxu0 0.0
      %1611 = vmatpush1.msra.mxu0 0.0
      %1612 = vmatprep.subr.mxu0 0.0
      %1613 = vmatpush1.msra.mxu0 0.0
      %1614 = vmatprep.subr.mxu0 0.0
      %1615 = vmatpush1.msra.mxu0 0.0
      %1616 = vmatprep.subr.mxu0 0.0
      %1617 = vmatpush1.msra.mxu0 0.0
      %1618 = vmatprep.subr.mxu0 0.0
      %1619 = vmatpush1.msra.mxu0 0.0
      %1620 = vmatprep.subr.mxu0 0.0
      %1621 = vmatpush1.msra.mxu0 0.0
      %1622 = vmatprep.subr.mxu0 0.0
      %1623 = vmatpush1.msra.mxu0 0.0
      %1624 = vmatprep.subr.mxu0 0.0
      %1625 = vmatpush1.msra.mxu0 0.0
      %1626 = vmatprep.subr.mxu0 0.0
      %1627 = vmatpush1.msra.mxu0 0.0
      %1628 = vmatprep.subr.mxu0 0.0
      %1629 = vmatpush1.msra.mxu0 0.0
      %1630 = vmatprep.subr.mxu0 0.0
      %1631 = vmatpush1.msra.mxu0 0.0
      %1632 = vmatprep.subr.mxu0 0.0
      %1633 = vmatpush1.msra.mxu0 0.0
      %1634 = vmatprep.subr.mxu0 0.0
      %1635 = vmatpush1.msra.mxu0 0.0
      %1636 = vmatprep.subr.mxu0 0.0
      %1637 = vmatpush1.msra.mxu0 0.0
      %1638 = vmatprep.subr.mxu0 0.0
      %1639 = vmatpush1.msra.mxu0 0.0
      %1640 = vmatprep.mubr.f32.mxu0 0.0
      %1641 = vmatmul.mubr.f32.gmra.mrb[0].mxu0 %v1551
      %v1642 = vpop.f32.mrb[0].mxu0
      %v1643 = vadd.f32 0.0, %v1642
      %v1644 = vpop.f32.mrb[0].mxu0
      %1645 = vmatprep.mubr.f32.mxu0 0.0
      %1646 = vmatmul.mubr.f32.gmra.mrb[0].mxu0 %v1556
      %v1647 = vpop.f32.mrb[0].mxu0
      %v1648 = vadd.f32 0.0, %v1647
      %v1649 = vpop.f32.mrb[0].mxu0
      %1650 = vdwg.mxu0
      %v1651 = vadd.f32 %v1473, %v1643
      %v1652 = vadd.f32 %v1474, %v1648
      %s1653 = scalar_lea.vmem %s1, 128
      %v1654 = vld [vmem:[%s1653] sm:$0xff]
      %v1655 = vld [vmem:[%s1653 + $0x8] sm:$0xff]
      %v1657 = vsel %vm212, %v1654, 0
      %v1660 = vsel %vm212, %v1655, 0
      %1662 = vmatprep.subr.mxu0 0.0
      %1663 = vmatpush1.msra.mxu0 %v1287
      %1664 = vmatprep.subr.mxu0 0.0
      %1665 = vmatpush1.msra.mxu0 %v1288
      %1666 = vmatprep.subr.mxu0 0.0
      %1667 = vmatpush1.msra.mxu0 0.0
      %1668 = vmatprep.subr.mxu0 0.0
      %1669 = vmatpush1.msra.mxu0 0.0
      %1670 = vmatprep.subr.mxu0 0.0
      %1671 = vmatpush1.msra.mxu0 0.0
      %1672 = vmatprep.subr.mxu0 0.0
      %1673 = vmatpush1.msra.mxu0 0.0
      %1674 = vmatprep.subr.mxu0 0.0
      %1675 = vmatpush1.msra.mxu0 0.0
      %1676 = vmatprep.subr.mxu0 0.0
      %1677 = vmatpush1.msra.mxu0 0.0
      %1678 = vmatprep.subr.mxu0 0.0
      %1679 = vmatpush1.msra.mxu0 0.0
      %1680 = vmatprep.subr.mxu0 0.0
      %1681 = vmatpush1.msra.mxu0 0.0
      %1682 = vmatprep.subr.mxu0 0.0
      %1683 = vmatpush1.msra.mxu0 0.0
      %1684 = vmatprep.subr.mxu0 0.0
      %1685 = vmatpush1.msra.mxu0 0.0
      %1686 = vmatprep.subr.mxu0 0.0
      %1687 = vmatpush1.msra.mxu0 0.0
      %1688 = vmatprep.subr.mxu0 0.0
      %1689 = vmatpush1.msra.mxu0 0.0
      %1690 = vmatprep.subr.mxu0 0.0
      %1691 = vmatpush1.msra.mxu0 0.0
      %1692 = vmatprep.subr.mxu0 0.0
      %1693 = vmatpush1.msra.mxu0 0.0
      %1694 = vmatprep.subr.mxu0 0.0
      %1695 = vmatpush1.msra.mxu0 0.0
      %1696 = vmatprep.subr.mxu0 0.0
      %1697 = vmatpush1.msra.mxu0 0.0
      %1698 = vmatprep.subr.mxu0 0.0
      %1699 = vmatpush1.msra.mxu0 0.0
      %1700 = vmatprep.subr.mxu0 0.0
      %1701 = vmatpush1.msra.mxu0 0.0
      %1702 = vmatprep.subr.mxu0 0.0
      %1703 = vmatpush1.msra.mxu0 0.0
      %1704 = vmatprep.subr.mxu0 0.0
      %1705 = vmatpush1.msra.mxu0 0.0
      %1706 = vmatprep.subr.mxu0 0.0
      %1707 = vmatpush1.msra.mxu0 0.0
      %1708 = vmatprep.subr.mxu0 0.0
      %1709 = vmatpush1.msra.mxu0 0.0
      %1710 = vmatprep.subr.mxu0 0.0
      %1711 = vmatpush1.msra.mxu0 0.0
      %1712 = vmatprep.subr.mxu0 0.0
      %1713 = vmatpush1.msra.mxu0 0.0
      %1714 = vmatprep.subr.mxu0 0.0
      %1715 = vmatpush1.msra.mxu0 0.0
      %1716 = vmatprep.subr.mxu0 0.0
      %1717 = vmatpush1.msra.mxu0 0.0
      %1718 = vmatprep.subr.mxu0 0.0
      %1719 = vmatpush1.msra.mxu0 0.0
      %1720 = vmatprep.subr.mxu0 0.0
      %1721 = vmatpush1.msra.mxu0 0.0
      %1722 = vmatprep.subr.mxu0 0.0
      %1723 = vmatpush1.msra.mxu0 0.0
      %1724 = vmatprep.subr.mxu0 0.0
      %1725 = vmatpush1.msra.mxu0 0.0
      %1726 = vmatprep.mubr.f32.mxu0 0.0
      %1727 = vmatmul.mubr.f32.gmra.mrb[0].mxu0 %v1657
      %v1728 = vpop.f32.mrb[0].mxu0
      %v1729 = vadd.f32 0.0, %v1728
      %v1730 = vpop.f32.mrb[0].mxu0
      %1731 = vmatprep.mubr.f32.mxu0 0.0
      %1732 = vmatmul.mubr.f32.gmra.mrb[0].mxu0 %v1660
      %v1733 = vpop.f32.mrb[0].mxu0
      %v1734 = vadd.f32 0.0, %v1733
      %v1735 = vpop.f32.mrb[0].mxu0
      %1736 = vdwg.mxu0
      %s1737 = scalar_lea.vmem %s2, 1024
      %v1738 = vld [vmem:[%s1737] sm:$0xff]
      %v1739 = vld [vmem:[%s1737 + $0x8] sm:$0xff]
      %v1740 = vld [vmem:[%s1737 + $0x10] sm:$0xff]
      %v1741 = vld [vmem:[%s1737 + $0x18] sm:$0xff]
      %v1742 = vld [vmem:[%s1737 + $0x20] sm:$0xff]
      %v1743 = vld [vmem:[%s1737 + $0x28] sm:$0xff]
      %v1744 = vld [vmem:[%s1737 + $0x30] sm:$0xff]
      %v1745 = vld [vmem:[%s1737 + $0x38] sm:$0xff]
      %v1746 = vld [vmem:[%s1737 + $0x40] sm:$0xff]
      %v1747 = vld [vmem:[%s1737 + $0x48] sm:$0xff]
      %v1748 = vld [vmem:[%s1737 + $0x50] sm:$0xff]
      %v1749 = vld [vmem:[%s1737 + $0x58] sm:$0xff]
      %v1750 = vld [vmem:[%s1737 + $0x60] sm:$0xff]
      %v1751 = vld [vmem:[%s1737 + $0x68] sm:$0xff]
      %v1752 = vld [vmem:[%s1737 + $0x70] sm:$0xff]
      %v1753 = vld [vmem:[%s1737 + $0x78] sm:$0xff]
      %1754 = vmatprep.subr.mxu0 0.0
      %1755 = vmatpush1.msra.mxu0 %v1738
      %1756 = vmatprep.subr.mxu0 0.0
      %1757 = vmatpush1.msra.mxu0 %v1739
      %1758 = vmatprep.subr.mxu0 0.0
      %1759 = vmatpush1.msra.mxu0 %v1740
      %1760 = vmatprep.subr.mxu0 0.0
      %1761 = vmatpush1.msra.mxu0 %v1741
      %1762 = vmatprep.subr.mxu0 0.0
      %1763 = vmatpush1.msra.mxu0 %v1742
      %1764 = vmatprep.subr.mxu0 0.0
      %1765 = vmatpush1.msra.mxu0 %v1743
      %1766 = vmatprep.subr.mxu0 0.0
      %1767 = vmatpush1.msra.mxu0 %v1744
      %1768 = vmatprep.subr.mxu0 0.0
      %1769 = vmatpush1.msra.mxu0 %v1745
      %1770 = vmatprep.subr.mxu0 0.0
      %1771 = vmatpush1.msra.mxu0 %v1746
      %1772 = vmatprep.subr.mxu0 0.0
      %1773 = vmatpush1.msra.mxu0 %v1747
      %1774 = vmatprep.subr.mxu0 0.0
      %1775 = vmatpush1.msra.mxu0 %v1748
      %1776 = vmatprep.subr.mxu0 0.0
      %1777 = vmatpush1.msra.mxu0 %v1749
      %1778 = vmatprep.subr.mxu0 0.0
      %1779 = vmatpush1.msra.mxu0 %v1750
      %1780 = vmatprep.subr.mxu0 0.0
      %1781 = vmatpush1.msra.mxu0 %v1751
      %1782 = vmatprep.subr.mxu0 0.0
      %1783 = vmatpush1.msra.mxu0 %v1752
      %1784 = vmatprep.subr.mxu0 0.0
      %1785 = vmatpush1.msra.mxu0 %v1753
      %1786 = vmatprep.subr.mxu0 0.0
      %1787 = vmatpush1.msra.mxu0 0.0
      %1788 = vmatprep.subr.mxu0 0.0
      %1789 = vmatpush1.msra.mxu0 0.0
      %1790 = vmatprep.subr.mxu0 0.0
      %1791 = vmatpush1.msra.mxu0 0.0
      %1792 = vmatprep.subr.mxu0 0.0
      %1793 = vmatpush1.msra.mxu0 0.0
      %1794 = vmatprep.subr.mxu0 0.0
      %1795 = vmatpush1.msra.mxu0 0.0
      %1796 = vmatprep.subr.mxu0 0.0
      %1797 = vmatpush1.msra.mxu0 0.0
      %1798 = vmatprep.subr.mxu0 0.0
      %1799 = vmatpush1.msra.mxu0 0.0
      %1800 = vmatprep.subr.mxu0 0.0
      %1801 = vmatpush1.msra.mxu0 0.0
      %1802 = vmatprep.subr.mxu0 0.0
      %1803 = vmatpush1.msra.mxu0 0.0
      %1804 = vmatprep.subr.mxu0 0.0
      %1805 = vmatpush1.msra.mxu0 0.0
      %1806 = vmatprep.subr.mxu0 0.0
      %1807 = vmatpush1.msra.mxu0 0.0
      %1808 = vmatprep.subr.mxu0 0.0
      %1809 = vmatpush1.msra.mxu0 0.0
      %1810 = vmatprep.subr.mxu0 0.0
      %1811 = vmatpush1.msra.mxu0 0.0
      %1812 = vmatprep.subr.mxu0 0.0
      %1813 = vmatpush1.msra.mxu0 0.0
      %1814 = vmatprep.subr.mxu0 0.0
      %1815 = vmatpush1.msra.mxu0 0.0
      %1816 = vmatprep.subr.mxu0 0.0
      %1817 = vmatpush1.msra.mxu0 0.0
      %1818 = vmatprep.mubr.f32.mxu0 0.0
      %1819 = vmatmul.mubr.f32.gmra.mrb[0].mxu0 %v1729
      %v1820 = vpop.f32.mrb[0].mxu0
      %v1821 = vadd.f32 0.0, %v1820
      %v1822 = vpop.f32.mrb[0].mxu0
      %1823 = vmatprep.mubr.f32.mxu0 0.0
      %1824 = vmatmul.mubr.f32.gmra.mrb[0].mxu0 %v1734
      %v1825 = vpop.f32.mrb[0].mxu0
      %v1826 = vadd.f32 0.0, %v1825
      %v1827 = vpop.f32.mrb[0].mxu0
      %1828 = vdwg.mxu0
      %v1829 = vadd.f32 %v1651, %v1821
      %v1830 = vadd.f32 %v1652, %v1826
      %v1831 = vmax.f32 %v1829, 0.0
      %v1832 = vmax.f32 %v1830, 0.0
      %s1833 = scalar_lea.vmem %s3, 3
      %v1834 = vld [vmem:[%s1833] sm:$0x1]
      %v1836 = vlaneseq
      %v1837 = vshrl.u32 %v1836, 7
      %v1838 = vsub.s32 0, %v1837
      %v1839 = vrot.slane %v1834, %v1838
      %s1841 = scalar_lea.vmem %s1, 144
      %v1842 = vld [vmem:[%s1841] sm:$0xff]
      %v1843 = vld [vmem:[%s1841 + $0x8] sm:$0xff]
      %v1845 = vsel %vm212, %v1842, 0
      %v1848 = vsel %vm212, %v1843, 0
      %1850 = vmatprep.subr.mxu0 0.0
      %1851 = vmatpush1.msra.mxu0 %v1831
      %1852 = vmatprep.subr.mxu0 0.0
      %1853 = vmatpush1.msra.mxu0 %v1832
      %1854 = vmatprep.subr.mxu0 0.0
      %1855 = vmatpush1.msra.mxu0 0.0
      %1856 = vmatprep.subr.mxu0 0.0
      %1857 = vmatpush1.msra.mxu0 0.0
      %1858 = vmatprep.subr.mxu0 0.0
      %1859 = vmatpush1.msra.mxu0 0.0
      %1860 = vmatprep.subr.mxu0 0.0
      %1861 = vmatpush1.msra.mxu0 0.0
      %1862 = vmatprep.subr.mxu0 0.0
      %1863 = vmatpush1.msra.mxu0 0.0
      %1864 = vmatprep.subr.mxu0 0.0
      %1865 = vmatpush1.msra.mxu0 0.0
      %1866 = vmatprep.subr.mxu0 0.0
      %1867 = vmatpush1.msra.mxu0 0.0
      %1868 = vmatprep.subr.mxu0 0.0
      %1869 = vmatpush1.msra.mxu0 0.0
      %1870 = vmatprep.subr.mxu0 0.0
      %1871 = vmatpush1.msra.mxu0 0.0
      %1872 = vmatprep.subr.mxu0 0.0
      %1873 = vmatpush1.msra.mxu0 0.0
      %1874 = vmatprep.subr.mxu0 0.0
      %1875 = vmatpush1.msra.mxu0 0.0
      %1876 = vmatprep.subr.mxu0 0.0
      %1877 = vmatpush1.msra.mxu0 0.0
      %1878 = vmatprep.subr.mxu0 0.0
      %1879 = vmatpush1.msra.mxu0 0.0
      %1880 = vmatprep.subr.mxu0 0.0
      %1881 = vmatpush1.msra.mxu0 0.0
      %1882 = vmatprep.subr.mxu0 0.0
      %1883 = vmatpush1.msra.mxu0 0.0
      %1884 = vmatprep.subr.mxu0 0.0
      %1885 = vmatpush1.msra.mxu0 0.0
      %1886 = vmatprep.subr.mxu0 0.0
      %1887 = vmatpush1.msra.mxu0 0.0
      %1888 = vmatprep.subr.mxu0 0.0
      %1889 = vmatpush1.msra.mxu0 0.0
      %1890 = vmatprep.subr.mxu0 0.0
      %1891 = vmatpush1.msra.mxu0 0.0
      %1892 = vmatprep.subr.mxu0 0.0
      %1893 = vmatpush1.msra.mxu0 0.0
      %1894 = vmatprep.subr.mxu0 0.0
      %1895 = vmatpush1.msra.mxu0 0.0
      %1896 = vmatprep.subr.mxu0 0.0
      %1897 = vmatpush1.msra.mxu0 0.0
      %1898 = vmatprep.subr.mxu0 0.0
      %1899 = vmatpush1.msra.mxu0 0.0
      %1900 = vmatprep.subr.mxu0 0.0
      %1901 = vmatpush1.msra.mxu0 0.0
      %1902 = vmatprep.subr.mxu0 0.0
      %1903 = vmatpush1.msra.mxu0 0.0
      %1904 = vmatprep.subr.mxu0 0.0
      %1905 = vmatpush1.msra.mxu0 0.0
      %1906 = vmatprep.subr.mxu0 0.0
      %1907 = vmatpush1.msra.mxu0 0.0
      %1908 = vmatprep.subr.mxu0 0.0
      %1909 = vmatpush1.msra.mxu0 0.0
      %1910 = vmatprep.subr.mxu0 0.0
      %1911 = vmatpush1.msra.mxu0 0.0
      %1912 = vmatprep.subr.mxu0 0.0
      %1913 = vmatpush1.msra.mxu0 0.0
      %1914 = vmatprep.mubr.f32.mxu0 0.0
      %1915 = vmatmul.mubr.f32.gmra.mrb[0].mxu0 %v1845
      %v1916 = vpop.f32.mrb[0].mxu0
      %v1917 = vadd.f32 0.0, %v1916
      %v1918 = vpop.f32.mrb[0].mxu0
      %1919 = vmatprep.mubr.f32.mxu0 0.0
      %1920 = vmatmul.mubr.f32.gmra.mrb[0].mxu0 %v1848
      %v1921 = vpop.f32.mrb[0].mxu0
      %v1922 = vadd.f32 0.0, %v1921
      %v1923 = vpop.f32.mrb[0].mxu0
      %1924 = vdwg.mxu0
      %s1925 = scalar_lea.vmem %s2, 1152
      %v1926 = vld [vmem:[%s1925] sm:$0xff]
      %v1927 = vld [vmem:[%s1925 + $0x8] sm:$0xff]
      %v1928 = vld [vmem:[%s1925 + $0x10] sm:$0xff]
      %v1929 = vld [vmem:[%s1925 + $0x18] sm:$0xff]
      %v1930 = vld [vmem:[%s1925 + $0x20] sm:$0xff]
      %v1931 = vld [vmem:[%s1925 + $0x28] sm:$0xff]
      %v1932 = vld [vmem:[%s1925 + $0x30] sm:$0xff]
      %v1933 = vld [vmem:[%s1925 + $0x38] sm:$0xff]
      %v1934 = vld [vmem:[%s1925 + $0x40] sm:$0xff]
      %v1935 = vld [vmem:[%s1925 + $0x48] sm:$0xff]
      %v1936 = vld [vmem:[%s1925 + $0x50] sm:$0xff]
      %v1937 = vld [vmem:[%s1925 + $0x58] sm:$0xff]
      %v1938 = vld [vmem:[%s1925 + $0x60] sm:$0xff]
      %v1939 = vld [vmem:[%s1925 + $0x68] sm:$0xff]
      %v1940 = vld [vmem:[%s1925 + $0x70] sm:$0xff]
      %v1941 = vld [vmem:[%s1925 + $0x78] sm:$0xff]
      %1942 = vmatprep.subr.mxu0 0.0
      %1943 = vmatpush1.msra.mxu0 %v1926
      %1944 = vmatprep.subr.mxu0 0.0
      %1945 = vmatpush1.msra.mxu0 %v1927
      %1946 = vmatprep.subr.mxu0 0.0
      %1947 = vmatpush1.msra.mxu0 %v1928
      %1948 = vmatprep.subr.mxu0 0.0
      %1949 = vmatpush1.msra.mxu0 %v1929
      %1950 = vmatprep.subr.mxu0 0.0
      %1951 = vmatpush1.msra.mxu0 %v1930
      %1952 = vmatprep.subr.mxu0 0.0
      %1953 = vmatpush1.msra.mxu0 %v1931
      %1954 = vmatprep.subr.mxu0 0.0
      %1955 = vmatpush1.msra.mxu0 %v1932
      %1956 = vmatprep.subr.mxu0 0.0
      %1957 = vmatpush1.msra.mxu0 %v1933
      %1958 = vmatprep.subr.mxu0 0.0
      %1959 = vmatpush1.msra.mxu0 %v1934
      %1960 = vmatprep.subr.mxu0 0.0
      %1961 = vmatpush1.msra.mxu0 %v1935
      %1962 = vmatprep.subr.mxu0 0.0
      %1963 = vmatpush1.msra.mxu0 %v1936
      %1964 = vmatprep.subr.mxu0 0.0
      %1965 = vmatpush1.msra.mxu0 %v1937
      %1966 = vmatprep.subr.mxu0 0.0
      %1967 = vmatpush1.msra.mxu0 %v1938
      %1968 = vmatprep.subr.mxu0 0.0
      %1969 = vmatpush1.msra.mxu0 %v1939
      %1970 = vmatprep.subr.mxu0 0.0
      %1971 = vmatpush1.msra.mxu0 %v1940
      %1972 = vmatprep.subr.mxu0 0.0
      %1973 = vmatpush1.msra.mxu0 %v1941
      %1974 = vmatprep.subr.mxu0 0.0
      %1975 = vmatpush1.msra.mxu0 0.0
      %1976 = vmatprep.subr.mxu0 0.0
      %1977 = vmatpush1.msra.mxu0 0.0
      %1978 = vmatprep.subr.mxu0 0.0
      %1979 = vmatpush1.msra.mxu0 0.0
      %1980 = vmatprep.subr.mxu0 0.0
      %1981 = vmatpush1.msra.mxu0 0.0
      %1982 = vmatprep.subr.mxu0 0.0
      %1983 = vmatpush1.msra.mxu0 0.0
      %1984 = vmatprep.subr.mxu0 0.0
      %1985 = vmatpush1.msra.mxu0 0.0
      %1986 = vmatprep.subr.mxu0 0.0
      %1987 = vmatpush1.msra.mxu0 0.0
      %1988 = vmatprep.subr.mxu0 0.0
      %1989 = vmatpush1.msra.mxu0 0.0
      %1990 = vmatprep.subr.mxu0 0.0
      %1991 = vmatpush1.msra.mxu0 0.0
      %1992 = vmatprep.subr.mxu0 0.0
      %1993 = vmatpush1.msra.mxu0 0.0
      %1994 = vmatprep.subr.mxu0 0.0
      %1995 = vmatpush1.msra.mxu0 0.0
      %1996 = vmatprep.subr.mxu0 0.0
      %1997 = vmatpush1.msra.mxu0 0.0
      %1998 = vmatprep.subr.mxu0 0.0
      %1999 = vmatpush1.msra.mxu0 0.0
      %2000 = vmatprep.subr.mxu0 0.0
      %2001 = vmatpush1.msra.mxu0 0.0
      %2002 = vmatprep.subr.mxu0 0.0
      %2003 = vmatpush1.msra.mxu0 0.0
      %2004 = vmatprep.subr.mxu0 0.0
      %2005 = vmatpush1.msra.mxu0 0.0
      %2006 = vmatprep.mubr.f32.mxu0 0.0
      %2007 = vmatmul.mubr.f32.gmra.mrb[0].mxu0 %v1917
      %v2008 = vpop.f32.mrb[0].mxu0
      %v2009 = vadd.f32 0.0, %v2008
      %v2010 = vpop.f32.mrb[0].mxu0
      %2011 = vmatprep.mubr.f32.mxu0 0.0
      %2012 = vmatmul.mubr.f32.gmra.mrb[0].mxu0 %v1922
      %v2013 = vpop.f32.mrb[0].mxu0
      %v2014 = vadd.f32 0.0, %v2013
      %v2015 = vpop.f32.mrb[0].mxu0
      %2016 = vdwg.mxu0
      %v2017 = vadd.f32 %v1839, %v2009
      %v2018 = vadd.f32 %v1839, %v2014
      %s2019 = scalar_lea.vmem %s1, 160
      %v2020 = vld [vmem:[%s2019] sm:$0xff]
      %v2021 = vld [vmem:[%s2019 + $0x8] sm:$0xff]
      %v2023 = vsel %vm212, %v2020, 0
      %v2026 = vsel %vm212, %v2021, 0
      %2028 = vmatprep.subr.mxu0 0.0
      %2029 = vmatpush1.msra.mxu0 %v1831
      %2030 = vmatprep.subr.mxu0 0.0
      %2031 = vmatpush1.msra.mxu0 %v1832
      %2032 = vmatprep.subr.mxu0 0.0
      %2033 = vmatpush1.msra.mxu0 0.0
      %2034 = vmatprep.subr.mxu0 0.0
      %2035 = vmatpush1.msra.mxu0 0.0
      %2036 = vmatprep.subr.mxu0 0.0
      %2037 = vmatpush1.msra.mxu0 0.0
      %2038 = vmatprep.subr.mxu0 0.0
      %2039 = vmatpush1.msra.mxu0 0.0
      %2040 = vmatprep.subr.mxu0 0.0
      %2041 = vmatpush1.msra.mxu0 0.0
      %2042 = vmatprep.subr.mxu0 0.0
      %2043 = vmatpush1.msra.mxu0 0.0
      %2044 = vmatprep.subr.mxu0 0.0
      %2045 = vmatpush1.msra.mxu0 0.0
      %2046 = vmatprep.subr.mxu0 0.0
      %2047 = vmatpush1.msra.mxu0 0.0
      %2048 = vmatprep.subr.mxu0 0.0
      %2049 = vmatpush1.msra.mxu0 0.0
      %2050 = vmatprep.subr.mxu0 0.0
      %2051 = vmatpush1.msra.mxu0 0.0
      %2052 = vmatprep.subr.mxu0 0.0
      %2053 = vmatpush1.msra.mxu0 0.0
      %2054 = vmatprep.subr.mxu0 0.0
      %2055 = vmatpush1.msra.mxu0 0.0
      %2056 = vmatprep.subr.mxu0 0.0
      %2057 = vmatpush1.msra.mxu0 0.0
      %2058 = vmatprep.subr.mxu0 0.0
      %2059 = vmatpush1.msra.mxu0 0.0
      %2060 = vmatprep.subr.mxu0 0.0
      %2061 = vmatpush1.msra.mxu0 0.0
      %2062 = vmatprep.subr.mxu0 0.0
      %2063 = vmatpush1.msra.mxu0 0.0
      %2064 = vmatprep.subr.mxu0 0.0
      %2065 = vmatpush1.msra.mxu0 0.0
      %2066 = vmatprep.subr.mxu0 0.0
      %2067 = vmatpush1.msra.mxu0 0.0
      %2068 = vmatprep.subr.mxu0 0.0
      %2069 = vmatpush1.msra.mxu0 0.0
      %2070 = vmatprep.subr.mxu0 0.0
      %2071 = vmatpush1.msra.mxu0 0.0
      %2072 = vmatprep.subr.mxu0 0.0
      %2073 = vmatpush1.msra.mxu0 0.0
      %2074 = vmatprep.subr.mxu0 0.0
      %2075 = vmatpush1.msra.mxu0 0.0
      %2076 = vmatprep.subr.mxu0 0.0
      %2077 = vmatpush1.msra.mxu0 0.0
      %2078 = vmatprep.subr.mxu0 0.0
      %2079 = vmatpush1.msra.mxu0 0.0
      %2080 = vmatprep.subr.mxu0 0.0
      %2081 = vmatpush1.msra.mxu0 0.0
      %2082 = vmatprep.subr.mxu0 0.0
      %2083 = vmatpush1.msra.mxu0 0.0
      %2084 = vmatprep.subr.mxu0 0.0
      %2085 = vmatpush1.msra.mxu0 0.0
      %2086 = vmatprep.subr.mxu0 0.0
      %2087 = vmatpush1.msra.mxu0 0.0
      %2088 = vmatprep.subr.mxu0 0.0
      %2089 = vmatpush1.msra.mxu0 0.0
      %2090 = vmatprep.subr.mxu0 0.0
      %2091 = vmatpush1.msra.mxu0 0.0
      %2092 = vmatprep.mubr.f32.mxu0 0.0
      %2093 = vmatmul.mubr.f32.gmra.mrb[0].mxu0 %v2023
      %v2094 = vpop.f32.mrb[0].mxu0
      %v2095 = vadd.f32 0.0, %v2094
      %v2096 = vpop.f32.mrb[0].mxu0
      %2097 = vmatprep.mubr.f32.mxu0 0.0
      %2098 = vmatmul.mubr.f32.gmra.mrb[0].mxu0 %v2026
      %v2099 = vpop.f32.mrb[0].mxu0
      %v2100 = vadd.f32 0.0, %v2099
      %v2101 = vpop.f32.mrb[0].mxu0
      %2102 = vdwg.mxu0
      %s2103 = scalar_lea.vmem %s2, 1280
      %v2104 = vld [vmem:[%s2103] sm:$0xff]
      %v2105 = vld [vmem:[%s2103 + $0x8] sm:$0xff]
      %v2106 = vld [vmem:[%s2103 + $0x10] sm:$0xff]
      %v2107 = vld [vmem:[%s2103 + $0x18] sm:$0xff]
      %v2108 = vld [vmem:[%s2103 + $0x20] sm:$0xff]
      %v2109 = vld [vmem:[%s2103 + $0x28] sm:$0xff]
      %v2110 = vld [vmem:[%s2103 + $0x30] sm:$0xff]
      %v2111 = vld [vmem:[%s2103 + $0x38] sm:$0xff]
      %v2112 = vld [vmem:[%s2103 + $0x40] sm:$0xff]
      %v2113 = vld [vmem:[%s2103 + $0x48] sm:$0xff]
      %v2114 = vld [vmem:[%s2103 + $0x50] sm:$0xff]
      %v2115 = vld [vmem:[%s2103 + $0x58] sm:$0xff]
      %v2116 = vld [vmem:[%s2103 + $0x60] sm:$0xff]
      %v2117 = vld [vmem:[%s2103 + $0x68] sm:$0xff]
      %v2118 = vld [vmem:[%s2103 + $0x70] sm:$0xff]
      %v2119 = vld [vmem:[%s2103 + $0x78] sm:$0xff]
      %2120 = vmatprep.subr.mxu0 0.0
      %2121 = vmatpush1.msra.mxu0 %v2104
      %2122 = vmatprep.subr.mxu0 0.0
      %2123 = vmatpush1.msra.mxu0 %v2105
      %2124 = vmatprep.subr.mxu0 0.0
      %2125 = vmatpush1.msra.mxu0 %v2106
      %2126 = vmatprep.subr.mxu0 0.0
      %2127 = vmatpush1.msra.mxu0 %v2107
      %2128 = vmatprep.subr.mxu0 0.0
      %2129 = vmatpush1.msra.mxu0 %v2108
      %2130 = vmatprep.subr.mxu0 0.0
      %2131 = vmatpush1.msra.mxu0 %v2109
      %2132 = vmatprep.subr.mxu0 0.0
      %2133 = vmatpush1.msra.mxu0 %v2110
      %2134 = vmatprep.subr.mxu0 0.0
      %2135 = vmatpush1.msra.mxu0 %v2111
      %2136 = vmatprep.subr.mxu0 0.0
      %2137 = vmatpush1.msra.mxu0 %v2112
      %2138 = vmatprep.subr.mxu0 0.0
      %2139 = vmatpush1.msra.mxu0 %v2113
      %2140 = vmatprep.subr.mxu0 0.0
      %2141 = vmatpush1.msra.mxu0 %v2114
      %2142 = vmatprep.subr.mxu0 0.0
      %2143 = vmatpush1.msra.mxu0 %v2115
      %2144 = vmatprep.subr.mxu0 0.0
      %2145 = vmatpush1.msra.mxu0 %v2116
      %2146 = vmatprep.subr.mxu0 0.0
      %2147 = vmatpush1.msra.mxu0 %v2117
      %2148 = vmatprep.subr.mxu0 0.0
      %2149 = vmatpush1.msra.mxu0 %v2118
      %2150 = vmatprep.subr.mxu0 0.0
      %2151 = vmatpush1.msra.mxu0 %v2119
      %2152 = vmatprep.subr.mxu0 0.0
      %2153 = vmatpush1.msra.mxu0 0.0
      %2154 = vmatprep.subr.mxu0 0.0
      %2155 = vmatpush1.msra.mxu0 0.0
      %2156 = vmatprep.subr.mxu0 0.0
      %2157 = vmatpush1.msra.mxu0 0.0
      %2158 = vmatprep.subr.mxu0 0.0
      %2159 = vmatpush1.msra.mxu0 0.0
      %2160 = vmatprep.subr.mxu0 0.0
      %2161 = vmatpush1.msra.mxu0 0.0
      %2162 = vmatprep.subr.mxu0 0.0
      %2163 = vmatpush1.msra.mxu0 0.0
      %2164 = vmatprep.subr.mxu0 0.0
      %2165 = vmatpush1.msra.mxu0 0.0
      %2166 = vmatprep.subr.mxu0 0.0
      %2167 = vmatpush1.msra.mxu0 0.0
      %2168 = vmatprep.subr.mxu0 0.0
      %2169 = vmatpush1.msra.mxu0 0.0
      %2170 = vmatprep.subr.mxu0 0.0
      %2171 = vmatpush1.msra.mxu0 0.0
      %2172 = vmatprep.subr.mxu0 0.0
      %2173 = vmatpush1.msra.mxu0 0.0
      %2174 = vmatprep.subr.mxu0 0.0
      %2175 = vmatpush1.msra.mxu0 0.0
      %2176 = vmatprep.subr.mxu0 0.0
      %2177 = vmatpush1.msra.mxu0 0.0
      %2178 = vmatprep.subr.mxu0 0.0
      %2179 = vmatpush1.msra.mxu0 0.0
      %2180 = vmatprep.subr.mxu0 0.0
      %2181 = vmatpush1.msra.mxu0 0.0
      %2182 = vmatprep.subr.mxu0 0.0
      %2183 = vmatpush1.msra.mxu0 0.0
      %2184 = vmatprep.mubr.f32.mxu0 0.0
      %2185 = vmatmul.mubr.f32.gmra.mrb[0].mxu0 %v2095
      %v2186 = vpop.f32.mrb[0].mxu0
      %v2187 = vadd.f32 0.0, %v2186
      %v2188 = vpop.f32.mrb[0].mxu0
      %2189 = vmatprep.mubr.f32.mxu0 0.0
      %2190 = vmatmul.mubr.f32.gmra.mrb[0].mxu0 %v2100
      %v2191 = vpop.f32.mrb[0].mxu0
      %v2192 = vadd.f32 0.0, %v2191
      %v2193 = vpop.f32.mrb[0].mxu0
      %2194 = vdwg.mxu0
      %v2195 = vadd.f32 %v2017, %v2187
      %v2196 = vadd.f32 %v2018, %v2192
      %s2197 = scalar_lea.vmem %s1, 176
      %v2198 = vld [vmem:[%s2197] sm:$0xff]
      %v2199 = vld [vmem:[%s2197 + $0x8] sm:$0xff]
      %v2201 = vsel %vm212, %v2198, 0
      %v2204 = vsel %vm212, %v2199, 0
      %2206 = vmatprep.subr.mxu0 0.0
      %2207 = vmatpush1.msra.mxu0 %v1831
      %2208 = vmatprep.subr.mxu0 0.0
      %2209 = vmatpush1.msra.mxu0 %v1832
      %2210 = vmatprep.subr.mxu0 0.0
      %2211 = vmatpush1.msra.mxu0 0.0
      %2212 = vmatprep.subr.mxu0 0.0
      %2213 = vmatpush1.msra.mxu0 0.0
      %2214 = vmatprep.subr.mxu0 0.0
      %2215 = vmatpush1.msra.mxu0 0.0
      %2216 = vmatprep.subr.mxu0 0.0
      %2217 = vmatpush1.msra.mxu0 0.0
      %2218 = vmatprep.subr.mxu0 0.0
      %2219 = vmatpush1.msra.mxu0 0.0
      %2220 = vmatprep.subr.mxu0 0.0
      %2221 = vmatpush1.msra.mxu0 0.0
      %2222 = vmatprep.subr.mxu0 0.0
      %2223 = vmatpush1.msra.mxu0 0.0
      %2224 = vmatprep.subr.mxu0 0.0
      %2225 = vmatpush1.msra.mxu0 0.0
      %2226 = vmatprep.subr.mxu0 0.0
      %2227 = vmatpush1.msra.mxu0 0.0
      %2228 = vmatprep.subr.mxu0 0.0
      %2229 = vmatpush1.msra.mxu0 0.0
      %2230 = vmatprep.subr.mxu0 0.0
      %2231 = vmatpush1.msra.mxu0 0.0
      %2232 = vmatprep.subr.mxu0 0.0
      %2233 = vmatpush1.msra.mxu0 0.0
      %2234 = vmatprep.subr.mxu0 0.0
      %2235 = vmatpush1.msra.mxu0 0.0
      %2236 = vmatprep.subr.mxu0 0.0
      %2237 = vmatpush1.msra.mxu0 0.0
      %2238 = vmatprep.subr.mxu0 0.0
      %2239 = vmatpush1.msra.mxu0 0.0
      %2240 = vmatprep.subr.mxu0 0.0
      %2241 = vmatpush1.msra.mxu0 0.0
      %2242 = vmatprep.subr.mxu0 0.0
      %2243 = vmatpush1.msra.mxu0 0.0
      %2244 = vmatprep.subr.mxu0 0.0
      %2245 = vmatpush1.msra.mxu0 0.0
      %2246 = vmatprep.subr.mxu0 0.0
      %2247 = vmatpush1.msra.mxu0 0.0
      %2248 = vmatprep.subr.mxu0 0.0
      %2249 = vmatpush1.msra.mxu0 0.0
      %2250 = vmatprep.subr.mxu0 0.0
      %2251 = vmatpush1.msra.mxu0 0.0
      %2252 = vmatprep.subr.mxu0 0.0
      %2253 = vmatpush1.msra.mxu0 0.0
      %2254 = vmatprep.subr.mxu0 0.0
      %2255 = vmatpush1.msra.mxu0 0.0
      %2256 = vmatprep.subr.mxu0 0.0
      %2257 = vmatpush1.msra.mxu0 0.0
      %2258 = vmatprep.subr.mxu0 0.0
      %2259 = vmatpush1.msra.mxu0 0.0
      %2260 = vmatprep.subr.mxu0 0.0
      %2261 = vmatpush1.msra.mxu0 0.0
      %2262 = vmatprep.subr.mxu0 0.0
      %2263 = vmatpush1.msra.mxu0 0.0
      %2264 = vmatprep.subr.mxu0 0.0
      %2265 = vmatpush1.msra.mxu0 0.0
      %2266 = vmatprep.subr.mxu0 0.0
      %2267 = vmatpush1.msra.mxu0 0.0
      %2268 = vmatprep.subr.mxu0 0.0
      %2269 = vmatpush1.msra.mxu0 0.0
      %2270 = vmatprep.mubr.f32.mxu0 0.0
      %2271 = vmatmul.mubr.f32.gmra.mrb[0].mxu0 %v2201
      %v2272 = vpop.f32.mrb[0].mxu0
      %v2273 = vadd.f32 0.0, %v2272
      %v2274 = vpop.f32.mrb[0].mxu0
      %2275 = vmatprep.mubr.f32.mxu0 0.0
      %2276 = vmatmul.mubr.f32.gmra.mrb[0].mxu0 %v2204
      %v2277 = vpop.f32.mrb[0].mxu0
      %v2278 = vadd.f32 0.0, %v2277
      %v2279 = vpop.f32.mrb[0].mxu0
      %2280 = vdwg.mxu0
      %s2281 = scalar_lea.vmem %s2, 1408
      %v2282 = vld [vmem:[%s2281] sm:$0xff]
      %v2283 = vld [vmem:[%s2281 + $0x8] sm:$0xff]
      %v2284 = vld [vmem:[%s2281 + $0x10] sm:$0xff]
      %v2285 = vld [vmem:[%s2281 + $0x18] sm:$0xff]
      %v2286 = vld [vmem:[%s2281 + $0x20] sm:$0xff]
      %v2287 = vld [vmem:[%s2281 + $0x28] sm:$0xff]
      %v2288 = vld [vmem:[%s2281 + $0x30] sm:$0xff]
      %v2289 = vld [vmem:[%s2281 + $0x38] sm:$0xff]
      %v2290 = vld [vmem:[%s2281 + $0x40] sm:$0xff]
      %v2291 = vld [vmem:[%s2281 + $0x48] sm:$0xff]
      %v2292 = vld [vmem:[%s2281 + $0x50] sm:$0xff]
      %v2293 = vld [vmem:[%s2281 + $0x58] sm:$0xff]
      %v2294 = vld [vmem:[%s2281 + $0x60] sm:$0xff]
      %v2295 = vld [vmem:[%s2281 + $0x68] sm:$0xff]
      %v2296 = vld [vmem:[%s2281 + $0x70] sm:$0xff]
      %v2297 = vld [vmem:[%s2281 + $0x78] sm:$0xff]
      %2298 = vmatprep.subr.mxu0 0.0
      %2299 = vmatpush1.msra.mxu0 %v2282
      %2300 = vmatprep.subr.mxu0 0.0
      %2301 = vmatpush1.msra.mxu0 %v2283
      %2302 = vmatprep.subr.mxu0 0.0
      %2303 = vmatpush1.msra.mxu0 %v2284
      %2304 = vmatprep.subr.mxu0 0.0
      %2305 = vmatpush1.msra.mxu0 %v2285
      %2306 = vmatprep.subr.mxu0 0.0
      %2307 = vmatpush1.msra.mxu0 %v2286
      %2308 = vmatprep.subr.mxu0 0.0
      %2309 = vmatpush1.msra.mxu0 %v2287
      %2310 = vmatprep.subr.mxu0 0.0
      %2311 = vmatpush1.msra.mxu0 %v2288
      %2312 = vmatprep.subr.mxu0 0.0
      %2313 = vmatpush1.msra.mxu0 %v2289
      %2314 = vmatprep.subr.mxu0 0.0
      %2315 = vmatpush1.msra.mxu0 %v2290
      %2316 = vmatprep.subr.mxu0 0.0
      %2317 = vmatpush1.msra.mxu0 %v2291
      %2318 = vmatprep.subr.mxu0 0.0
      %2319 = vmatpush1.msra.mxu0 %v2292
      %2320 = vmatprep.subr.mxu0 0.0
      %2321 = vmatpush1.msra.mxu0 %v2293
      %2322 = vmatprep.subr.mxu0 0.0
      %2323 = vmatpush1.msra.mxu0 %v2294
      %2324 = vmatprep.subr.mxu0 0.0
      %2325 = vmatpush1.msra.mxu0 %v2295
      %2326 = vmatprep.subr.mxu0 0.0
      %2327 = vmatpush1.msra.mxu0 %v2296
      %2328 = vmatprep.subr.mxu0 0.0
      %2329 = vmatpush1.msra.mxu0 %v2297
      %2330 = vmatprep.subr.mxu0 0.0
      %2331 = vmatpush1.msra.mxu0 0.0
      %2332 = vmatprep.subr.mxu0 0.0
      %2333 = vmatpush1.msra.mxu0 0.0
      %2334 = vmatprep.subr.mxu0 0.0
      %2335 = vmatpush1.msra.mxu0 0.0
      %2336 = vmatprep.subr.mxu0 0.0
      %2337 = vmatpush1.msra.mxu0 0.0
      %2338 = vmatprep.subr.mxu0 0.0
      %2339 = vmatpush1.msra.mxu0 0.0
      %2340 = vmatprep.subr.mxu0 0.0
      %2341 = vmatpush1.msra.mxu0 0.0
      %2342 = vmatprep.subr.mxu0 0.0
      %2343 = vmatpush1.msra.mxu0 0.0
      %2344 = vmatprep.subr.mxu0 0.0
      %2345 = vmatpush1.msra.mxu0 0.0
      %2346 = vmatprep.subr.mxu0 0.0
      %2347 = vmatpush1.msra.mxu0 0.0
      %2348 = vmatprep.subr.mxu0 0.0
      %2349 = vmatpush1.msra.mxu0 0.0
      %2350 = vmatprep.subr.mxu0 0.0
      %2351 = vmatpush1.msra.mxu0 0.0
      %2352 = vmatprep.subr.mxu0 0.0
      %2353 = vmatpush1.msra.mxu0 0.0
      %2354 = vmatprep.subr.mxu0 0.0
      %2355 = vmatpush1.msra.mxu0 0.0
      %2356 = vmatprep.subr.mxu0 0.0
      %2357 = vmatpush1.msra.mxu0 0.0
      %2358 = vmatprep.subr.mxu0 0.0
      %2359 = vmatpush1.msra.mxu0 0.0
      %2360 = vmatprep.subr.mxu0 0.0
      %2361 = vmatpush1.msra.mxu0 0.0
      %2362 = vmatprep.mubr.f32.mxu0 0.0
      %2363 = vmatmul.mubr.f32.gmra.mrb[0].mxu0 %v2273
      %v2364 = vpop.f32.mrb[0].mxu0
      %v2365 = vadd.f32 0.0, %v2364
      %v2366 = vpop.f32.mrb[0].mxu0
      %2367 = vmatprep.mubr.f32.mxu0 0.0
      %2368 = vmatmul.mubr.f32.gmra.mrb[0].mxu0 %v2278
      %v2369 = vpop.f32.mrb[0].mxu0
      %v2370 = vadd.f32 0.0, %v2369
      %v2371 = vpop.f32.mrb[0].mxu0
      %2372 = vdwg.mxu0
      %v2373 = vadd.f32 %v2195, %v2365
      %v2374 = vadd.f32 %v2196, %v2370
      %v2375 = vmax.f32 %v2373, 0.0
      %v2376 = vmax.f32 %v2374, 0.0
      %s2377 = scalar_lea.vmem %s3, 4
      %v2378 = vld [vmem:[%s2377] sm:$0x1]
      %v2380 = vlaneseq
      %v2381 = vshrl.u32 %v2380, 7
      %v2382 = vsub.s32 0, %v2381
      %v2383 = vrot.slane %v2378, %v2382
      %s2385 = scalar_lea.vmem %s1, 192
      %v2386 = vld [vmem:[%s2385] sm:$0xff]
      %v2387 = vld [vmem:[%s2385 + $0x8] sm:$0xff]
      %v2389 = vsel %vm212, %v2386, 0
      %v2392 = vsel %vm212, %v2387, 0
      %2394 = vmatprep.subr.mxu0 0.0
      %2395 = vmatpush1.msra.mxu0 %v2375
      %2396 = vmatprep.subr.mxu0 0.0
      %2397 = vmatpush1.msra.mxu0 %v2376
      %2398 = vmatprep.subr.mxu0 0.0
      %2399 = vmatpush1.msra.mxu0 0.0
      %2400 = vmatprep.subr.mxu0 0.0
      %2401 = vmatpush1.msra.mxu0 0.0
      %2402 = vmatprep.subr.mxu0 0.0
      %2403 = vmatpush1.msra.mxu0 0.0
      %2404 = vmatprep.subr.mxu0 0.0
      %2405 = vmatpush1.msra.mxu0 0.0
      %2406 = vmatprep.subr.mxu0 0.0
      %2407 = vmatpush1.msra.mxu0 0.0
      %2408 = vmatprep.subr.mxu0 0.0
      %2409 = vmatpush1.msra.mxu0 0.0
      %2410 = vmatprep.subr.mxu0 0.0
      %2411 = vmatpush1.msra.mxu0 0.0
      %2412 = vmatprep.subr.mxu0 0.0
      %2413 = vmatpush1.msra.mxu0 0.0
      %2414 = vmatprep.subr.mxu0 0.0
      %2415 = vmatpush1.msra.mxu0 0.0
      %2416 = vmatprep.subr.mxu0 0.0
      %2417 = vmatpush1.msra.mxu0 0.0
      %2418 = vmatprep.subr.mxu0 0.0
      %2419 = vmatpush1.msra.mxu0 0.0
      %2420 = vmatprep.subr.mxu0 0.0
      %2421 = vmatpush1.msra.mxu0 0.0
      %2422 = vmatprep.subr.mxu0 0.0
      %2423 = vmatpush1.msra.mxu0 0.0
      %2424 = vmatprep.subr.mxu0 0.0
      %2425 = vmatpush1.msra.mxu0 0.0
      %2426 = vmatprep.subr.mxu0 0.0
      %2427 = vmatpush1.msra.mxu0 0.0
      %2428 = vmatprep.subr.mxu0 0.0
      %2429 = vmatpush1.msra.mxu0 0.0
      %2430 = vmatprep.subr.mxu0 0.0
      %2431 = vmatpush1.msra.mxu0 0.0
      %2432 = vmatprep.subr.mxu0 0.0
      %2433 = vmatpush1.msra.mxu0 0.0
      %2434 = vmatprep.subr.mxu0 0.0
      %2435 = vmatpush1.msra.mxu0 0.0
      %2436 = vmatprep.subr.mxu0 0.0
      %2437 = vmatpush1.msra.mxu0 0.0
      %2438 = vmatprep.subr.mxu0 0.0
      %2439 = vmatpush1.msra.mxu0 0.0
      %2440 = vmatprep.subr.mxu0 0.0
      %2441 = vmatpush1.msra.mxu0 0.0
      %2442 = vmatprep.subr.mxu0 0.0
      %2443 = vmatpush1.msra.mxu0 0.0
      %2444 = vmatprep.subr.mxu0 0.0
      %2445 = vmatpush1.msra.mxu0 0.0
      %2446 = vmatprep.subr.mxu0 0.0
      %2447 = vmatpush1.msra.mxu0 0.0
      %2448 = vmatprep.subr.mxu0 0.0
      %2449 = vmatpush1.msra.mxu0 0.0
      %2450 = vmatprep.subr.mxu0 0.0
      %2451 = vmatpush1.msra.mxu0 0.0
      %2452 = vmatprep.subr.mxu0 0.0
      %2453 = vmatpush1.msra.mxu0 0.0
      %2454 = vmatprep.subr.mxu0 0.0
      %2455 = vmatpush1.msra.mxu0 0.0
      %2456 = vmatprep.subr.mxu0 0.0
      %2457 = vmatpush1.msra.mxu0 0.0
      %2458 = vmatprep.mubr.f32.mxu0 0.0
      %2459 = vmatmul.mubr.f32.gmra.mrb[0].mxu0 %v2389
      %v2460 = vpop.f32.mrb[0].mxu0
      %v2461 = vadd.f32 0.0, %v2460
      %v2462 = vpop.f32.mrb[0].mxu0
      %2463 = vmatprep.mubr.f32.mxu0 0.0
      %2464 = vmatmul.mubr.f32.gmra.mrb[0].mxu0 %v2392
      %v2465 = vpop.f32.mrb[0].mxu0
      %v2466 = vadd.f32 0.0, %v2465
      %v2467 = vpop.f32.mrb[0].mxu0
      %2468 = vdwg.mxu0
      %s2469 = scalar_lea.vmem %s2, 1536
      %v2470 = vld [vmem:[%s2469] sm:$0xff]
      %v2471 = vld [vmem:[%s2469 + $0x8] sm:$0xff]
      %v2472 = vld [vmem:[%s2469 + $0x10] sm:$0xff]
      %v2473 = vld [vmem:[%s2469 + $0x18] sm:$0xff]
      %v2474 = vld [vmem:[%s2469 + $0x20] sm:$0xff]
      %v2475 = vld [vmem:[%s2469 + $0x28] sm:$0xff]
      %v2476 = vld [vmem:[%s2469 + $0x30] sm:$0xff]
      %v2477 = vld [vmem:[%s2469 + $0x38] sm:$0xff]
      %v2478 = vld [vmem:[%s2469 + $0x40] sm:$0xff]
      %v2479 = vld [vmem:[%s2469 + $0x48] sm:$0xff]
      %v2480 = vld [vmem:[%s2469 + $0x50] sm:$0xff]
      %v2481 = vld [vmem:[%s2469 + $0x58] sm:$0xff]
      %v2482 = vld [vmem:[%s2469 + $0x60] sm:$0xff]
      %v2483 = vld [vmem:[%s2469 + $0x68] sm:$0xff]
      %v2484 = vld [vmem:[%s2469 + $0x70] sm:$0xff]
      %v2485 = vld [vmem:[%s2469 + $0x78] sm:$0xff]
      %2486 = vmatprep.subr.mxu0 0.0
      %2487 = vmatpush1.msra.mxu0 %v2470
      %2488 = vmatprep.subr.mxu0 0.0
      %2489 = vmatpush1.msra.mxu0 %v2471
      %2490 = vmatprep.subr.mxu0 0.0
      %2491 = vmatpush1.msra.mxu0 %v2472
      %2492 = vmatprep.subr.mxu0 0.0
      %2493 = vmatpush1.msra.mxu0 %v2473
      %2494 = vmatprep.subr.mxu0 0.0
      %2495 = vmatpush1.msra.mxu0 %v2474
      %2496 = vmatprep.subr.mxu0 0.0
      %2497 = vmatpush1.msra.mxu0 %v2475
      %2498 = vmatprep.subr.mxu0 0.0
      %2499 = vmatpush1.msra.mxu0 %v2476
      %2500 = vmatprep.subr.mxu0 0.0
      %2501 = vmatpush1.msra.mxu0 %v2477
      %2502 = vmatprep.subr.mxu0 0.0
      %2503 = vmatpush1.msra.mxu0 %v2478
      %2504 = vmatprep.subr.mxu0 0.0
      %2505 = vmatpush1.msra.mxu0 %v2479
      %2506 = vmatprep.subr.mxu0 0.0
      %2507 = vmatpush1.msra.mxu0 %v2480
      %2508 = vmatprep.subr.mxu0 0.0
      %2509 = vmatpush1.msra.mxu0 %v2481
      %2510 = vmatprep.subr.mxu0 0.0
      %2511 = vmatpush1.msra.mxu0 %v2482
      %2512 = vmatprep.subr.mxu0 0.0
      %2513 = vmatpush1.msra.mxu0 %v2483
      %2514 = vmatprep.subr.mxu0 0.0
      %2515 = vmatpush1.msra.mxu0 %v2484
      %2516 = vmatprep.subr.mxu0 0.0
      %2517 = vmatpush1.msra.mxu0 %v2485
      %2518 = vmatprep.subr.mxu0 0.0
      %2519 = vmatpush1.msra.mxu0 0.0
      %2520 = vmatprep.subr.mxu0 0.0
      %2521 = vmatpush1.msra.mxu0 0.0
      %2522 = vmatprep.subr.mxu0 0.0
      %2523 = vmatpush1.msra.mxu0 0.0
      %2524 = vmatprep.subr.mxu0 0.0
      %2525 = vmatpush1.msra.mxu0 0.0
      %2526 = vmatprep.subr.mxu0 0.0
      %2527 = vmatpush1.msra.mxu0 0.0
      %2528 = vmatprep.subr.mxu0 0.0
      %2529 = vmatpush1.msra.mxu0 0.0
      %2530 = vmatprep.subr.mxu0 0.0
      %2531 = vmatpush1.msra.mxu0 0.0
      %2532 = vmatprep.subr.mxu0 0.0
      %2533 = vmatpush1.msra.mxu0 0.0
      %2534 = vmatprep.subr.mxu0 0.0
      %2535 = vmatpush1.msra.mxu0 0.0
      %2536 = vmatprep.subr.mxu0 0.0
      %2537 = vmatpush1.msra.mxu0 0.0
      %2538 = vmatprep.subr.mxu0 0.0
      %2539 = vmatpush1.msra.mxu0 0.0
      %2540 = vmatprep.subr.mxu0 0.0
      %2541 = vmatpush1.msra.mxu0 0.0
      %2542 = vmatprep.subr.mxu0 0.0
      %2543 = vmatpush1.msra.mxu0 0.0
      %2544 = vmatprep.subr.mxu0 0.0
      %2545 = vmatpush1.msra.mxu0 0.0
      %2546 = vmatprep.subr.mxu0 0.0
      %2547 = vmatpush1.msra.mxu0 0.0
      %2548 = vmatprep.subr.mxu0 0.0
      %2549 = vmatpush1.msra.mxu0 0.0
      %2550 = vmatprep.mubr.f32.mxu0 0.0
      %2551 = vmatmul.mubr.f32.gmra.mrb[0].mxu0 %v2461
      %v2552 = vpop.f32.mrb[0].mxu0
      %v2553 = vadd.f32 0.0, %v2552
      %v2554 = vpop.f32.mrb[0].mxu0
      %2555 = vmatprep.mubr.f32.mxu0 0.0
      %2556 = vmatmul.mubr.f32.gmra.mrb[0].mxu0 %v2466
      %v2557 = vpop.f32.mrb[0].mxu0
      %v2558 = vadd.f32 0.0, %v2557
      %v2559 = vpop.f32.mrb[0].mxu0
      %2560 = vdwg.mxu0
      %v2561 = vadd.f32 %v2383, %v2553
      %v2562 = vadd.f32 %v2383, %v2558
      %s2563 = scalar_lea.vmem %s1, 208
      %v2564 = vld [vmem:[%s2563] sm:$0xff]
      %v2565 = vld [vmem:[%s2563 + $0x8] sm:$0xff]
      %v2567 = vsel %vm212, %v2564, 0
      %v2570 = vsel %vm212, %v2565, 0
      %2572 = vmatprep.subr.mxu0 0.0
      %2573 = vmatpush1.msra.mxu0 %v2375
      %2574 = vmatprep.subr.mxu0 0.0
      %2575 = vmatpush1.msra.mxu0 %v2376
      %2576 = vmatprep.subr.mxu0 0.0
      %2577 = vmatpush1.msra.mxu0 0.0
      %2578 = vmatprep.subr.mxu0 0.0
      %2579 = vmatpush1.msra.mxu0 0.0
      %2580 = vmatprep.subr.mxu0 0.0
      %2581 = vmatpush1.msra.mxu0 0.0
      %2582 = vmatprep.subr.mxu0 0.0
      %2583 = vmatpush1.msra.mxu0 0.0
      %2584 = vmatprep.subr.mxu0 0.0
      %2585 = vmatpush1.msra.mxu0 0.0
      %2586 = vmatprep.subr.mxu0 0.0
      %2587 = vmatpush1.msra.mxu0 0.0
      %2588 = vmatprep.subr.mxu0 0.0
      %2589 = vmatpush1.msra.mxu0 0.0
      %2590 = vmatprep.subr.mxu0 0.0
      %2591 = vmatpush1.msra.mxu0 0.0
      %2592 = vmatprep.subr.mxu0 0.0
      %2593 = vmatpush1.msra.mxu0 0.0
      %2594 = vmatprep.subr.mxu0 0.0
      %2595 = vmatpush1.msra.mxu0 0.0
      %2596 = vmatprep.subr.mxu0 0.0
      %2597 = vmatpush1.msra.mxu0 0.0
      %2598 = vmatprep.subr.mxu0 0.0
      %2599 = vmatpush1.msra.mxu0 0.0
      %2600 = vmatprep.subr.mxu0 0.0
      %2601 = vmatpush1.msra.mxu0 0.0
      %2602 = vmatprep.subr.mxu0 0.0
      %2603 = vmatpush1.msra.mxu0 0.0
      %2604 = vmatprep.subr.mxu0 0.0
      %2605 = vmatpush1.msra.mxu0 0.0
      %2606 = vmatprep.subr.mxu0 0.0
      %2607 = vmatpush1.msra.mxu0 0.0
      %2608 = vmatprep.subr.mxu0 0.0
      %2609 = vmatpush1.msra.mxu0 0.0
      %2610 = vmatprep.subr.mxu0 0.0
      %2611 = vmatpush1.msra.mxu0 0.0
      %2612 = vmatprep.subr.mxu0 0.0
      %2613 = vmatpush1.msra.mxu0 0.0
      %2614 = vmatprep.subr.mxu0 0.0
      %2615 = vmatpush1.msra.mxu0 0.0
      %2616 = vmatprep.subr.mxu0 0.0
      %2617 = vmatpush1.msra.mxu0 0.0
      %2618 = vmatprep.subr.mxu0 0.0
      %2619 = vmatpush1.msra.mxu0 0.0
      %2620 = vmatprep.subr.mxu0 0.0
      %2621 = vmatpush1.msra.mxu0 0.0
      %2622 = vmatprep.subr.mxu0 0.0
      %2623 = vmatpush1.msra.mxu0 0.0
      %2624 = vmatprep.subr.mxu0 0.0
      %2625 = vmatpush1.msra.mxu0 0.0
      %2626 = vmatprep.subr.mxu0 0.0
      %2627 = vmatpush1.msra.mxu0 0.0
      %2628 = vmatprep.subr.mxu0 0.0
      %2629 = vmatpush1.msra.mxu0 0.0
      %2630 = vmatprep.subr.mxu0 0.0
      %2631 = vmatpush1.msra.mxu0 0.0
      %2632 = vmatprep.subr.mxu0 0.0
      %2633 = vmatpush1.msra.mxu0 0.0
      %2634 = vmatprep.subr.mxu0 0.0
      %2635 = vmatpush1.msra.mxu0 0.0
      %2636 = vmatprep.mubr.f32.mxu0 0.0
      %2637 = vmatmul.mubr.f32.gmra.mrb[0].mxu0 %v2567
      %v2638 = vpop.f32.mrb[0].mxu0
      %v2639 = vadd.f32 0.0, %v2638
      %v2640 = vpop.f32.mrb[0].mxu0
      %2641 = vmatprep.mubr.f32.mxu0 0.0
      %2642 = vmatmul.mubr.f32.gmra.mrb[0].mxu0 %v2570
      %v2643 = vpop.f32.mrb[0].mxu0
      %v2644 = vadd.f32 0.0, %v2643
      %v2645 = vpop.f32.mrb[0].mxu0
      %2646 = vdwg.mxu0
      %s2647 = scalar_lea.vmem %s2, 1664
      %v2648 = vld [vmem:[%s2647] sm:$0xff]
      %v2649 = vld [vmem:[%s2647 + $0x8] sm:$0xff]
      %v2650 = vld [vmem:[%s2647 + $0x10] sm:$0xff]
      %v2651 = vld [vmem:[%s2647 + $0x18] sm:$0xff]
      %v2652 = vld [vmem:[%s2647 + $0x20] sm:$0xff]
      %v2653 = vld [vmem:[%s2647 + $0x28] sm:$0xff]
      %v2654 = vld [vmem:[%s2647 + $0x30] sm:$0xff]
      %v2655 = vld [vmem:[%s2647 + $0x38] sm:$0xff]
      %v2656 = vld [vmem:[%s2647 + $0x40] sm:$0xff]
      %v2657 = vld [vmem:[%s2647 + $0x48] sm:$0xff]
      %v2658 = vld [vmem:[%s2647 + $0x50] sm:$0xff]
      %v2659 = vld [vmem:[%s2647 + $0x58] sm:$0xff]
      %v2660 = vld [vmem:[%s2647 + $0x60] sm:$0xff]
      %v2661 = vld [vmem:[%s2647 + $0x68] sm:$0xff]
      %v2662 = vld [vmem:[%s2647 + $0x70] sm:$0xff]
      %v2663 = vld [vmem:[%s2647 + $0x78] sm:$0xff]
      %2664 = vmatprep.subr.mxu0 0.0
      %2665 = vmatpush1.msra.mxu0 %v2648
      %2666 = vmatprep.subr.mxu0 0.0
      %2667 = vmatpush1.msra.mxu0 %v2649
      %2668 = vmatprep.subr.mxu0 0.0
      %2669 = vmatpush1.msra.mxu0 %v2650
      %2670 = vmatprep.subr.mxu0 0.0
      %2671 = vmatpush1.msra.mxu0 %v2651
      %2672 = vmatprep.subr.mxu0 0.0
      %2673 = vmatpush1.msra.mxu0 %v2652
      %2674 = vmatprep.subr.mxu0 0.0
      %2675 = vmatpush1.msra.mxu0 %v2653
      %2676 = vmatprep.subr.mxu0 0.0
      %2677 = vmatpush1.msra.mxu0 %v2654
      %2678 = vmatprep.subr.mxu0 0.0
      %2679 = vmatpush1.msra.mxu0 %v2655
      %2680 = vmatprep.subr.mxu0 0.0
      %2681 = vmatpush1.msra.mxu0 %v2656
      %2682 = vmatprep.subr.mxu0 0.0
      %2683 = vmatpush1.msra.mxu0 %v2657
      %2684 = vmatprep.subr.mxu0 0.0
      %2685 = vmatpush1.msra.mxu0 %v2658
      %2686 = vmatprep.subr.mxu0 0.0
      %2687 = vmatpush1.msra.mxu0 %v2659
      %2688 = vmatprep.subr.mxu0 0.0
      %2689 = vmatpush1.msra.mxu0 %v2660
      %2690 = vmatprep.subr.mxu0 0.0
      %2691 = vmatpush1.msra.mxu0 %v2661
      %2692 = vmatprep.subr.mxu0 0.0
      %2693 = vmatpush1.msra.mxu0 %v2662
      %2694 = vmatprep.subr.mxu0 0.0
      %2695 = vmatpush1.msra.mxu0 %v2663
      %2696 = vmatprep.subr.mxu0 0.0
      %2697 = vmatpush1.msra.mxu0 0.0
      %2698 = vmatprep.subr.mxu0 0.0
      %2699 = vmatpush1.msra.mxu0 0.0
      %2700 = vmatprep.subr.mxu0 0.0
      %2701 = vmatpush1.msra.mxu0 0.0
      %2702 = vmatprep.subr.mxu0 0.0
      %2703 = vmatpush1.msra.mxu0 0.0
      %2704 = vmatprep.subr.mxu0 0.0
      %2705 = vmatpush1.msra.mxu0 0.0
      %2706 = vmatprep.subr.mxu0 0.0
      %2707 = vmatpush1.msra.mxu0 0.0
      %2708 = vmatprep.subr.mxu0 0.0
      %2709 = vmatpush1.msra.mxu0 0.0
      %2710 = vmatprep.subr.mxu0 0.0
      %2711 = vmatpush1.msra.mxu0 0.0
      %2712 = vmatprep.subr.mxu0 0.0
      %2713 = vmatpush1.msra.mxu0 0.0
      %2714 = vmatprep.subr.mxu0 0.0
      %2715 = vmatpush1.msra.mxu0 0.0
      %2716 = vmatprep.subr.mxu0 0.0
      %2717 = vmatpush1.msra.mxu0 0.0
      %2718 = vmatprep.subr.mxu0 0.0
      %2719 = vmatpush1.msra.mxu0 0.0
      %2720 = vmatprep.subr.mxu0 0.0
      %2721 = vmatpush1.msra.mxu0 0.0
      %2722 = vmatprep.subr.mxu0 0.0
      %2723 = vmatpush1.msra.mxu0 0.0
      %2724 = vmatprep.subr.mxu0 0.0
      %2725 = vmatpush1.msra.mxu0 0.0
      %2726 = vmatprep.subr.mxu0 0.0
      %2727 = vmatpush1.msra.mxu0 0.0
      %2728 = vmatprep.mubr.f32.mxu0 0.0
      %2729 = vmatmul.mubr.f32.gmra.mrb[0].mxu0 %v2639
      %v2730 = vpop.f32.mrb[0].mxu0
      %v2731 = vadd.f32 0.0, %v2730
      %v2732 = vpop.f32.mrb[0].mxu0
      %2733 = vmatprep.mubr.f32.mxu0 0.0
      %2734 = vmatmul.mubr.f32.gmra.mrb[0].mxu0 %v2644
      %v2735 = vpop.f32.mrb[0].mxu0
      %v2736 = vadd.f32 0.0, %v2735
      %v2737 = vpop.f32.mrb[0].mxu0
      %2738 = vdwg.mxu0
      %v2739 = vadd.f32 %v2561, %v2731
      %v2740 = vadd.f32 %v2562, %v2736
      %s2741 = scalar_lea.vmem %s1, 224
      %v2742 = vld [vmem:[%s2741] sm:$0xff]
      %v2743 = vld [vmem:[%s2741 + $0x8] sm:$0xff]
      %v2745 = vsel %vm212, %v2742, 0
      %v2748 = vsel %vm212, %v2743, 0
      %2750 = vmatprep.subr.mxu0 0.0
      %2751 = vmatpush1.msra.mxu0 %v2375
      %2752 = vmatprep.subr.mxu0 0.0
      %2753 = vmatpush1.msra.mxu0 %v2376
      %2754 = vmatprep.subr.mxu0 0.0
      %2755 = vmatpush1.msra.mxu0 0.0
      %2756 = vmatprep.subr.mxu0 0.0
      %2757 = vmatpush1.msra.mxu0 0.0
      %2758 = vmatprep.subr.mxu0 0.0
      %2759 = vmatpush1.msra.mxu0 0.0
      %2760 = vmatprep.subr.mxu0 0.0
      %2761 = vmatpush1.msra.mxu0 0.0
      %2762 = vmatprep.subr.mxu0 0.0
      %2763 = vmatpush1.msra.mxu0 0.0
      %2764 = vmatprep.subr.mxu0 0.0
      %2765 = vmatpush1.msra.mxu0 0.0
      %2766 = vmatprep.subr.mxu0 0.0
      %2767 = vmatpush1.msra.mxu0 0.0
      %2768 = vmatprep.subr.mxu0 0.0
      %2769 = vmatpush1.msra.mxu0 0.0
      %2770 = vmatprep.subr.mxu0 0.0
      %2771 = vmatpush1.msra.mxu0 0.0
      %2772 = vmatprep.subr.mxu0 0.0
      %2773 = vmatpush1.msra.mxu0 0.0
      %2774 = vmatprep.subr.mxu0 0.0
      %2775 = vmatpush1.msra.mxu0 0.0
      %2776 = vmatprep.subr.mxu0 0.0
      %2777 = vmatpush1.msra.mxu0 0.0
      %2778 = vmatprep.subr.mxu0 0.0
      %2779 = vmatpush1.msra.mxu0 0.0
      %2780 = vmatprep.subr.mxu0 0.0
      %2781 = vmatpush1.msra.mxu0 0.0
      %2782 = vmatprep.subr.mxu0 0.0
      %2783 = vmatpush1.msra.mxu0 0.0
      %2784 = vmatprep.subr.mxu0 0.0
      %2785 = vmatpush1.msra.mxu0 0.0
      %2786 = vmatprep.subr.mxu0 0.0
      %2787 = vmatpush1.msra.mxu0 0.0
      %2788 = vmatprep.subr.mxu0 0.0
      %2789 = vmatpush1.msra.mxu0 0.0
      %2790 = vmatprep.subr.mxu0 0.0
      %2791 = vmatpush1.msra.mxu0 0.0
      %2792 = vmatprep.subr.mxu0 0.0
      %2793 = vmatpush1.msra.mxu0 0.0
      %2794 = vmatprep.subr.mxu0 0.0
      %2795 = vmatpush1.msra.mxu0 0.0
      %2796 = vmatprep.subr.mxu0 0.0
      %2797 = vmatpush1.msra.mxu0 0.0
      %2798 = vmatprep.subr.mxu0 0.0
      %2799 = vmatpush1.msra.mxu0 0.0
      %2800 = vmatprep.subr.mxu0 0.0
      %2801 = vmatpush1.msra.mxu0 0.0
      %2802 = vmatprep.subr.mxu0 0.0
      %2803 = vmatpush1.msra.mxu0 0.0
      %2804 = vmatprep.subr.mxu0 0.0
      %2805 = vmatpush1.msra.mxu0 0.0
      %2806 = vmatprep.subr.mxu0 0.0
      %2807 = vmatpush1.msra.mxu0 0.0
      %2808 = vmatprep.subr.mxu0 0.0
      %2809 = vmatpush1.msra.mxu0 0.0
      %2810 = vmatprep.subr.mxu0 0.0
      %2811 = vmatpush1.msra.mxu0 0.0
      %2812 = vmatprep.subr.mxu0 0.0
      %2813 = vmatpush1.msra.mxu0 0.0
      %2814 = vmatprep.mubr.f32.mxu0 0.0
      %2815 = vmatmul.mubr.f32.gmra.mrb[0].mxu0 %v2745
      %v2816 = vpop.f32.mrb[0].mxu0
      %v2817 = vadd.f32 0.0, %v2816
      %v2818 = vpop.f32.mrb[0].mxu0
      %2819 = vmatprep.mubr.f32.mxu0 0.0
      %2820 = vmatmul.mubr.f32.gmra.mrb[0].mxu0 %v2748
      %v2821 = vpop.f32.mrb[0].mxu0
      %v2822 = vadd.f32 0.0, %v2821
      %v2823 = vpop.f32.mrb[0].mxu0
      %2824 = vdwg.mxu0
      %s2825 = scalar_lea.vmem %s2, 1792
      %v2826 = vld [vmem:[%s2825] sm:$0xff]
      %v2827 = vld [vmem:[%s2825 + $0x8] sm:$0xff]
      %v2828 = vld [vmem:[%s2825 + $0x10] sm:$0xff]
      %v2829 = vld [vmem:[%s2825 + $0x18] sm:$0xff]
      %v2830 = vld [vmem:[%s2825 + $0x20] sm:$0xff]
      %v2831 = vld [vmem:[%s2825 + $0x28] sm:$0xff]
      %v2832 = vld [vmem:[%s2825 + $0x30] sm:$0xff]
      %v2833 = vld [vmem:[%s2825 + $0x38] sm:$0xff]
      %v2834 = vld [vmem:[%s2825 + $0x40] sm:$0xff]
      %v2835 = vld [vmem:[%s2825 + $0x48] sm:$0xff]
      %v2836 = vld [vmem:[%s2825 + $0x50] sm:$0xff]
      %v2837 = vld [vmem:[%s2825 + $0x58] sm:$0xff]
      %v2838 = vld [vmem:[%s2825 + $0x60] sm:$0xff]
      %v2839 = vld [vmem:[%s2825 + $0x68] sm:$0xff]
      %v2840 = vld [vmem:[%s2825 + $0x70] sm:$0xff]
      %v2841 = vld [vmem:[%s2825 + $0x78] sm:$0xff]
      %2842 = vmatprep.subr.mxu0 0.0
      %2843 = vmatpush1.msra.mxu0 %v2826
      %2844 = vmatprep.subr.mxu0 0.0
      %2845 = vmatpush1.msra.mxu0 %v2827
      %2846 = vmatprep.subr.mxu0 0.0
      %2847 = vmatpush1.msra.mxu0 %v2828
      %2848 = vmatprep.subr.mxu0 0.0
      %2849 = vmatpush1.msra.mxu0 %v2829
      %2850 = vmatprep.subr.mxu0 0.0
      %2851 = vmatpush1.msra.mxu0 %v2830
      %2852 = vmatprep.subr.mxu0 0.0
      %2853 = vmatpush1.msra.mxu0 %v2831
      %2854 = vmatprep.subr.mxu0 0.0
      %2855 = vmatpush1.msra.mxu0 %v2832
      %2856 = vmatprep.subr.mxu0 0.0
      %2857 = vmatpush1.msra.mxu0 %v2833
      %2858 = vmatprep.subr.mxu0 0.0
      %2859 = vmatpush1.msra.mxu0 %v2834
      %2860 = vmatprep.subr.mxu0 0.0
      %2861 = vmatpush1.msra.mxu0 %v2835
      %2862 = vmatprep.subr.mxu0 0.0
      %2863 = vmatpush1.msra.mxu0 %v2836
      %2864 = vmatprep.subr.mxu0 0.0
      %2865 = vmatpush1.msra.mxu0 %v2837
      %2866 = vmatprep.subr.mxu0 0.0
      %2867 = vmatpush1.msra.mxu0 %v2838
      %2868 = vmatprep.subr.mxu0 0.0
      %2869 = vmatpush1.msra.mxu0 %v2839
      %2870 = vmatprep.subr.mxu0 0.0
      %2871 = vmatpush1.msra.mxu0 %v2840
      %2872 = vmatprep.subr.mxu0 0.0
      %2873 = vmatpush1.msra.mxu0 %v2841
      %2874 = vmatprep.subr.mxu0 0.0
      %2875 = vmatpush1.msra.mxu0 0.0
      %2876 = vmatprep.subr.mxu0 0.0
      %2877 = vmatpush1.msra.mxu0 0.0
      %2878 = vmatprep.subr.mxu0 0.0
      %2879 = vmatpush1.msra.mxu0 0.0
      %2880 = vmatprep.subr.mxu0 0.0
      %2881 = vmatpush1.msra.mxu0 0.0
      %2882 = vmatprep.subr.mxu0 0.0
      %2883 = vmatpush1.msra.mxu0 0.0
      %2884 = vmatprep.subr.mxu0 0.0
      %2885 = vmatpush1.msra.mxu0 0.0
      %2886 = vmatprep.subr.mxu0 0.0
      %2887 = vmatpush1.msra.mxu0 0.0
      %2888 = vmatprep.subr.mxu0 0.0
      %2889 = vmatpush1.msra.mxu0 0.0
      %2890 = vmatprep.subr.mxu0 0.0
      %2891 = vmatpush1.msra.mxu0 0.0
      %2892 = vmatprep.subr.mxu0 0.0
      %2893 = vmatpush1.msra.mxu0 0.0
      %2894 = vmatprep.subr.mxu0 0.0
      %2895 = vmatpush1.msra.mxu0 0.0
      %2896 = vmatprep.subr.mxu0 0.0
      %2897 = vmatpush1.msra.mxu0 0.0
      %2898 = vmatprep.subr.mxu0 0.0
      %2899 = vmatpush1.msra.mxu0 0.0
      %2900 = vmatprep.subr.mxu0 0.0
      %2901 = vmatpush1.msra.mxu0 0.0
      %2902 = vmatprep.subr.mxu0 0.0
      %2903 = vmatpush1.msra.mxu0 0.0
      %2904 = vmatprep.subr.mxu0 0.0
      %2905 = vmatpush1.msra.mxu0 0.0
      %2906 = vmatprep.mubr.f32.mxu0 0.0
      %2907 = vmatmul.mubr.f32.gmra.mrb[0].mxu0 %v2817
      %v2908 = vpop.f32.mrb[0].mxu0
      %v2909 = vadd.f32 0.0, %v2908
      %v2910 = vpop.f32.mrb[0].mxu0
      %2911 = vmatprep.mubr.f32.mxu0 0.0
      %2912 = vmatmul.mubr.f32.gmra.mrb[0].mxu0 %v2822
      %v2913 = vpop.f32.mrb[0].mxu0
      %v2914 = vadd.f32 0.0, %v2913
      %v2915 = vpop.f32.mrb[0].mxu0
      %2916 = vdwg.mxu0
      %v2917 = vadd.f32 %v2739, %v2909
      %v2918 = vadd.f32 %v2740, %v2914
      %v2919 = vmax.f32 %v2917, 0.0
      %v2920 = vmax.f32 %v2918, 0.0
      %s2921 = scalar_lea.vmem %s3, 5
      %v2922 = vld [vmem:[%s2921] sm:$0x1]
      %v2924 = vlaneseq
      %v2925 = vshrl.u32 %v2924, 7
      %v2926 = vsub.s32 0, %v2925
      %v2927 = vrot.slane %v2922, %v2926
      %s2929 = scalar_lea.vmem %s1, 240
      %v2930 = vld [vmem:[%s2929] sm:$0xff]
      %v2931 = vld [vmem:[%s2929 + $0x8] sm:$0xff]
      %v2933 = vsel %vm212, %v2930, 0
      %v2936 = vsel %vm212, %v2931, 0
      %2938 = vmatprep.subr.mxu0 0.0
      %2939 = vmatpush1.msra.mxu0 %v2919
      %2940 = vmatprep.subr.mxu0 0.0
      %2941 = vmatpush1.msra.mxu0 %v2920
      %2942 = vmatprep.subr.mxu0 0.0
      %2943 = vmatpush1.msra.mxu0 0.0
      %2944 = vmatprep.subr.mxu0 0.0
      %2945 = vmatpush1.msra.mxu0 0.0
      %2946 = vmatprep.subr.mxu0 0.0
      %2947 = vmatpush1.msra.mxu0 0.0
      %2948 = vmatprep.subr.mxu0 0.0
      %2949 = vmatpush1.msra.mxu0 0.0
      %2950 = vmatprep.subr.mxu0 0.0
      %2951 = vmatpush1.msra.mxu0 0.0
      %2952 = vmatprep.subr.mxu0 0.0
      %2953 = vmatpush1.msra.mxu0 0.0
      %2954 = vmatprep.subr.mxu0 0.0
      %2955 = vmatpush1.msra.mxu0 0.0
      %2956 = vmatprep.subr.mxu0 0.0
      %2957 = vmatpush1.msra.mxu0 0.0
      %2958 = vmatprep.subr.mxu0 0.0
      %2959 = vmatpush1.msra.mxu0 0.0
      %2960 = vmatprep.subr.mxu0 0.0
      %2961 = vmatpush1.msra.mxu0 0.0
      %2962 = vmatprep.subr.mxu0 0.0
      %2963 = vmatpush1.msra.mxu0 0.0
      %2964 = vmatprep.subr.mxu0 0.0
      %2965 = vmatpush1.msra.mxu0 0.0
      %2966 = vmatprep.subr.mxu0 0.0
      %2967 = vmatpush1.msra.mxu0 0.0
      %2968 = vmatprep.subr.mxu0 0.0
      %2969 = vmatpush1.msra.mxu0 0.0
      %2970 = vmatprep.subr.mxu0 0.0
      %2971 = vmatpush1.msra.mxu0 0.0
      %2972 = vmatprep.subr.mxu0 0.0
      %2973 = vmatpush1.msra.mxu0 0.0
      %2974 = vmatprep.subr.mxu0 0.0
      %2975 = vmatpush1.msra.mxu0 0.0
      %2976 = vmatprep.subr.mxu0 0.0
      %2977 = vmatpush1.msra.mxu0 0.0
      %2978 = vmatprep.subr.mxu0 0.0
      %2979 = vmatpush1.msra.mxu0 0.0
      %2980 = vmatprep.subr.mxu0 0.0
      %2981 = vmatpush1.msra.mxu0 0.0
      %2982 = vmatprep.subr.mxu0 0.0
      %2983 = vmatpush1.msra.mxu0 0.0
      %2984 = vmatprep.subr.mxu0 0.0
      %2985 = vmatpush1.msra.mxu0 0.0
      %2986 = vmatprep.subr.mxu0 0.0
      %2987 = vmatpush1.msra.mxu0 0.0
      %2988 = vmatprep.subr.mxu0 0.0
      %2989 = vmatpush1.msra.mxu0 0.0
      %2990 = vmatprep.subr.mxu0 0.0
      %2991 = vmatpush1.msra.mxu0 0.0
      %2992 = vmatprep.subr.mxu0 0.0
      %2993 = vmatpush1.msra.mxu0 0.0
      %2994 = vmatprep.subr.mxu0 0.0
      %2995 = vmatpush1.msra.mxu0 0.0
      %2996 = vmatprep.subr.mxu0 0.0
      %2997 = vmatpush1.msra.mxu0 0.0
      %2998 = vmatprep.subr.mxu0 0.0
      %2999 = vmatpush1.msra.mxu0 0.0
      %3000 = vmatprep.subr.mxu0 0.0
      %3001 = vmatpush1.msra.mxu0 0.0
      %3002 = vmatprep.mubr.f32.mxu0 0.0
      %3003 = vmatmul.mubr.f32.gmra.mrb[0].mxu0 %v2933
      %v3004 = vpop.f32.mrb[0].mxu0
      %v3005 = vadd.f32 0.0, %v3004
      %v3006 = vpop.f32.mrb[0].mxu0
      %3007 = vmatprep.mubr.f32.mxu0 0.0
      %3008 = vmatmul.mubr.f32.gmra.mrb[0].mxu0 %v2936
      %v3009 = vpop.f32.mrb[0].mxu0
      %v3010 = vadd.f32 0.0, %v3009
      %v3011 = vpop.f32.mrb[0].mxu0
      %3012 = vdwg.mxu0
      %s3013 = scalar_lea.vmem %s2, 1920
      %v3014 = vld [vmem:[%s3013] sm:$0xff]
      %v3015 = vld [vmem:[%s3013 + $0x8] sm:$0xff]
      %v3016 = vld [vmem:[%s3013 + $0x10] sm:$0xff]
      %v3017 = vld [vmem:[%s3013 + $0x18] sm:$0xff]
      %v3018 = vld [vmem:[%s3013 + $0x20] sm:$0xff]
      %v3019 = vld [vmem:[%s3013 + $0x28] sm:$0xff]
      %v3020 = vld [vmem:[%s3013 + $0x30] sm:$0xff]
      %v3021 = vld [vmem:[%s3013 + $0x38] sm:$0xff]
      %v3022 = vld [vmem:[%s3013 + $0x40] sm:$0xff]
      %v3023 = vld [vmem:[%s3013 + $0x48] sm:$0xff]
      %v3024 = vld [vmem:[%s3013 + $0x50] sm:$0xff]
      %v3025 = vld [vmem:[%s3013 + $0x58] sm:$0xff]
      %v3026 = vld [vmem:[%s3013 + $0x60] sm:$0xff]
      %v3027 = vld [vmem:[%s3013 + $0x68] sm:$0xff]
      %v3028 = vld [vmem:[%s3013 + $0x70] sm:$0xff]
      %v3029 = vld [vmem:[%s3013 + $0x78] sm:$0xff]
      %3030 = vmatprep.subr.mxu0 0.0
      %3031 = vmatpush1.msra.mxu0 %v3014
      %3032 = vmatprep.subr.mxu0 0.0
      %3033 = vmatpush1.msra.mxu0 %v3015
      %3034 = vmatprep.subr.mxu0 0.0
      %3035 = vmatpush1.msra.mxu0 %v3016
      %3036 = vmatprep.subr.mxu0 0.0
      %3037 = vmatpush1.msra.mxu0 %v3017
      %3038 = vmatprep.subr.mxu0 0.0
      %3039 = vmatpush1.msra.mxu0 %v3018
      %3040 = vmatprep.subr.mxu0 0.0
      %3041 = vmatpush1.msra.mxu0 %v3019
      %3042 = vmatprep.subr.mxu0 0.0
      %3043 = vmatpush1.msra.mxu0 %v3020
      %3044 = vmatprep.subr.mxu0 0.0
      %3045 = vmatpush1.msra.mxu0 %v3021
      %3046 = vmatprep.subr.mxu0 0.0
      %3047 = vmatpush1.msra.mxu0 %v3022
      %3048 = vmatprep.subr.mxu0 0.0
      %3049 = vmatpush1.msra.mxu0 %v3023
      %3050 = vmatprep.subr.mxu0 0.0
      %3051 = vmatpush1.msra.mxu0 %v3024
      %3052 = vmatprep.subr.mxu0 0.0
      %3053 = vmatpush1.msra.mxu0 %v3025
      %3054 = vmatprep.subr.mxu0 0.0
      %3055 = vmatpush1.msra.mxu0 %v3026
      %3056 = vmatprep.subr.mxu0 0.0
      %3057 = vmatpush1.msra.mxu0 %v3027
      %3058 = vmatprep.subr.mxu0 0.0
      %3059 = vmatpush1.msra.mxu0 %v3028
      %3060 = vmatprep.subr.mxu0 0.0
      %3061 = vmatpush1.msra.mxu0 %v3029
      %3062 = vmatprep.subr.mxu0 0.0
      %3063 = vmatpush1.msra.mxu0 0.0
      %3064 = vmatprep.subr.mxu0 0.0
      %3065 = vmatpush1.msra.mxu0 0.0
      %3066 = vmatprep.subr.mxu0 0.0
      %3067 = vmatpush1.msra.mxu0 0.0
      %3068 = vmatprep.subr.mxu0 0.0
      %3069 = vmatpush1.msra.mxu0 0.0
      %3070 = vmatprep.subr.mxu0 0.0
      %3071 = vmatpush1.msra.mxu0 0.0
      %3072 = vmatprep.subr.mxu0 0.0
      %3073 = vmatpush1.msra.mxu0 0.0
      %3074 = vmatprep.subr.mxu0 0.0
      %3075 = vmatpush1.msra.mxu0 0.0
      %3076 = vmatprep.subr.mxu0 0.0
      %3077 = vmatpush1.msra.mxu0 0.0
      %3078 = vmatprep.subr.mxu0 0.0
      %3079 = vmatpush1.msra.mxu0 0.0
      %3080 = vmatprep.subr.mxu0 0.0
      %3081 = vmatpush1.msra.mxu0 0.0
      %3082 = vmatprep.subr.mxu0 0.0
      %3083 = vmatpush1.msra.mxu0 0.0
      %3084 = vmatprep.subr.mxu0 0.0
      %3085 = vmatpush1.msra.mxu0 0.0
      %3086 = vmatprep.subr.mxu0 0.0
      %3087 = vmatpush1.msra.mxu0 0.0
      %3088 = vmatprep.subr.mxu0 0.0
      %3089 = vmatpush1.msra.mxu0 0.0
      %3090 = vmatprep.subr.mxu0 0.0
      %3091 = vmatpush1.msra.mxu0 0.0
      %3092 = vmatprep.subr.mxu0 0.0
      %3093 = vmatpush1.msra.mxu0 0.0
      %3094 = vmatprep.mubr.f32.mxu0 0.0
      %3095 = vmatmul.mubr.f32.gmra.mrb[0].mxu0 %v3005
      %v3096 = vpop.f32.mrb[0].mxu0
      %v3097 = vadd.f32 0.0, %v3096
      %v3098 = vpop.f32.mrb[0].mxu0
      %3099 = vmatprep.mubr.f32.mxu0 0.0
      %3100 = vmatmul.mubr.f32.gmra.mrb[0].mxu0 %v3010
      %v3101 = vpop.f32.mrb[0].mxu0
      %v3102 = vadd.f32 0.0, %v3101
      %v3103 = vpop.f32.mrb[0].mxu0
      %3104 = vdwg.mxu0
      %v3105 = vadd.f32 %v2927, %v3097
      %v3106 = vadd.f32 %v2927, %v3102
      %s3107 = scalar_lea.vmem %s1, 256
      %v3108 = vld [vmem:[%s3107] sm:$0xff]
      %v3109 = vld [vmem:[%s3107 + $0x8] sm:$0xff]
      %v3111 = vsel %vm212, %v3108, 0
      %v3114 = vsel %vm212, %v3109, 0
      %3116 = vmatprep.subr.mxu0 0.0
      %3117 = vmatpush1.msra.mxu0 %v2919
      %3118 = vmatprep.subr.mxu0 0.0
      %3119 = vmatpush1.msra.mxu0 %v2920
      %3120 = vmatprep.subr.mxu0 0.0
      %3121 = vmatpush1.msra.mxu0 0.0
      %3122 = vmatprep.subr.mxu0 0.0
      %3123 = vmatpush1.msra.mxu0 0.0
      %3124 = vmatprep.subr.mxu0 0.0
      %3125 = vmatpush1.msra.mxu0 0.0
      %3126 = vmatprep.subr.mxu0 0.0
      %3127 = vmatpush1.msra.mxu0 0.0
      %3128 = vmatprep.subr.mxu0 0.0
      %3129 = vmatpush1.msra.mxu0 0.0
      %3130 = vmatprep.subr.mxu0 0.0
      %3131 = vmatpush1.msra.mxu0 0.0
      %3132 = vmatprep.subr.mxu0 0.0
      %3133 = vmatpush1.msra.mxu0 0.0
      %3134 = vmatprep.subr.mxu0 0.0
      %3135 = vmatpush1.msra.mxu0 0.0
      %3136 = vmatprep.subr.mxu0 0.0
      %3137 = vmatpush1.msra.mxu0 0.0
      %3138 = vmatprep.subr.mxu0 0.0
      %3139 = vmatpush1.msra.mxu0 0.0
      %3140 = vmatprep.subr.mxu0 0.0
      %3141 = vmatpush1.msra.mxu0 0.0
      %3142 = vmatprep.subr.mxu0 0.0
      %3143 = vmatpush1.msra.mxu0 0.0
      %3144 = vmatprep.subr.mxu0 0.0
      %3145 = vmatpush1.msra.mxu0 0.0
      %3146 = vmatprep.subr.mxu0 0.0
      %3147 = vmatpush1.msra.mxu0 0.0
      %3148 = vmatprep.subr.mxu0 0.0
      %3149 = vmatpush1.msra.mxu0 0.0
      %3150 = vmatprep.subr.mxu0 0.0
      %3151 = vmatpush1.msra.mxu0 0.0
      %3152 = vmatprep.subr.mxu0 0.0
      %3153 = vmatpush1.msra.mxu0 0.0
      %3154 = vmatprep.subr.mxu0 0.0
      %3155 = vmatpush1.msra.mxu0 0.0
      %3156 = vmatprep.subr.mxu0 0.0
      %3157 = vmatpush1.msra.mxu0 0.0
      %3158 = vmatprep.subr.mxu0 0.0
      %3159 = vmatpush1.msra.mxu0 0.0
      %3160 = vmatprep.subr.mxu0 0.0
      %3161 = vmatpush1.msra.mxu0 0.0
      %3162 = vmatprep.subr.mxu0 0.0
      %3163 = vmatpush1.msra.mxu0 0.0
      %3164 = vmatprep.subr.mxu0 0.0
      %3165 = vmatpush1.msra.mxu0 0.0
      %3166 = vmatprep.subr.mxu0 0.0
      %3167 = vmatpush1.msra.mxu0 0.0
      %3168 = vmatprep.subr.mxu0 0.0
      %3169 = vmatpush1.msra.mxu0 0.0
      %3170 = vmatprep.subr.mxu0 0.0
      %3171 = vmatpush1.msra.mxu0 0.0
      %3172 = vmatprep.subr.mxu0 0.0
      %3173 = vmatpush1.msra.mxu0 0.0
      %3174 = vmatprep.subr.mxu0 0.0
      %3175 = vmatpush1.msra.mxu0 0.0
      %3176 = vmatprep.subr.mxu0 0.0
      %3177 = vmatpush1.msra.mxu0 0.0
      %3178 = vmatprep.subr.mxu0 0.0
      %3179 = vmatpush1.msra.mxu0 0.0
      %3180 = vmatprep.mubr.f32.mxu0 0.0
      %3181 = vmatmul.mubr.f32.gmra.mrb[0].mxu0 %v3111
      %v3182 = vpop.f32.mrb[0].mxu0
      %v3183 = vadd.f32 0.0, %v3182
      %v3184 = vpop.f32.mrb[0].mxu0
      %3185 = vmatprep.mubr.f32.mxu0 0.0
      %3186 = vmatmul.mubr.f32.gmra.mrb[0].mxu0 %v3114
      %v3187 = vpop.f32.mrb[0].mxu0
      %v3188 = vadd.f32 0.0, %v3187
      %v3189 = vpop.f32.mrb[0].mxu0
      %3190 = vdwg.mxu0
      %s3191 = scalar_lea.vmem %s2, 2048
      %v3192 = vld [vmem:[%s3191] sm:$0xff]
      %v3193 = vld [vmem:[%s3191 + $0x8] sm:$0xff]
      %v3194 = vld [vmem:[%s3191 + $0x10] sm:$0xff]
      %v3195 = vld [vmem:[%s3191 + $0x18] sm:$0xff]
      %v3196 = vld [vmem:[%s3191 + $0x20] sm:$0xff]
      %v3197 = vld [vmem:[%s3191 + $0x28] sm:$0xff]
      %v3198 = vld [vmem:[%s3191 + $0x30] sm:$0xff]
      %v3199 = vld [vmem:[%s3191 + $0x38] sm:$0xff]
      %v3200 = vld [vmem:[%s3191 + $0x40] sm:$0xff]
      %v3201 = vld [vmem:[%s3191 + $0x48] sm:$0xff]
      %v3202 = vld [vmem:[%s3191 + $0x50] sm:$0xff]
      %v3203 = vld [vmem:[%s3191 + $0x58] sm:$0xff]
      %v3204 = vld [vmem:[%s3191 + $0x60] sm:$0xff]
      %v3205 = vld [vmem:[%s3191 + $0x68] sm:$0xff]
      %v3206 = vld [vmem:[%s3191 + $0x70] sm:$0xff]
      %v3207 = vld [vmem:[%s3191 + $0x78] sm:$0xff]
      %3208 = vmatprep.subr.mxu0 0.0
      %3209 = vmatpush1.msra.mxu0 %v3192
      %3210 = vmatprep.subr.mxu0 0.0
      %3211 = vmatpush1.msra.mxu0 %v3193
      %3212 = vmatprep.subr.mxu0 0.0
      %3213 = vmatpush1.msra.mxu0 %v3194
      %3214 = vmatprep.subr.mxu0 0.0
      %3215 = vmatpush1.msra.mxu0 %v3195
      %3216 = vmatprep.subr.mxu0 0.0
      %3217 = vmatpush1.msra.mxu0 %v3196
      %3218 = vmatprep.subr.mxu0 0.0
      %3219 = vmatpush1.msra.mxu0 %v3197
      %3220 = vmatprep.subr.mxu0 0.0
      %3221 = vmatpush1.msra.mxu0 %v3198
      %3222 = vmatprep.subr.mxu0 0.0
      %3223 = vmatpush1.msra.mxu0 %v3199
      %3224 = vmatprep.subr.mxu0 0.0
      %3225 = vmatpush1.msra.mxu0 %v3200
      %3226 = vmatprep.subr.mxu0 0.0
      %3227 = vmatpush1.msra.mxu0 %v3201
      %3228 = vmatprep.subr.mxu0 0.0
      %3229 = vmatpush1.msra.mxu0 %v3202
      %3230 = vmatprep.subr.mxu0 0.0
      %3231 = vmatpush1.msra.mxu0 %v3203
      %3232 = vmatprep.subr.mxu0 0.0
      %3233 = vmatpush1.msra.mxu0 %v3204
      %3234 = vmatprep.subr.mxu0 0.0
      %3235 = vmatpush1.msra.mxu0 %v3205
      %3236 = vmatprep.subr.mxu0 0.0
      %3237 = vmatpush1.msra.mxu0 %v3206
      %3238 = vmatprep.subr.mxu0 0.0
      %3239 = vmatpush1.msra.mxu0 %v3207
      %3240 = vmatprep.subr.mxu0 0.0
      %3241 = vmatpush1.msra.mxu0 0.0
      %3242 = vmatprep.subr.mxu0 0.0
      %3243 = vmatpush1.msra.mxu0 0.0
      %3244 = vmatprep.subr.mxu0 0.0
      %3245 = vmatpush1.msra.mxu0 0.0
      %3246 = vmatprep.subr.mxu0 0.0
      %3247 = vmatpush1.msra.mxu0 0.0
      %3248 = vmatprep.subr.mxu0 0.0
      %3249 = vmatpush1.msra.mxu0 0.0
      %3250 = vmatprep.subr.mxu0 0.0
      %3251 = vmatpush1.msra.mxu0 0.0
      %3252 = vmatprep.subr.mxu0 0.0
      %3253 = vmatpush1.msra.mxu0 0.0
      %3254 = vmatprep.subr.mxu0 0.0
      %3255 = vmatpush1.msra.mxu0 0.0
      %3256 = vmatprep.subr.mxu0 0.0
      %3257 = vmatpush1.msra.mxu0 0.0
      %3258 = vmatprep.subr.mxu0 0.0
      %3259 = vmatpush1.msra.mxu0 0.0
      %3260 = vmatprep.subr.mxu0 0.0
      %3261 = vmatpush1.msra.mxu0 0.0
      %3262 = vmatprep.subr.mxu0 0.0
      %3263 = vmatpush1.msra.mxu0 0.0
      %3264 = vmatprep.subr.mxu0 0.0
      %3265 = vmatpush1.msra.mxu0 0.0
      %3266 = vmatprep.subr.mxu0 0.0
      %3267 = vmatpush1.msra.mxu0 0.0
      %3268 = vmatprep.subr.mxu0 0.0
      %3269 = vmatpush1.msra.mxu0 0.0
      %3270 = vmatprep.subr.mxu0 0.0
      %3271 = vmatpush1.msra.mxu0 0.0
      %3272 = vmatprep.mubr.f32.mxu0 0.0
      %3273 = vmatmul.mubr.f32.gmra.mrb[0].mxu0 %v3183
      %v3274 = vpop.f32.mrb[0].mxu0
      %v3275 = vadd.f32 0.0, %v3274
      %v3276 = vpop.f32.mrb[0].mxu0
      %3277 = vmatprep.mubr.f32.mxu0 0.0
      %3278 = vmatmul.mubr.f32.gmra.mrb[0].mxu0 %v3188
      %v3279 = vpop.f32.mrb[0].mxu0
      %v3280 = vadd.f32 0.0, %v3279
      %v3281 = vpop.f32.mrb[0].mxu0
      %3282 = vdwg.mxu0
      %v3283 = vadd.f32 %v3105, %v3275
      %v3284 = vadd.f32 %v3106, %v3280
      %s3285 = scalar_lea.vmem %s1, 272
      %v3286 = vld [vmem:[%s3285] sm:$0xff]
      %v3287 = vld [vmem:[%s3285 + $0x8] sm:$0xff]
      %v3289 = vsel %vm212, %v3286, 0
      %v3292 = vsel %vm212, %v3287, 0
      %3294 = vmatprep.subr.mxu0 0.0
      %3295 = vmatpush1.msra.mxu0 %v2919
      %3296 = vmatprep.subr.mxu0 0.0
      %3297 = vmatpush1.msra.mxu0 %v2920
      %3298 = vmatprep.subr.mxu0 0.0
      %3299 = vmatpush1.msra.mxu0 0.0
      %3300 = vmatprep.subr.mxu0 0.0
      %3301 = vmatpush1.msra.mxu0 0.0
      %3302 = vmatprep.subr.mxu0 0.0
      %3303 = vmatpush1.msra.mxu0 0.0
      %3304 = vmatprep.subr.mxu0 0.0
      %3305 = vmatpush1.msra.mxu0 0.0
      %3306 = vmatprep.subr.mxu0 0.0
      %3307 = vmatpush1.msra.mxu0 0.0
      %3308 = vmatprep.subr.mxu0 0.0
      %3309 = vmatpush1.msra.mxu0 0.0
      %3310 = vmatprep.subr.mxu0 0.0
      %3311 = vmatpush1.msra.mxu0 0.0
      %3312 = vmatprep.subr.mxu0 0.0
      %3313 = vmatpush1.msra.mxu0 0.0
      %3314 = vmatprep.subr.mxu0 0.0
      %3315 = vmatpush1.msra.mxu0 0.0
      %3316 = vmatprep.subr.mxu0 0.0
      %3317 = vmatpush1.msra.mxu0 0.0
      %3318 = vmatprep.subr.mxu0 0.0
      %3319 = vmatpush1.msra.mxu0 0.0
      %3320 = vmatprep.subr.mxu0 0.0
      %3321 = vmatpush1.msra.mxu0 0.0
      %3322 = vmatprep.subr.mxu0 0.0
      %3323 = vmatpush1.msra.mxu0 0.0
      %3324 = vmatprep.subr.mxu0 0.0
      %3325 = vmatpush1.msra.mxu0 0.0
      %3326 = vmatprep.subr.mxu0 0.0
      %3327 = vmatpush1.msra.mxu0 0.0
      %3328 = vmatprep.subr.mxu0 0.0
      %3329 = vmatpush1.msra.mxu0 0.0
      %3330 = vmatprep.subr.mxu0 0.0
      %3331 = vmatpush1.msra.mxu0 0.0
      %3332 = vmatprep.subr.mxu0 0.0
      %3333 = vmatpush1.msra.mxu0 0.0
      %3334 = vmatprep.subr.mxu0 0.0
      %3335 = vmatpush1.msra.mxu0 0.0
      %3336 = vmatprep.subr.mxu0 0.0
      %3337 = vmatpush1.msra.mxu0 0.0
      %3338 = vmatprep.subr.mxu0 0.0
      %3339 = vmatpush1.msra.mxu0 0.0
      %3340 = vmatprep.subr.mxu0 0.0
      %3341 = vmatpush1.msra.mxu0 0.0
      %3342 = vmatprep.subr.mxu0 0.0
      %3343 = vmatpush1.msra.mxu0 0.0
      %3344 = vmatprep.subr.mxu0 0.0
      %3345 = vmatpush1.msra.mxu0 0.0
      %3346 = vmatprep.subr.mxu0 0.0
      %3347 = vmatpush1.msra.mxu0 0.0
      %3348 = vmatprep.subr.mxu0 0.0
      %3349 = vmatpush1.msra.mxu0 0.0
      %3350 = vmatprep.subr.mxu0 0.0
      %3351 = vmatpush1.msra.mxu0 0.0
      %3352 = vmatprep.subr.mxu0 0.0
      %3353 = vmatpush1.msra.mxu0 0.0
      %3354 = vmatprep.subr.mxu0 0.0
      %3355 = vmatpush1.msra.mxu0 0.0
      %3356 = vmatprep.subr.mxu0 0.0
      %3357 = vmatpush1.msra.mxu0 0.0
      %3358 = vmatprep.mubr.f32.mxu0 0.0
      %3359 = vmatmul.mubr.f32.gmra.mrb[0].mxu0 %v3289
      %v3360 = vpop.f32.mrb[0].mxu0
      %v3361 = vadd.f32 0.0, %v3360
      %v3362 = vpop.f32.mrb[0].mxu0
      %3363 = vmatprep.mubr.f32.mxu0 0.0
      %3364 = vmatmul.mubr.f32.gmra.mrb[0].mxu0 %v3292
      %v3365 = vpop.f32.mrb[0].mxu0
      %v3366 = vadd.f32 0.0, %v3365
      %v3367 = vpop.f32.mrb[0].mxu0
      %3368 = vdwg.mxu0
      %s3369 = scalar_lea.vmem %s2, 2176
      %v3370 = vld [vmem:[%s3369] sm:$0xff]
      %v3371 = vld [vmem:[%s3369 + $0x8] sm:$0xff]
      %v3372 = vld [vmem:[%s3369 + $0x10] sm:$0xff]
      %v3373 = vld [vmem:[%s3369 + $0x18] sm:$0xff]
      %v3374 = vld [vmem:[%s3369 + $0x20] sm:$0xff]
      %v3375 = vld [vmem:[%s3369 + $0x28] sm:$0xff]
      %v3376 = vld [vmem:[%s3369 + $0x30] sm:$0xff]
      %v3377 = vld [vmem:[%s3369 + $0x38] sm:$0xff]
      %v3378 = vld [vmem:[%s3369 + $0x40] sm:$0xff]
      %v3379 = vld [vmem:[%s3369 + $0x48] sm:$0xff]
      %v3380 = vld [vmem:[%s3369 + $0x50] sm:$0xff]
      %v3381 = vld [vmem:[%s3369 + $0x58] sm:$0xff]
      %v3382 = vld [vmem:[%s3369 + $0x60] sm:$0xff]
      %v3383 = vld [vmem:[%s3369 + $0x68] sm:$0xff]
      %v3384 = vld [vmem:[%s3369 + $0x70] sm:$0xff]
      %v3385 = vld [vmem:[%s3369 + $0x78] sm:$0xff]
      %3386 = vmatprep.subr.mxu0 0.0
      %3387 = vmatpush1.msra.mxu0 %v3370
      %3388 = vmatprep.subr.mxu0 0.0
      %3389 = vmatpush1.msra.mxu0 %v3371
      %3390 = vmatprep.subr.mxu0 0.0
      %3391 = vmatpush1.msra.mxu0 %v3372
      %3392 = vmatprep.subr.mxu0 0.0
      %3393 = vmatpush1.msra.mxu0 %v3373
      %3394 = vmatprep.subr.mxu0 0.0
      %3395 = vmatpush1.msra.mxu0 %v3374
      %3396 = vmatprep.subr.mxu0 0.0
      %3397 = vmatpush1.msra.mxu0 %v3375
      %3398 = vmatprep.subr.mxu0 0.0
      %3399 = vmatpush1.msra.mxu0 %v3376
      %3400 = vmatprep.subr.mxu0 0.0
      %3401 = vmatpush1.msra.mxu0 %v3377
      %3402 = vmatprep.subr.mxu0 0.0
      %3403 = vmatpush1.msra.mxu0 %v3378
      %3404 = vmatprep.subr.mxu0 0.0
      %3405 = vmatpush1.msra.mxu0 %v3379
      %3406 = vmatprep.subr.mxu0 0.0
      %3407 = vmatpush1.msra.mxu0 %v3380
      %3408 = vmatprep.subr.mxu0 0.0
      %3409 = vmatpush1.msra.mxu0 %v3381
      %3410 = vmatprep.subr.mxu0 0.0
      %3411 = vmatpush1.msra.mxu0 %v3382
      %3412 = vmatprep.subr.mxu0 0.0
      %3413 = vmatpush1.msra.mxu0 %v3383
      %3414 = vmatprep.subr.mxu0 0.0
      %3415 = vmatpush1.msra.mxu0 %v3384
      %3416 = vmatprep.subr.mxu0 0.0
      %3417 = vmatpush1.msra.mxu0 %v3385
      %3418 = vmatprep.subr.mxu0 0.0
      %3419 = vmatpush1.msra.mxu0 0.0
      %3420 = vmatprep.subr.mxu0 0.0
      %3421 = vmatpush1.msra.mxu0 0.0
      %3422 = vmatprep.subr.mxu0 0.0
      %3423 = vmatpush1.msra.mxu0 0.0
      %3424 = vmatprep.subr.mxu0 0.0
      %3425 = vmatpush1.msra.mxu0 0.0
      %3426 = vmatprep.subr.mxu0 0.0
      %3427 = vmatpush1.msra.mxu0 0.0
      %3428 = vmatprep.subr.mxu0 0.0
      %3429 = vmatpush1.msra.mxu0 0.0
      %3430 = vmatprep.subr.mxu0 0.0
      %3431 = vmatpush1.msra.mxu0 0.0
      %3432 = vmatprep.subr.mxu0 0.0
      %3433 = vmatpush1.msra.mxu0 0.0
      %3434 = vmatprep.subr.mxu0 0.0
      %3435 = vmatpush1.msra.mxu0 0.0
      %3436 = vmatprep.subr.mxu0 0.0
      %3437 = vmatpush1.msra.mxu0 0.0
      %3438 = vmatprep.subr.mxu0 0.0
      %3439 = vmatpush1.msra.mxu0 0.0
      %3440 = vmatprep.subr.mxu0 0.0
      %3441 = vmatpush1.msra.mxu0 0.0
      %3442 = vmatprep.subr.mxu0 0.0
      %3443 = vmatpush1.msra.mxu0 0.0
      %3444 = vmatprep.subr.mxu0 0.0
      %3445 = vmatpush1.msra.mxu0 0.0
      %3446 = vmatprep.subr.mxu0 0.0
      %3447 = vmatpush1.msra.mxu0 0.0
      %3448 = vmatprep.subr.mxu0 0.0
      %3449 = vmatpush1.msra.mxu0 0.0
      %3450 = vmatprep.mubr.f32.mxu0 0.0
      %3451 = vmatmul.mubr.f32.gmra.mrb[0].mxu0 %v3361
      %v3452 = vpop.f32.mrb[0].mxu0
      %v3453 = vadd.f32 0.0, %v3452
      %v3454 = vpop.f32.mrb[0].mxu0
      %3455 = vmatprep.mubr.f32.mxu0 0.0
      %3456 = vmatmul.mubr.f32.gmra.mrb[0].mxu0 %v3366
      %v3457 = vpop.f32.mrb[0].mxu0
      %v3458 = vadd.f32 0.0, %v3457
      %v3459 = vpop.f32.mrb[0].mxu0
      %3460 = vdwg.mxu0
      %v3461 = vadd.f32 %v3283, %v3453
      %v3462 = vadd.f32 %v3284, %v3458
      %v3463 = vsub.f32 0.0, %v3461
      %v3464 = vsub.f32 0.0, %v3462
      %v3465 = vmul.f32 %v3463, 1.442695
      %v3466 = vpow.pop %v3465
      %v3467 = vmul.f32 %v3464, 1.442695
      %v3468 = vpow.pop %v3467
      %v3469 = vadd.f32 %v3466, 1.0
      %v3470 = vadd.f32 %v3468, 1.0
      %v3471 = vrcp.pop %v3469
      %v3472 = vmul.f32 1.0, %v3471
      %v3473 = vrcp.pop %v3470
      %v3474 = vmul.f32 1.0, %v3473
      %3475 = vst [vmem:[%s199] sm:$0xff] %v3472
      %3476 = vst [vmem:[%s199 + $0x8] sm:$0xff] %v3474
      %s3477 = smul.u32 2, %s15
      %p3478 = scmp.lt.s32.totalorder %s3477, 3
      %s3479 = scalar_select %p3478, %s3477, 3
      %s3480 = smul.addr %s3479, 8
      %s3481 = scalar_lea.vmem %s4, %s3480
      // Predicated region
      $region37: #{autoencoder_forward.1} parent=35 // pred_check
        %p3482 = pneg %p122
      $region38: #{autoencoder_forward.1} parent=35 // pred_check_branch
        %3484 = sbr.rel (%p3482) target = $region40
      $region39: #{autoencoder_forward.1} parent=35 // pred_region
        %s3485 = smul.u32 2, %s15
      $region40: #{autoencoder_forward.1} parent=35 // pred_fallthru
        _
    $region36: #{autoencoder_forward.1} parent=5 // pred_fallthru
      _
    %p3486 = scmp.le.s32.totalorder 2, %s10
    // Predicated region
    $region41: #{autoencoder_forward.1} parent=5 // pred_check
      %p3487 = pneg %p3486
    $region42: #{autoencoder_forward.1} parent=5 // pred_check_branch
      %3489 = sbr.rel (%p3487) target = $region44
    $region43: #{autoencoder_forward.1} parent=5 // pred_region
      %s3490 = ssub.s32 %s10, 2
      // Predicated region
      $region45: #{autoencoder_forward.1} parent=43 // pred_check
        %p3491 = pneg %p128
      $region46: #{autoencoder_forward.1} parent=43 // pred_check_branch
        %3493 = sbr.rel (%p3491) target = $region48
      $region47: #{autoencoder_forward.1} parent=43 // pred_region
        %s3494 = smul.u32 2, %s16
        %p3495 = scmp.lt.s32.totalorder %s3494, 3
        %s3496 = scalar_select %p3495, %s3494, 3
        %s3497 = smul.addr %s3496, 8
        %s3498 = scalar_lea.vmem %s4, %s3497
      $region48: #{autoencoder_forward.1} parent=43 // pred_fallthru
        _
    $region44: #{autoencoder_forward.1} parent=5 // pred_fallthru
      _
  $region6: #{autoencoder_forward.1} parent=0 // loop_footer
    %s14 = sadd.s32 1, %s10
  $region7: #{autoencoder_forward.1} parent=0 // loop_footer_branch
    %9 = sbr.rel target = $region3
  $region8: #{autoencoder_forward.1} parent=0 // loop_exit
    _

</llo_original>
